<compile_context>
chip_gen: v7x
topology: tpu7x:2x2x1
jax: 0.10.0
libtpu: 0.0.40
codegen_flags: <defaults>
</compile_context>

<pallas_src>
import jax
import jax.numpy as jnp
from jax import lax
from jax.experimental import pallas as pl
from jax.experimental.pallas import tpu as pltpu

# Full-f32 matmuls for the (out-of-kernel) fold and the pure-JAX reference so
# the allclose check compares like against like.
jax.config.update("jax_default_matmul_precision", "highest")


# ---------------------------------------------------------------------------
# Fused kernel: (gathered, pre-folded) input projection + LSTM recurrence +
#               hidden2tag + log_softmax
# Layout: all tensors [row, feature] with features on the 128-lane axis.
# LSTM weights pre-transposed to [H, 4H], PyTorch gate order (i, f, g, o),
# combined bias b = b_ih + b_hh folded into gates_x.
# ---------------------------------------------------------------------------
def lstm_tagger_kernel(sent_ref, cidx_ref,                 # SMEM (scalar prefetch)
                       wproj_ref, cproj0_ref, cproj1_ref, cproj2_ref,
                       b_ref, whh_ref, wout_ref, bout_ref,  # VMEM params
                       out_ref, hs_sc):
    S = out_ref.shape[0]
    H = whh_ref.shape[0]

    b = b_ref[...]                                           # [1, 4H]
    w_hh = whh_ref[...]                                      # [H, 4H]

    # ---- input projection: SMEM index reads + VMEM row gathers + adds ----
    # gates_x[t] = word_proj[sent[t]] + char_proj0[c_{3t}]
    #            + char_proj1[c_{3t+1}] + char_proj2[c_{3t+2}] + b
    gates_x = []
    for t in range(S):
        wi = sent_ref[t]
        c0 = cidx_ref[3 * t]
        c1 = cidx_ref[3 * t + 1]
        c2 = cidx_ref[3 * t + 2]
        gx = (wproj_ref[pl.ds(wi, 1), :]
              + cproj0_ref[pl.ds(c0, 1), :]
              + cproj1_ref[pl.ds(c1, 1), :]
              + cproj2_ref[pl.ds(c2, 1), :]
              + b)                                           # [1, 4H]
        gates_x.append(gx)

    # ---- fully unrolled recurrence (S is small & static) ----
    h = jnp.zeros((1, H), jnp.float32)
    c = jnp.zeros((1, H), jnp.float32)
    for t in range(S):
        gates = gates_x[t] + jnp.dot(h, w_hh,
                                     preferred_element_type=jnp.float32)  # [1,4H]
        # two whole-vreg EUP passes, then lane-slice each gate exactly once
        sig = jax.nn.sigmoid(gates)
        tnh = jnp.tanh(gates)
        i = sig[:, 0:H]
        f = sig[:, H:2 * H]
        o = sig[:, 3 * H:4 * H]
        g = tnh[:, 2 * H:3 * H]
        c = f * c + i * g
        h = o * jnp.tanh(c)
        hs_sc[pl.ds(t, 1), :] = h          # static row store, off the EUP path

    # ---- hoisted hidden2tag + log_softmax (batched over S) ----
    hs = hs_sc[...]                                                  # [S, H]
    tag = jnp.dot(hs, wout_ref[...],
                  preferred_element_type=jnp.float32) + bout_ref[...]  # [S, T]
    m = jnp.max(tag, axis=-1, keepdims=True)
    lse = m + jnp.log(jnp.sum(jnp.exp(tag - m), axis=-1, keepdims=True))
    out_ref[...] = tag - lse                                         # log_softmax


# ---------------------------------------------------------------------------
# One-time, parameter-only pre-fold of the embedding tables through w_ih.
# ---------------------------------------------------------------------------
def fold_params(params):
    E = params["word_emb"].shape[1]
    w_ih = params["w_ih"]                                    # [4E, 4H]
    return {
        "word_proj":  params["word_emb"] @ w_ih[0:E, :],          # [V, 4H]
        "char_proj0": params["char_emb"] @ w_ih[E:2 * E, :],      # [C, 4H]
        "char_proj1": params["char_emb"] @ w_ih[2 * E:3 * E, :],  # [C, 4H]
        "char_proj2": params["char_emb"] @ w_ih[3 * E:4 * E, :],  # [C, 4H]
        "b":     params["b"],                                      # [1, 4H]
        "w_hh":  params["w_hh"],                                   # [H, 4H]
        "w_out": params["w_out"],                                  # [H, T]
        "b_out": params["b_out"],                                  # [1, T]
    }


# ---------------------------------------------------------------------------
# Wrapper: single pallas_call, indices scalar-prefetched into SMEM.
# ---------------------------------------------------------------------------
def lstm_tagger_forward(folded, sentence, char_idx):
    S = sentence.shape[0]
    H = folded["w_hh"].shape[0]
    T = folded["w_out"].shape[1]

    vmem = pl.BlockSpec(memory_space=pltpu.MemorySpace.VMEM)

    grid_spec = pltpu.PrefetchScalarGridSpec(
        num_scalar_prefetch=2,                 # sentence idx + char idx -> SMEM
        grid=(1,),
        in_specs=[vmem] * 8,
        out_specs=vmem,
        scratch_shapes=[pltpu.VMEM((S, H), jnp.float32)],   # h_t history
    )

    return pl.pallas_call(
        lstm_tagger_kernel,
        out_shape=jax.ShapeDtypeStruct((S, T), jnp.float32),
        grid_spec=grid_spec,
        compiler_params=pltpu.CompilerParams(
            dimension_semantics=("arbitrary",)),
    )(sentence.astype(jnp.int32), char_idx.astype(jnp.int32),
      folded["word_proj"], folded["char_proj0"], folded["char_proj1"],
      folded["char_proj2"], folded["b"], folded["w_hh"],
      folded["w_out"], folded["b_out"])


# ---------------------------------------------------------------------------
# Pure-JAX reference (same math as the PyTorch module, un-folded params,
# dense one-hot charEmbed) for correctness checking.
# ---------------------------------------------------------------------------
def reference_forward(params, sentence, char_embed):
    word_table = params["word_emb"]
    char_table = params["char_emb"]
    w_ih, w_hh, b = params["w_ih"], params["w_hh"], params["b"][0]
    w_out, b_out = params["w_out"], params["b_out"][0]
    S = sentence.shape[0]
    E = word_table.shape[1]
    H = w_hh.shape[0]

    embeds = jnp.take(word_table, sentence, axis=0)
    char_e = (char_embed @ char_table).reshape(S, 3 * E)
    x = jnp.concatenate([embeds, char_e], axis=-1)

    def step(carry, x_t):
        h, c = carry
        gates = x_t @ w_ih + h @ w_hh + b
        i = jax.nn.sigmoid(gates[0:H])
        f = jax.nn.sigmoid(gates[H:2 * H])
        g = jnp.tanh(gates[2 * H:3 * H])
        o = jax.nn.sigmoid(gates[3 * H:4 * H])
        c = f * c + i * g
        h = o * jnp.tanh(c)
        return (h, c), h

    (_, _), hs = lax.scan(step, (jnp.zeros(H), jnp.zeros(H)), x)
    tag = hs @ w_out + b_out
    return jax.nn.log_softmax(tag, axis=1)


if __name__ == "__main__":
    # small shapes consistent with the module's forward
    E, H, V, T, C, S = 32, 32, 50, 8, 64, 8   # embed, hidden, vocab, tags, chars, seq

    key = jax.random.PRNGKey(0)
    ks = jax.random.split(key, 9)
    params = {
        "word_emb": jax.random.normal(ks[0], (V, E), jnp.float32),
        "char_emb": jax.random.normal(ks[1], (C, E), jnp.float32),
        "w_ih":     0.1 * jax.random.normal(ks[2], (4 * E, 4 * H), jnp.float32),
        "w_hh":     0.1 * jax.random.normal(ks[3], (H, 4 * H), jnp.float32),
        "b":        0.1 * jax.random.normal(ks[4], (1, 4 * H), jnp.float32),
        "w_out":    0.1 * jax.random.normal(ks[5], (H, T), jnp.float32),
        "b_out":    0.1 * jax.random.normal(ks[6], (1, T), jnp.float32),
    }

    sentence = jax.random.randint(ks[7], (S,), 0, V, dtype=jnp.int32)
    char_idx = jax.random.randint(ks[8], (3 * S,), 0, C, dtype=jnp.int32)

    folded = fold_params(params)                       # one-time, params only
    out = lstm_tagger_forward(folded, sentence, char_idx)
    out = jax.block_until_ready(out)

    # reference path uses the module's native interface (one-hot charEmbed)
    char_embed = jax.nn.one_hot(char_idx, C, dtype=jnp.float32)   # [3S, C]
    ref = reference_forward(params, sentence, char_embed)

    assert out.shape == (S, T), out.shape
    max_err = float(jnp.max(jnp.abs(out - ref)))
    assert jnp.allclose(out, ref, atol=1e-3, rtol=1e-3), max_err
    print("KERNEL_OK")
</pallas_src>

<mosaic_0001>
module attributes {stable_mosaic.version = 11 : i64} {
  func.func @lstm_tagger_kernel(%arg0: i32, %arg1: memref<8xi32, #tpu.memory_space<smem>>, %arg2: memref<24xi32, #tpu.memory_space<smem>>, %arg3: memref<50x128xf32, #tpu.memory_space<vmem>>, %arg4: memref<64x128xf32, #tpu.memory_space<vmem>>, %arg5: memref<64x128xf32, #tpu.memory_space<vmem>>, %arg6: memref<64x128xf32, #tpu.memory_space<vmem>>, %arg7: memref<1x128xf32, #tpu.memory_space<vmem>>, %arg8: memref<32x128xf32, #tpu.memory_space<vmem>>, %arg9: memref<32x8xf32, #tpu.memory_space<vmem>>, %arg10: memref<1x8xf32, #tpu.memory_space<vmem>>, %arg11: memref<8x8xf32, #tpu.memory_space<vmem>>, %arg12: memref<8x32xf32, #tpu.memory_space<vmem>>) attributes {dimension_semantics = [#tpu.dimension_semantics<arbitrary>], iteration_bounds = array<i64: 1>, scalar_prefetch = 2 : i64, scratch_operands = 1 : i64, tpu.core_type = #tpu.core_type<tc>, window_params = [{pipeline_mode = #tpu.pipeline_mode<synchronous>, transform_indices = @transform_0, window_bounds = array<i64: 50, 128>}, {pipeline_mode = #tpu.pipeline_mode<synchronous>, transform_indices = @transform_1, window_bounds = array<i64: 64, 128>}, {pipeline_mode = #tpu.pipeline_mode<synchronous>, transform_indices = @transform_2, window_bounds = array<i64: 64, 128>}, {pipeline_mode = #tpu.pipeline_mode<synchronous>, transform_indices = @transform_3, window_bounds = array<i64: 64, 128>}, {pipeline_mode = #tpu.pipeline_mode<synchronous>, transform_indices = @transform_4, window_bounds = array<i64: 1, 128>}, {pipeline_mode = #tpu.pipeline_mode<synchronous>, transform_indices = @transform_5, window_bounds = array<i64: 32, 128>}, {pipeline_mode = #tpu.pipeline_mode<synchronous>, transform_indices = @transform_6, window_bounds = array<i64: 32, 8>}, {pipeline_mode = #tpu.pipeline_mode<synchronous>, transform_indices = @transform_7, window_bounds = array<i64: 1, 8>}, {pipeline_mode = #tpu.pipeline_mode<synchronous>, transform_indices = @transform_8, window_bounds = array<i64: 8, 8>}]} {
    %c0 = arith.constant 0 : index
    %c0_0 = arith.constant 0 : index
    %0 = vector.load %arg7[%c0, %c0_0] : memref<1x128xf32, #tpu.memory_space<vmem>>, vector<1x128xf32>
    %c0_1 = arith.constant 0 : index
    %c0_2 = arith.constant 0 : index
    %1 = vector.load %arg8[%c0_1, %c0_2] : memref<32x128xf32, #tpu.memory_space<vmem>>, vector<32x128xf32>
    %c0_3 = arith.constant 0 : index
    %2 = memref.load %arg1[%c0_3] : memref<8xi32, #tpu.memory_space<smem>>
    %c0_4 = arith.constant 0 : index
    %3 = memref.load %arg2[%c0_4] : memref<24xi32, #tpu.memory_space<smem>>
    %c1 = arith.constant 1 : index
    %4 = memref.load %arg2[%c1] : memref<24xi32, #tpu.memory_space<smem>>
    %c2 = arith.constant 2 : index
    %5 = memref.load %arg2[%c2] : memref<24xi32, #tpu.memory_space<smem>>
    %6 = arith.index_cast %2 : i32 to index
    %c0_5 = arith.constant 0 : index
    %7 = vector.load %arg3[%6, %c0_5] : memref<50x128xf32, #tpu.memory_space<vmem>>, vector<1x128xf32>
    %8 = arith.index_cast %3 : i32 to index
    %c0_6 = arith.constant 0 : index
    %9 = vector.load %arg4[%8, %c0_6] : memref<64x128xf32, #tpu.memory_space<vmem>>, vector<1x128xf32>
    %10 = arith.addf %7, %9 : vector<1x128xf32>
    %11 = arith.index_cast %4 : i32 to index
    %c0_7 = arith.constant 0 : index
    %12 = vector.load %arg5[%11, %c0_7] : memref<64x128xf32, #tpu.memory_space<vmem>>, vector<1x128xf32>
    %13 = arith.addf %10, %12 : vector<1x128xf32>
    %14 = arith.index_cast %5 : i32 to index
    %c0_8 = arith.constant 0 : index
    %15 = vector.load %arg6[%14, %c0_8] : memref<64x128xf32, #tpu.memory_space<vmem>>, vector<1x128xf32>
    %16 = arith.addf %13, %15 : vector<1x128xf32>
    %17 = arith.addf %16, %0 : vector<1x128xf32>
    %c1_9 = arith.constant 1 : index
    %18 = memref.load %arg1[%c1_9] : memref<8xi32, #tpu.memory_space<smem>>
    %c3 = arith.constant 3 : index
    %19 = memref.load %arg2[%c3] : memref<24xi32, #tpu.memory_space<smem>>
    %c4 = arith.constant 4 : index
    %20 = memref.load %arg2[%c4] : memref<24xi32, #tpu.memory_space<smem>>
    %c5 = arith.constant 5 : index
    %21 = memref.load %arg2[%c5] : memref<24xi32, #tpu.memory_space<smem>>
    %22 = arith.index_cast %18 : i32 to index
    %c0_10 = arith.constant 0 : index
    %23 = vector.load %arg3[%22, %c0_10] : memref<50x128xf32, #tpu.memory_space<vmem>>, vector<1x128xf32>
    %24 = arith.index_cast %19 : i32 to index
    %c0_11 = arith.constant 0 : index
    %25 = vector.load %arg4[%24, %c0_11] : memref<64x128xf32, #tpu.memory_space<vmem>>, vector<1x128xf32>
    %26 = arith.addf %23, %25 : vector<1x128xf32>
    %27 = arith.index_cast %20 : i32 to index
    %c0_12 = arith.constant 0 : index
    %28 = vector.load %arg5[%27, %c0_12] : memref<64x128xf32, #tpu.memory_space<vmem>>, vector<1x128xf32>
    %29 = arith.addf %26, %28 : vector<1x128xf32>
    %30 = arith.index_cast %21 : i32 to index
    %c0_13 = arith.constant 0 : index
    %31 = vector.load %arg6[%30, %c0_13] : memref<64x128xf32, #tpu.memory_space<vmem>>, vector<1x128xf32>
    %32 = arith.addf %29, %31 : vector<1x128xf32>
    %33 = arith.addf %32, %0 : vector<1x128xf32>
    %c2_14 = arith.constant 2 : index
    %34 = memref.load %arg1[%c2_14] : memref<8xi32, #tpu.memory_space<smem>>
    %c6 = arith.constant 6 : index
    %35 = memref.load %arg2[%c6] : memref<24xi32, #tpu.memory_space<smem>>
    %c7 = arith.constant 7 : index
    %36 = memref.load %arg2[%c7] : memref<24xi32, #tpu.memory_space<smem>>
    %c8 = arith.constant 8 : index
    %37 = memref.load %arg2[%c8] : memref<24xi32, #tpu.memory_space<smem>>
    %38 = arith.index_cast %34 : i32 to index
    %c0_15 = arith.constant 0 : index
    %39 = vector.load %arg3[%38, %c0_15] : memref<50x128xf32, #tpu.memory_space<vmem>>, vector<1x128xf32>
    %40 = arith.index_cast %35 : i32 to index
    %c0_16 = arith.constant 0 : index
    %41 = vector.load %arg4[%40, %c0_16] : memref<64x128xf32, #tpu.memory_space<vmem>>, vector<1x128xf32>
    %42 = arith.addf %39, %41 : vector<1x128xf32>
    %43 = arith.index_cast %36 : i32 to index
    %c0_17 = arith.constant 0 : index
    %44 = vector.load %arg5[%43, %c0_17] : memref<64x128xf32, #tpu.memory_space<vmem>>, vector<1x128xf32>
    %45 = arith.addf %42, %44 : vector<1x128xf32>
    %46 = arith.index_cast %37 : i32 to index
    %c0_18 = arith.constant 0 : index
    %47 = vector.load %arg6[%46, %c0_18] : memref<64x128xf32, #tpu.memory_space<vmem>>, vector<1x128xf32>
    %48 = arith.addf %45, %47 : vector<1x128xf32>
    %49 = arith.addf %48, %0 : vector<1x128xf32>
    %c3_19 = arith.constant 3 : index
    %50 = memref.load %arg1[%c3_19] : memref<8xi32, #tpu.memory_space<smem>>
    %c9 = arith.constant 9 : index
    %51 = memref.load %arg2[%c9] : memref<24xi32, #tpu.memory_space<smem>>
    %c10 = arith.constant 10 : index
    %52 = memref.load %arg2[%c10] : memref<24xi32, #tpu.memory_space<smem>>
    %c11 = arith.constant 11 : index
    %53 = memref.load %arg2[%c11] : memref<24xi32, #tpu.memory_space<smem>>
    %54 = arith.index_cast %50 : i32 to index
    %c0_20 = arith.constant 0 : index
    %55 = vector.load %arg3[%54, %c0_20] : memref<50x128xf32, #tpu.memory_space<vmem>>, vector<1x128xf32>
    %56 = arith.index_cast %51 : i32 to index
    %c0_21 = arith.constant 0 : index
    %57 = vector.load %arg4[%56, %c0_21] : memref<64x128xf32, #tpu.memory_space<vmem>>, vector<1x128xf32>
    %58 = arith.addf %55, %57 : vector<1x128xf32>
    %59 = arith.index_cast %52 : i32 to index
    %c0_22 = arith.constant 0 : index
    %60 = vector.load %arg5[%59, %c0_22] : memref<64x128xf32, #tpu.memory_space<vmem>>, vector<1x128xf32>
    %61 = arith.addf %58, %60 : vector<1x128xf32>
    %62 = arith.index_cast %53 : i32 to index
    %c0_23 = arith.constant 0 : index
    %63 = vector.load %arg6[%62, %c0_23] : memref<64x128xf32, #tpu.memory_space<vmem>>, vector<1x128xf32>
    %64 = arith.addf %61, %63 : vector<1x128xf32>
    %65 = arith.addf %64, %0 : vector<1x128xf32>
    %c4_24 = arith.constant 4 : index
    %66 = memref.load %arg1[%c4_24] : memref<8xi32, #tpu.memory_space<smem>>
    %c12 = arith.constant 12 : index
    %67 = memref.load %arg2[%c12] : memref<24xi32, #tpu.memory_space<smem>>
    %c13 = arith.constant 13 : index
    %68 = memref.load %arg2[%c13] : memref<24xi32, #tpu.memory_space<smem>>
    %c14 = arith.constant 14 : index
    %69 = memref.load %arg2[%c14] : memref<24xi32, #tpu.memory_space<smem>>
    %70 = arith.index_cast %66 : i32 to index
    %c0_25 = arith.constant 0 : index
    %71 = vector.load %arg3[%70, %c0_25] : memref<50x128xf32, #tpu.memory_space<vmem>>, vector<1x128xf32>
    %72 = arith.index_cast %67 : i32 to index
    %c0_26 = arith.constant 0 : index
    %73 = vector.load %arg4[%72, %c0_26] : memref<64x128xf32, #tpu.memory_space<vmem>>, vector<1x128xf32>
    %74 = arith.addf %71, %73 : vector<1x128xf32>
    %75 = arith.index_cast %68 : i32 to index
    %c0_27 = arith.constant 0 : index
    %76 = vector.load %arg5[%75, %c0_27] : memref<64x128xf32, #tpu.memory_space<vmem>>, vector<1x128xf32>
    %77 = arith.addf %74, %76 : vector<1x128xf32>
    %78 = arith.index_cast %69 : i32 to index
    %c0_28 = arith.constant 0 : index
    %79 = vector.load %arg6[%78, %c0_28] : memref<64x128xf32, #tpu.memory_space<vmem>>, vector<1x128xf32>
    %80 = arith.addf %77, %79 : vector<1x128xf32>
    %81 = arith.addf %80, %0 : vector<1x128xf32>
    %c5_29 = arith.constant 5 : index
    %82 = memref.load %arg1[%c5_29] : memref<8xi32, #tpu.memory_space<smem>>
    %c15 = arith.constant 15 : index
    %83 = memref.load %arg2[%c15] : memref<24xi32, #tpu.memory_space<smem>>
    %c16 = arith.constant 16 : index
    %84 = memref.load %arg2[%c16] : memref<24xi32, #tpu.memory_space<smem>>
    %c17 = arith.constant 17 : index
    %85 = memref.load %arg2[%c17] : memref<24xi32, #tpu.memory_space<smem>>
    %86 = arith.index_cast %82 : i32 to index
    %c0_30 = arith.constant 0 : index
    %87 = vector.load %arg3[%86, %c0_30] : memref<50x128xf32, #tpu.memory_space<vmem>>, vector<1x128xf32>
    %88 = arith.index_cast %83 : i32 to index
    %c0_31 = arith.constant 0 : index
    %89 = vector.load %arg4[%88, %c0_31] : memref<64x128xf32, #tpu.memory_space<vmem>>, vector<1x128xf32>
    %90 = arith.addf %87, %89 : vector<1x128xf32>
    %91 = arith.index_cast %84 : i32 to index
    %c0_32 = arith.constant 0 : index
    %92 = vector.load %arg5[%91, %c0_32] : memref<64x128xf32, #tpu.memory_space<vmem>>, vector<1x128xf32>
    %93 = arith.addf %90, %92 : vector<1x128xf32>
    %94 = arith.index_cast %85 : i32 to index
    %c0_33 = arith.constant 0 : index
    %95 = vector.load %arg6[%94, %c0_33] : memref<64x128xf32, #tpu.memory_space<vmem>>, vector<1x128xf32>
    %96 = arith.addf %93, %95 : vector<1x128xf32>
    %97 = arith.addf %96, %0 : vector<1x128xf32>
    %c6_34 = arith.constant 6 : index
    %98 = memref.load %arg1[%c6_34] : memref<8xi32, #tpu.memory_space<smem>>
    %c18 = arith.constant 18 : index
    %99 = memref.load %arg2[%c18] : memref<24xi32, #tpu.memory_space<smem>>
    %c19 = arith.constant 19 : index
    %100 = memref.load %arg2[%c19] : memref<24xi32, #tpu.memory_space<smem>>
    %c20 = arith.constant 20 : index
    %101 = memref.load %arg2[%c20] : memref<24xi32, #tpu.memory_space<smem>>
    %102 = arith.index_cast %98 : i32 to index
    %c0_35 = arith.constant 0 : index
    %103 = vector.load %arg3[%102, %c0_35] : memref<50x128xf32, #tpu.memory_space<vmem>>, vector<1x128xf32>
    %104 = arith.index_cast %99 : i32 to index
    %c0_36 = arith.constant 0 : index
    %105 = vector.load %arg4[%104, %c0_36] : memref<64x128xf32, #tpu.memory_space<vmem>>, vector<1x128xf32>
    %106 = arith.addf %103, %105 : vector<1x128xf32>
    %107 = arith.index_cast %100 : i32 to index
    %c0_37 = arith.constant 0 : index
    %108 = vector.load %arg5[%107, %c0_37] : memref<64x128xf32, #tpu.memory_space<vmem>>, vector<1x128xf32>
    %109 = arith.addf %106, %108 : vector<1x128xf32>
    %110 = arith.index_cast %101 : i32 to index
    %c0_38 = arith.constant 0 : index
    %111 = vector.load %arg6[%110, %c0_38] : memref<64x128xf32, #tpu.memory_space<vmem>>, vector<1x128xf32>
    %112 = arith.addf %109, %111 : vector<1x128xf32>
    %113 = arith.addf %112, %0 : vector<1x128xf32>
    %c7_39 = arith.constant 7 : index
    %114 = memref.load %arg1[%c7_39] : memref<8xi32, #tpu.memory_space<smem>>
    %c21 = arith.constant 21 : index
    %115 = memref.load %arg2[%c21] : memref<24xi32, #tpu.memory_space<smem>>
    %c22 = arith.constant 22 : index
    %116 = memref.load %arg2[%c22] : memref<24xi32, #tpu.memory_space<smem>>
    %c23 = arith.constant 23 : index
    %117 = memref.load %arg2[%c23] : memref<24xi32, #tpu.memory_space<smem>>
    %118 = arith.index_cast %114 : i32 to index
    %c0_40 = arith.constant 0 : index
    %119 = vector.load %arg3[%118, %c0_40] : memref<50x128xf32, #tpu.memory_space<vmem>>, vector<1x128xf32>
    %120 = arith.index_cast %115 : i32 to index
    %c0_41 = arith.constant 0 : index
    %121 = vector.load %arg4[%120, %c0_41] : memref<64x128xf32, #tpu.memory_space<vmem>>, vector<1x128xf32>
    %122 = arith.addf %119, %121 : vector<1x128xf32>
    %123 = arith.index_cast %116 : i32 to index
    %c0_42 = arith.constant 0 : index
    %124 = vector.load %arg5[%123, %c0_42] : memref<64x128xf32, #tpu.memory_space<vmem>>, vector<1x128xf32>
    %125 = arith.addf %122, %124 : vector<1x128xf32>
    %126 = arith.index_cast %117 : i32 to index
    %c0_43 = arith.constant 0 : index
    %127 = vector.load %arg6[%126, %c0_43] : memref<64x128xf32, #tpu.memory_space<vmem>>, vector<1x128xf32>
    %128 = arith.addf %125, %127 : vector<1x128xf32>
    %129 = arith.addf %128, %0 : vector<1x128xf32>
    %cst = arith.constant 0.000000e+00 : f32
    %130 = vector.broadcast %cst : f32 to vector<1x32xf32>
    %cst_44 = arith.constant 0.000000e+00 : f32
    %131 = vector.broadcast %cst_44 : f32 to vector<1x32xf32>
    %cst_45 = arith.constant dense<0.000000e+00> : vector<1x128xf32>
    %132 = tpu.matmul %130, %1, %cst_45 {dimension_numbers = #tpu.dot_dimension_numbers<[1], [0], [0], [1], [0, 0, 1, 1], [], []>, precision = #tpu.contract_precision<fp32>} : vector<1x32xf32>, vector<32x128xf32>, vector<1x128xf32> -> vector<1x128xf32>
    %133 = arith.addf %17, %132 : vector<1x128xf32>
    %134 = arith.negf %133 : vector<1x128xf32>
    %135 = math.exp %134 : vector<1x128xf32>
    %cst_46 = arith.constant 1.000000e+00 : f32
    %136 = vector.broadcast %cst_46 : f32 to vector<1x128xf32>
    %137 = arith.addf %136, %135 : vector<1x128xf32>
    %138 = arith.divf %136, %137 : vector<1x128xf32>
    %139 = math.tanh %133 : vector<1x128xf32>
    %140 = vector.extract_strided_slice %138 {offsets = [0, 0], sizes = [1, 32], strides = [1, 1]} : vector<1x128xf32> to vector<1x32xf32>
    %141 = vector.extract_strided_slice %138 {offsets = [0, 32], sizes = [1, 32], strides = [1, 1]} : vector<1x128xf32> to vector<1x32xf32>
    %142 = vector.extract_strided_slice %138 {offsets = [0, 96], sizes = [1, 32], strides = [1, 1]} : vector<1x128xf32> to vector<1x32xf32>
    %143 = vector.extract_strided_slice %139 {offsets = [0, 64], sizes = [1, 32], strides = [1, 1]} : vector<1x128xf32> to vector<1x32xf32>
    %144 = arith.mulf %141, %131 : vector<1x32xf32>
    %145 = arith.mulf %140, %143 : vector<1x32xf32>
    %146 = arith.addf %144, %145 : vector<1x32xf32>
    %147 = math.tanh %146 : vector<1x32xf32>
    %148 = arith.mulf %142, %147 : vector<1x32xf32>
    %c0_47 = arith.constant 0 : index
    %c0_48 = arith.constant 0 : index
    %149 = vector.load %arg12[%c0_47, %c0_48] : memref<8x32xf32, #tpu.memory_space<vmem>>, vector<1x32xf32>
    tpu.vector_store %arg12[%c0_47, %c0_48], %148 {strides = array<i32>} : memref<8x32xf32, #tpu.memory_space<vmem>>, vector<1x32xf32>,
    %cst_49 = arith.constant dense<0.000000e+00> : vector<1x128xf32>
    %150 = tpu.matmul %148, %1, %cst_49 {dimension_numbers = #tpu.dot_dimension_numbers<[1], [0], [0], [1], [0, 0, 1, 1], [], []>, precision = #tpu.contract_precision<fp32>} : vector<1x32xf32>, vector<32x128xf32>, vector<1x128xf32> -> vector<1x128xf32>
    %151 = arith.addf %33, %150 : vector<1x128xf32>
    %152 = arith.negf %151 : vector<1x128xf32>
    %153 = math.exp %152 : vector<1x128xf32>
    %cst_50 = arith.constant 1.000000e+00 : f32
    %154 = vector.broadcast %cst_50 : f32 to vector<1x128xf32>
    %155 = arith.addf %154, %153 : vector<1x128xf32>
    %156 = arith.divf %154, %155 : vector<1x128xf32>
    %157 = math.tanh %151 : vector<1x128xf32>
    %158 = vector.extract_strided_slice %156 {offsets = [0, 0], sizes = [1, 32], strides = [1, 1]} : vector<1x128xf32> to vector<1x32xf32>
    %159 = vector.extract_strided_slice %156 {offsets = [0, 32], sizes = [1, 32], strides = [1, 1]} : vector<1x128xf32> to vector<1x32xf32>
    %160 = vector.extract_strided_slice %156 {offsets = [0, 96], sizes = [1, 32], strides = [1, 1]} : vector<1x128xf32> to vector<1x32xf32>
    %161 = vector.extract_strided_slice %157 {offsets = [0, 64], sizes = [1, 32], strides = [1, 1]} : vector<1x128xf32> to vector<1x32xf32>
    %162 = arith.mulf %159, %146 : vector<1x32xf32>
    %163 = arith.mulf %158, %161 : vector<1x32xf32>
    %164 = arith.addf %162, %163 : vector<1x32xf32>
    %165 = math.tanh %164 : vector<1x32xf32>
    %166 = arith.mulf %160, %165 : vector<1x32xf32>
    %c1_51 = arith.constant 1 : index
    %c0_52 = arith.constant 0 : index
    %167 = vector.load %arg12[%c1_51, %c0_52] : memref<8x32xf32, #tpu.memory_space<vmem>>, vector<1x32xf32>
    tpu.vector_store %arg12[%c1_51, %c0_52], %166 {strides = array<i32>} : memref<8x32xf32, #tpu.memory_space<vmem>>, vector<1x32xf32>,
    %cst_53 = arith.constant dense<0.000000e+00> : vector<1x128xf32>
    %168 = tpu.matmul %166, %1, %cst_53 {dimension_numbers = #tpu.dot_dimension_numbers<[1], [0], [0], [1], [0, 0, 1, 1], [], []>, precision = #tpu.contract_precision<fp32>} : vector<1x32xf32>, vector<32x128xf32>, vector<1x128xf32> -> vector<1x128xf32>
    %169 = arith.addf %49, %168 : vector<1x128xf32>
    %170 = arith.negf %169 : vector<1x128xf32>
    %171 = math.exp %170 : vector<1x128xf32>
    %cst_54 = arith.constant 1.000000e+00 : f32
    %172 = vector.broadcast %cst_54 : f32 to vector<1x128xf32>
    %173 = arith.addf %172, %171 : vector<1x128xf32>
    %174 = arith.divf %172, %173 : vector<1x128xf32>
    %175 = math.tanh %169 : vector<1x128xf32>
    %176 = vector.extract_strided_slice %174 {offsets = [0, 0], sizes = [1, 32], strides = [1, 1]} : vector<1x128xf32> to vector<1x32xf32>
    %177 = vector.extract_strided_slice %174 {offsets = [0, 32], sizes = [1, 32], strides = [1, 1]} : vector<1x128xf32> to vector<1x32xf32>
    %178 = vector.extract_strided_slice %174 {offsets = [0, 96], sizes = [1, 32], strides = [1, 1]} : vector<1x128xf32> to vector<1x32xf32>
    %179 = vector.extract_strided_slice %175 {offsets = [0, 64], sizes = [1, 32], strides = [1, 1]} : vector<1x128xf32> to vector<1x32xf32>
    %180 = arith.mulf %177, %164 : vector<1x32xf32>
    %181 = arith.mulf %176, %179 : vector<1x32xf32>
    %182 = arith.addf %180, %181 : vector<1x32xf32>
    %183 = math.tanh %182 : vector<1x32xf32>
    %184 = arith.mulf %178, %183 : vector<1x32xf32>
    %c2_55 = arith.constant 2 : index
    %c0_56 = arith.constant 0 : index
    %185 = vector.load %arg12[%c2_55, %c0_56] : memref<8x32xf32, #tpu.memory_space<vmem>>, vector<1x32xf32>
    tpu.vector_store %arg12[%c2_55, %c0_56], %184 {strides = array<i32>} : memref<8x32xf32, #tpu.memory_space<vmem>>, vector<1x32xf32>,
    %cst_57 = arith.constant dense<0.000000e+00> : vector<1x128xf32>
    %186 = tpu.matmul %184, %1, %cst_57 {dimension_numbers = #tpu.dot_dimension_numbers<[1], [0], [0], [1], [0, 0, 1, 1], [], []>, precision = #tpu.contract_precision<fp32>} : vector<1x32xf32>, vector<32x128xf32>, vector<1x128xf32> -> vector<1x128xf32>
    %187 = arith.addf %65, %186 : vector<1x128xf32>
    %188 = arith.negf %187 : vector<1x128xf32>
    %189 = math.exp %188 : vector<1x128xf32>
    %cst_58 = arith.constant 1.000000e+00 : f32
    %190 = vector.broadcast %cst_58 : f32 to vector<1x128xf32>
    %191 = arith.addf %190, %189 : vector<1x128xf32>
    %192 = arith.divf %190, %191 : vector<1x128xf32>
    %193 = math.tanh %187 : vector<1x128xf32>
    %194 = vector.extract_strided_slice %192 {offsets = [0, 0], sizes = [1, 32], strides = [1, 1]} : vector<1x128xf32> to vector<1x32xf32>
    %195 = vector.extract_strided_slice %192 {offsets = [0, 32], sizes = [1, 32], strides = [1, 1]} : vector<1x128xf32> to vector<1x32xf32>
    %196 = vector.extract_strided_slice %192 {offsets = [0, 96], sizes = [1, 32], strides = [1, 1]} : vector<1x128xf32> to vector<1x32xf32>
    %197 = vector.extract_strided_slice %193 {offsets = [0, 64], sizes = [1, 32], strides = [1, 1]} : vector<1x128xf32> to vector<1x32xf32>
    %198 = arith.mulf %195, %182 : vector<1x32xf32>
    %199 = arith.mulf %194, %197 : vector<1x32xf32>
    %200 = arith.addf %198, %199 : vector<1x32xf32>
    %201 = math.tanh %200 : vector<1x32xf32>
    %202 = arith.mulf %196, %201 : vector<1x32xf32>
    %c3_59 = arith.constant 3 : index
    %c0_60 = arith.constant 0 : index
    %203 = vector.load %arg12[%c3_59, %c0_60] : memref<8x32xf32, #tpu.memory_space<vmem>>, vector<1x32xf32>
    tpu.vector_store %arg12[%c3_59, %c0_60], %202 {strides = array<i32>} : memref<8x32xf32, #tpu.memory_space<vmem>>, vector<1x32xf32>,
    %cst_61 = arith.constant dense<0.000000e+00> : vector<1x128xf32>
    %204 = tpu.matmul %202, %1, %cst_61 {dimension_numbers = #tpu.dot_dimension_numbers<[1], [0], [0], [1], [0, 0, 1, 1], [], []>, precision = #tpu.contract_precision<fp32>} : vector<1x32xf32>, vector<32x128xf32>, vector<1x128xf32> -> vector<1x128xf32>
    %205 = arith.addf %81, %204 : vector<1x128xf32>
    %206 = arith.negf %205 : vector<1x128xf32>
    %207 = math.exp %206 : vector<1x128xf32>
    %cst_62 = arith.constant 1.000000e+00 : f32
    %208 = vector.broadcast %cst_62 : f32 to vector<1x128xf32>
    %209 = arith.addf %208, %207 : vector<1x128xf32>
    %210 = arith.divf %208, %209 : vector<1x128xf32>
    %211 = math.tanh %205 : vector<1x128xf32>
    %212 = vector.extract_strided_slice %210 {offsets = [0, 0], sizes = [1, 32], strides = [1, 1]} : vector<1x128xf32> to vector<1x32xf32>
    %213 = vector.extract_strided_slice %210 {offsets = [0, 32], sizes = [1, 32], strides = [1, 1]} : vector<1x128xf32> to vector<1x32xf32>
    %214 = vector.extract_strided_slice %210 {offsets = [0, 96], sizes = [1, 32], strides = [1, 1]} : vector<1x128xf32> to vector<1x32xf32>
    %215 = vector.extract_strided_slice %211 {offsets = [0, 64], sizes = [1, 32], strides = [1, 1]} : vector<1x128xf32> to vector<1x32xf32>
    %216 = arith.mulf %213, %200 : vector<1x32xf32>
    %217 = arith.mulf %212, %215 : vector<1x32xf32>
    %218 = arith.addf %216, %217 : vector<1x32xf32>
    %219 = math.tanh %218 : vector<1x32xf32>
    %220 = arith.mulf %214, %219 : vector<1x32xf32>
    %c4_63 = arith.constant 4 : index
    %c0_64 = arith.constant 0 : index
    %221 = vector.load %arg12[%c4_63, %c0_64] : memref<8x32xf32, #tpu.memory_space<vmem>>, vector<1x32xf32>
    tpu.vector_store %arg12[%c4_63, %c0_64], %220 {strides = array<i32>} : memref<8x32xf32, #tpu.memory_space<vmem>>, vector<1x32xf32>,
    %cst_65 = arith.constant dense<0.000000e+00> : vector<1x128xf32>
    %222 = tpu.matmul %220, %1, %cst_65 {dimension_numbers = #tpu.dot_dimension_numbers<[1], [0], [0], [1], [0, 0, 1, 1], [], []>, precision = #tpu.contract_precision<fp32>} : vector<1x32xf32>, vector<32x128xf32>, vector<1x128xf32> -> vector<1x128xf32>
    %223 = arith.addf %97, %222 : vector<1x128xf32>
    %224 = arith.negf %223 : vector<1x128xf32>
    %225 = math.exp %224 : vector<1x128xf32>
    %cst_66 = arith.constant 1.000000e+00 : f32
    %226 = vector.broadcast %cst_66 : f32 to vector<1x128xf32>
    %227 = arith.addf %226, %225 : vector<1x128xf32>
    %228 = arith.divf %226, %227 : vector<1x128xf32>
    %229 = math.tanh %223 : vector<1x128xf32>
    %230 = vector.extract_strided_slice %228 {offsets = [0, 0], sizes = [1, 32], strides = [1, 1]} : vector<1x128xf32> to vector<1x32xf32>
    %231 = vector.extract_strided_slice %228 {offsets = [0, 32], sizes = [1, 32], strides = [1, 1]} : vector<1x128xf32> to vector<1x32xf32>
    %232 = vector.extract_strided_slice %228 {offsets = [0, 96], sizes = [1, 32], strides = [1, 1]} : vector<1x128xf32> to vector<1x32xf32>
    %233 = vector.extract_strided_slice %229 {offsets = [0, 64], sizes = [1, 32], strides = [1, 1]} : vector<1x128xf32> to vector<1x32xf32>
    %234 = arith.mulf %231, %218 : vector<1x32xf32>
    %235 = arith.mulf %230, %233 : vector<1x32xf32>
    %236 = arith.addf %234, %235 : vector<1x32xf32>
    %237 = math.tanh %236 : vector<1x32xf32>
    %238 = arith.mulf %232, %237 : vector<1x32xf32>
    %c5_67 = arith.constant 5 : index
    %c0_68 = arith.constant 0 : index
    %239 = vector.load %arg12[%c5_67, %c0_68] : memref<8x32xf32, #tpu.memory_space<vmem>>, vector<1x32xf32>
    tpu.vector_store %arg12[%c5_67, %c0_68], %238 {strides = array<i32>} : memref<8x32xf32, #tpu.memory_space<vmem>>, vector<1x32xf32>,
    %cst_69 = arith.constant dense<0.000000e+00> : vector<1x128xf32>
    %240 = tpu.matmul %238, %1, %cst_69 {dimension_numbers = #tpu.dot_dimension_numbers<[1], [0], [0], [1], [0, 0, 1, 1], [], []>, precision = #tpu.contract_precision<fp32>} : vector<1x32xf32>, vector<32x128xf32>, vector<1x128xf32> -> vector<1x128xf32>
    %241 = arith.addf %113, %240 : vector<1x128xf32>
    %242 = arith.negf %241 : vector<1x128xf32>
    %243 = math.exp %242 : vector<1x128xf32>
    %cst_70 = arith.constant 1.000000e+00 : f32
    %244 = vector.broadcast %cst_70 : f32 to vector<1x128xf32>
    %245 = arith.addf %244, %243 : vector<1x128xf32>
    %246 = arith.divf %244, %245 : vector<1x128xf32>
    %247 = math.tanh %241 : vector<1x128xf32>
    %248 = vector.extract_strided_slice %246 {offsets = [0, 0], sizes = [1, 32], strides = [1, 1]} : vector<1x128xf32> to vector<1x32xf32>
    %249 = vector.extract_strided_slice %246 {offsets = [0, 32], sizes = [1, 32], strides = [1, 1]} : vector<1x128xf32> to vector<1x32xf32>
    %250 = vector.extract_strided_slice %246 {offsets = [0, 96], sizes = [1, 32], strides = [1, 1]} : vector<1x128xf32> to vector<1x32xf32>
    %251 = vector.extract_strided_slice %247 {offsets = [0, 64], sizes = [1, 32], strides = [1, 1]} : vector<1x128xf32> to vector<1x32xf32>
    %252 = arith.mulf %249, %236 : vector<1x32xf32>
    %253 = arith.mulf %248, %251 : vector<1x32xf32>
    %254 = arith.addf %252, %253 : vector<1x32xf32>
    %255 = math.tanh %254 : vector<1x32xf32>
    %256 = arith.mulf %250, %255 : vector<1x32xf32>
    %c6_71 = arith.constant 6 : index
    %c0_72 = arith.constant 0 : index
    %257 = vector.load %arg12[%c6_71, %c0_72] : memref<8x32xf32, #tpu.memory_space<vmem>>, vector<1x32xf32>
    tpu.vector_store %arg12[%c6_71, %c0_72], %256 {strides = array<i32>} : memref<8x32xf32, #tpu.memory_space<vmem>>, vector<1x32xf32>,
    %cst_73 = arith.constant dense<0.000000e+00> : vector<1x128xf32>
    %258 = tpu.matmul %256, %1, %cst_73 {dimension_numbers = #tpu.dot_dimension_numbers<[1], [0], [0], [1], [0, 0, 1, 1], [], []>, precision = #tpu.contract_precision<fp32>} : vector<1x32xf32>, vector<32x128xf32>, vector<1x128xf32> -> vector<1x128xf32>
    %259 = arith.addf %129, %258 : vector<1x128xf32>
    %260 = arith.negf %259 : vector<1x128xf32>
    %261 = math.exp %260 : vector<1x128xf32>
    %cst_74 = arith.constant 1.000000e+00 : f32
    %262 = vector.broadcast %cst_74 : f32 to vector<1x128xf32>
    %263 = arith.addf %262, %261 : vector<1x128xf32>
    %264 = arith.divf %262, %263 : vector<1x128xf32>
    %265 = math.tanh %259 : vector<1x128xf32>
    %266 = vector.extract_strided_slice %264 {offsets = [0, 0], sizes = [1, 32], strides = [1, 1]} : vector<1x128xf32> to vector<1x32xf32>
    %267 = vector.extract_strided_slice %264 {offsets = [0, 32], sizes = [1, 32], strides = [1, 1]} : vector<1x128xf32> to vector<1x32xf32>
    %268 = vector.extract_strided_slice %264 {offsets = [0, 96], sizes = [1, 32], strides = [1, 1]} : vector<1x128xf32> to vector<1x32xf32>
    %269 = vector.extract_strided_slice %265 {offsets = [0, 64], sizes = [1, 32], strides = [1, 1]} : vector<1x128xf32> to vector<1x32xf32>
    %270 = arith.mulf %267, %254 : vector<1x32xf32>
    %271 = arith.mulf %266, %269 : vector<1x32xf32>
    %272 = arith.addf %270, %271 : vector<1x32xf32>
    %273 = math.tanh %272 : vector<1x32xf32>
    %274 = arith.mulf %268, %273 : vector<1x32xf32>
    %c7_75 = arith.constant 7 : index
    %c0_76 = arith.constant 0 : index
    %275 = vector.load %arg12[%c7_75, %c0_76] : memref<8x32xf32, #tpu.memory_space<vmem>>, vector<1x32xf32>
    tpu.vector_store %arg12[%c7_75, %c0_76], %274 {strides = array<i32>} : memref<8x32xf32, #tpu.memory_space<vmem>>, vector<1x32xf32>,
    %c0_77 = arith.constant 0 : index
    %c0_78 = arith.constant 0 : index
    %276 = vector.load %arg12[%c0_77, %c0_78] : memref<8x32xf32, #tpu.memory_space<vmem>>, vector<8x32xf32>
    %c0_79 = arith.constant 0 : index
    %c0_80 = arith.constant 0 : index
    %277 = vector.load %arg9[%c0_79, %c0_80] : memref<32x8xf32, #tpu.memory_space<vmem>>, vector<32x8xf32>
    %cst_81 = arith.constant dense<0.000000e+00> : vector<8x8xf32>
    %278 = tpu.matmul %276, %277, %cst_81 {dimension_numbers = #tpu.dot_dimension_numbers<[1], [0], [0], [1], [0, 0, 1, 1], [], []>, precision = #tpu.contract_precision<fp32>} : vector<8x32xf32>, vector<32x8xf32>, vector<8x8xf32> -> vector<8x8xf32>
    %c0_82 = arith.constant 0 : index
    %c0_83 = arith.constant 0 : index
    %279 = vector.load %arg10[%c0_82, %c0_83] : memref<1x8xf32, #tpu.memory_space<vmem>>, vector<1x8xf32>
    %280 = vector.broadcast %279 : vector<1x8xf32> to vector<8x8xf32>
    %281 = arith.addf %278, %280 : vector<8x8xf32>
    %cst_84 = arith.constant dense<0xFF800000> : vector<8xf32>
    %282 = vector.multi_reduction <maximumf>, %281, %cst_84 [1] : vector<8x8xf32> to vector<8xf32>
    %283 = vector.shape_cast %282 : vector<8xf32> to vector<8x1xf32>
    %284 = vector.broadcast %283 : vector<8x1xf32> to vector<8x8xf32>
    %285 = arith.subf %281, %284 : vector<8x8xf32>
    %286 = math.exp %285 : vector<8x8xf32>
    %cst_85 = arith.constant dense<0.000000e+00> : vector<8xf32>
    %287 = vector.multi_reduction <add>, %286, %cst_85 [1] : vector<8x8xf32> to vector<8xf32>
    %288 = vector.shape_cast %287 : vector<8xf32> to vector<8x1xf32>
    %289 = math.log %288 : vector<8x1xf32>
    %290 = arith.addf %283, %289 : vector<8x1xf32>
    %291 = vector.broadcast %290 : vector<8x1xf32> to vector<8x8xf32>
    %292 = arith.subf %281, %291 : vector<8x8xf32>
    %c0_86 = arith.constant 0 : index
    %c0_87 = arith.constant 0 : index
    %293 = vector.load %arg11[%c0_86, %c0_87] : memref<8x8xf32, #tpu.memory_space<vmem>>, vector<8x8xf32>
    tpu.vector_store %arg11[%c0_86, %c0_87], %292 {strides = array<i32>} : memref<8x8xf32, #tpu.memory_space<vmem>>, vector<8x8xf32>,
    return
  }
  func.func @transform_0(%arg0: i32, %arg1: memref<8xi32, #tpu.memory_space<smem>>, %arg2: memref<24xi32, #tpu.memory_space<smem>>) -> (i32, i32) {
    %c0_i32 = arith.constant 0 : i32
    %c0_i32_0 = arith.constant 0 : i32
    %c0_i32_1 = arith.constant 0 : i32
    return %c0_i32, %c0_i32_0 : i32, i32
  }
  func.func @transform_1(%arg0: i32, %arg1: memref<8xi32, #tpu.memory_space<smem>>, %arg2: memref<24xi32, #tpu.memory_space<smem>>) -> (i32, i32) {
    %c0_i32 = arith.constant 0 : i32
    %c0_i32_0 = arith.constant 0 : i32
    %c0_i32_1 = arith.constant 0 : i32
    return %c0_i32, %c0_i32_0 : i32, i32
  }
  func.func @transform_2(%arg0: i32, %arg1: memref<8xi32, #tpu.memory_space<smem>>, %arg2: memref<24xi32, #tpu.memory_space<smem>>) -> (i32, i32) {
    %c0_i32 = arith.constant 0 : i32
    %c0_i32_0 = arith.constant 0 : i32
    %c0_i32_1 = arith.constant 0 : i32
    return %c0_i32, %c0_i32_0 : i32, i32
  }
  func.func @transform_3(%arg0: i32, %arg1: memref<8xi32, #tpu.memory_space<smem>>, %arg2: memref<24xi32, #tpu.memory_space<smem>>) -> (i32, i32) {
    %c0_i32 = arith.constant 0 : i32
    %c0_i32_0 = arith.constant 0 : i32
    %c0_i32_1 = arith.constant 0 : i32
    return %c0_i32, %c0_i32_0 : i32, i32
  }
  func.func @transform_4(%arg0: i32, %arg1: memref<8xi32, #tpu.memory_space<smem>>, %arg2: memref<24xi32, #tpu.memory_space<smem>>) -> (i32, i32) {
    %c0_i32 = arith.constant 0 : i32
    %c0_i32_0 = arith.constant 0 : i32
    %c0_i32_1 = arith.constant 0 : i32
    return %c0_i32, %c0_i32_0 : i32, i32
  }
  func.func @transform_5(%arg0: i32, %arg1: memref<8xi32, #tpu.memory_space<smem>>, %arg2: memref<24xi32, #tpu.memory_space<smem>>) -> (i32, i32) {
    %c0_i32 = arith.constant 0 : i32
    %c0_i32_0 = arith.constant 0 : i32
    %c0_i32_1 = arith.constant 0 : i32
    return %c0_i32, %c0_i32_0 : i32, i32
  }
  func.func @transform_6(%arg0: i32, %arg1: memref<8xi32, #tpu.memory_space<smem>>, %arg2: memref<24xi32, #tpu.memory_space<smem>>) -> (i32, i32) {
    %c0_i32 = arith.constant 0 : i32
    %c0_i32_0 = arith.constant 0 : i32
    %c0_i32_1 = arith.constant 0 : i32
    return %c0_i32, %c0_i32_0 : i32, i32
  }
  func.func @transform_7(%arg0: i32, %arg1: memref<8xi32, #tpu.memory_space<smem>>, %arg2: memref<24xi32, #tpu.memory_space<smem>>) -> (i32, i32) {
    %c0_i32 = arith.constant 0 : i32
    %c0_i32_0 = arith.constant 0 : i32
    %c0_i32_1 = arith.constant 0 : i32
    return %c0_i32, %c0_i32_0 : i32, i32
  }
  func.func @transform_8(%arg0: i32, %arg1: memref<8xi32, #tpu.memory_space<smem>>, %arg2: memref<24xi32, #tpu.memory_space<smem>>) -> (i32, i32) {
    %c0_i32 = arith.constant 0 : i32
    %c0_i32_0 = arith.constant 0 : i32
    %c0_i32_1 = arith.constant 0 : i32
    return %c0_i32, %c0_i32_0 : i32, i32
  }
}

</mosaic_0001>

<llo_original>
// kernel: tpu_custom_call.1
$region0: #{tpu_custom_call.1}
  #allocation0 [shape = 'u32[]', space=smem, size = 0x4, offset = 0x4, fixed_abs, tag = 'smem constant byte address 0x4 - core index']
  #allocation1 [shape = 'u32[144,128]{1,0:T(1,128)}', space=vmem, size = 0x12000, scoped, tag = 'internal scratch']
  #allocation2 [shape = 'f32[8,32]{1,0:T(8,128)}', space=vmem, size = 0x1000, scoped, tag = 'scratch operand']
  #allocation3 [shape = 's32[1]{0}', space=sflag, size = 0x4, scoped, tag = 'scoped memory for tpu_custom_call.1']
  #allocation4 [shape = 'u8[512]{0}', space=smem, size = 0x200, scoped, tag = 'prefetched SMEM operand 0']
  #allocation5 [shape = 'u8[512]{0}', space=smem, size = 0x200, scoped, tag = 'prefetched SMEM operand 1']
  %s0 = inlined_call_operand.vmem [shape: s32[8], index: 0, kind: input, shape index: {}]
  %s1 = inlined_call_operand.vmem [shape: s32[24], index: 1, kind: input, shape index: {}]
  %s2 = inlined_call_operand.hbm [shape: f32[50,128], index: 2, kind: input, shape index: {}]
  %s3 = inlined_call_operand.hbm [shape: f32[64,128], index: 3, kind: input, shape index: {}]
  %s4 = inlined_call_operand.hbm [shape: f32[64,128], index: 4, kind: input, shape index: {}]
  %s5 = inlined_call_operand.hbm [shape: f32[64,128], index: 5, kind: input, shape index: {}]
  %s6 = inlined_call_operand.vmem [shape: f32[1,128], index: 6, kind: input, shape index: {}]
  %s7 = inlined_call_operand.vmem [shape: f32[32,128], index: 7, kind: input, shape index: {}]
  %s8 = inlined_call_operand.vmem [shape: f32[32,8], index: 8, kind: input, shape index: {}]
  %s9 = inlined_call_operand.vmem [shape: f32[1,8], index: 9, kind: input, shape index: {}]
  %s10 = inlined_call_operand.hbm [shape: f32[8,8], index: 10, kind: output, shape index: {}]
  %s11 = sld [smem:[#allocation0]]
  $region58: #{tpu_custom_call.1} parent=0
    _
  %s13 = ssub.s32 1, %s11
  %s14 = scalar_select 0, %s13, %s11
  %s15 = sshll.u32 %s0, 4
  %s16 = int_to_ptr.vmem [resolvable:$true] %s15
  %18 = dma.vmem_to_smem %s16, 16, [#allocation4], [#allocation3]
  %s19 = sshll.u32 %s1, 4
  %s20 = int_to_ptr.vmem [resolvable:$true] %s19
  %22 = dma.vmem_to_smem %s20, 16, [#allocation5], [#allocation3]
  %23 = dma.done [#allocation3], 32
  %24 = sfence
  $region1: #{tpu_custom_call.1} parent=0
    #allocation6 [shape = 'u8[28672]{0}', space=vmem, size = 0x7000, scoped, tag = 'input window, operand 2, single buffered']
    #allocation7 [shape = 's32[1]{0}', space=sflag, size = 0x4, scoped, tag = 'scoped memory for tpu_custom_call.1']
    #allocation8 [shape = 's32[1]{0}', space=sflag, size = 0x4, scoped, tag = 'scoped memory for tpu_custom_call.1']
    #allocation9 [shape = 'u8[32768]{0}', space=vmem, size = 0x8000, scoped, tag = 'input window, operand 3, single buffered']
    #allocation10 [shape = 's32[1]{0}', space=sflag, size = 0x4, scoped, tag = 'scoped memory for tpu_custom_call.1']
    #allocation11 [shape = 'u8[32768]{0}', space=vmem, size = 0x8000, scoped, tag = 'input window, operand 4, single buffered']
    #allocation12 [shape = 'u8[32768]{0}', space=vmem, size = 0x8000, scoped, tag = 'input window, operand 5, single buffered']
    #allocation13 [shape = 's32[1]{0}', space=sflag, size = 0x4, scoped, tag = 'scoped memory for tpu_custom_call.1']
    #allocation14 [shape = 'u8[4096]{0}', space=vmem, size = 0x1000, scoped, tag = 'output window, operand 0, single buffered']
    %25 = vsyncpa [#allocation7], 0
    %26 = vsyncpa [#allocation10], 0
    %27 = vsyncpa [#allocation13], 0
    %28 = vsyncpa [#allocation8], 0
    // Predicated region
    $region2: #{tpu_custom_call.1} parent=1 // pred_check
      _
    $region3: #{tpu_custom_call.1} parent=1 // pred_check_branch
      %30 = sbr.rel (0) target = $region5
    $region4: #{tpu_custom_call.1} parent=1 // pred_region
      %s32 = ssub.s32 896, 896
      %33 = vsyncadd [#allocation7], %s32
      %s34 = sshll.u32 [#allocation6], 4
      %s35 = int_to_ptr.vmem [resolvable:$true] %s34
      %40 = dma.hbm_to_vmem [thread:$0]  %s2, 896, %s35, [#allocation7], 128, 128, 8
    $region5: #{tpu_custom_call.1} parent=1 // pred_fallthru
      _
    // Predicated region
    $region6: #{tpu_custom_call.1} parent=1 // pred_check
      _
    $region7: #{tpu_custom_call.1} parent=1 // pred_check_branch
      %42 = sbr.rel (0) target = $region9
    $region8: #{tpu_custom_call.1} parent=1 // pred_region
      %s44 = ssub.s32 1024, 1024
      %45 = vsyncadd [#allocation10], %s44
      %s46 = sshll.u32 [#allocation9], 4
      %s47 = int_to_ptr.vmem [resolvable:$true] %s46
      %52 = dma.hbm_to_vmem [thread:$0]  %s3, 1024, %s47, [#allocation10], 128, 128, 8
    $region9: #{tpu_custom_call.1} parent=1 // pred_fallthru
      _
    // Predicated region
    $region10: #{tpu_custom_call.1} parent=1 // pred_check
      _
    $region11: #{tpu_custom_call.1} parent=1 // pred_check_branch
      %54 = sbr.rel (0) target = $region13
    $region12: #{tpu_custom_call.1} parent=1 // pred_region
      %s56 = ssub.s32 1024, 1024
      %57 = vsyncadd [#allocation10], %s56
      %s58 = sshll.u32 [#allocation11], 4
      %s59 = int_to_ptr.vmem [resolvable:$true] %s58
      %64 = dma.hbm_to_vmem [thread:$0]  %s4, 1024, %s59, [#allocation10], 128, 128, 8
    $region13: #{tpu_custom_call.1} parent=1 // pred_fallthru
      _
    // Predicated region
    $region14: #{tpu_custom_call.1} parent=1 // pred_check
      _
    $region15: #{tpu_custom_call.1} parent=1 // pred_check_branch
      %66 = sbr.rel (0) target = $region17
    $region16: #{tpu_custom_call.1} parent=1 // pred_region
      %s68 = ssub.s32 1024, 1024
      %69 = vsyncadd [#allocation13], %s68
      %s70 = sshll.u32 [#allocation12], 4
      %s71 = int_to_ptr.vmem [resolvable:$true] %s70
      %76 = dma.hbm_to_vmem [thread:$0]  %s5, 1024, %s71, [#allocation13], 128, 128, 8
    $region17: #{tpu_custom_call.1} parent=1 // pred_fallthru
      _
    // Predicated region
    $region18: #{tpu_custom_call.1} parent=1 // pred_check
      _
    $region19: #{tpu_custom_call.1} parent=1 // pred_check_branch
      %78 = sbr.rel (0) target = $region21
    $region20: #{tpu_custom_call.1} parent=1 // pred_region
      _
    $region21: #{tpu_custom_call.1} parent=1 // pred_fallthru
      _
    // Predicated region
    $region22: #{tpu_custom_call.1} parent=1 // pred_check
      _
    $region23: #{tpu_custom_call.1} parent=1 // pred_check_branch
      %80 = sbr.rel (0) target = $region25
    $region24: #{tpu_custom_call.1} parent=1 // pred_region
      _
    $region25: #{tpu_custom_call.1} parent=1 // pred_fallthru
      _
    // Predicated region
    $region26: #{tpu_custom_call.1} parent=1 // pred_check
      _
    $region27: #{tpu_custom_call.1} parent=1 // pred_check_branch
      %82 = sbr.rel (0) target = $region29
    $region28: #{tpu_custom_call.1} parent=1 // pred_region
      _
    $region29: #{tpu_custom_call.1} parent=1 // pred_fallthru
      _
    // Predicated region
    $region30: #{tpu_custom_call.1} parent=1 // pred_check
      _
    $region31: #{tpu_custom_call.1} parent=1 // pred_check_branch
      %84 = sbr.rel (0) target = $region33
    $region32: #{tpu_custom_call.1} parent=1 // pred_region
      _
    $region33: #{tpu_custom_call.1} parent=1 // pred_fallthru
      _
    // Predicated region
    $region34: #{tpu_custom_call.1} parent=1 // pred_check
      _
    $region35: #{tpu_custom_call.1} parent=1 // pred_check_branch
      %86 = sbr.rel (0) target = $region37
    $region36: #{tpu_custom_call.1} parent=1 // pred_region
      %87 = dma.done [#allocation7], 896
    $region37: #{tpu_custom_call.1} parent=1 // pred_fallthru
      _
    // Predicated region
    $region38: #{tpu_custom_call.1} parent=1 // pred_check
      _
    $region39: #{tpu_custom_call.1} parent=1 // pred_check_branch
      %89 = sbr.rel (0) target = $region41
    $region40: #{tpu_custom_call.1} parent=1 // pred_region
      %90 = dma.done [#allocation10], 1024
    $region41: #{tpu_custom_call.1} parent=1 // pred_fallthru
      _
    // Predicated region
    $region42: #{tpu_custom_call.1} parent=1 // pred_check
      _
    $region43: #{tpu_custom_call.1} parent=1 // pred_check_branch
      %92 = sbr.rel (0) target = $region45
    $region44: #{tpu_custom_call.1} parent=1 // pred_region
      %93 = dma.done [#allocation10], 1024
    $region45: #{tpu_custom_call.1} parent=1 // pred_fallthru
      _
    // Predicated region
    $region46: #{tpu_custom_call.1} parent=1 // pred_check
      _
    $region47: #{tpu_custom_call.1} parent=1 // pred_check_branch
      %95 = sbr.rel (0) target = $region49
    $region48: #{tpu_custom_call.1} parent=1 // pred_region
      %96 = dma.done [#allocation13], 1024
    $region49: #{tpu_custom_call.1} parent=1 // pred_fallthru
      _
    %v97 = vld [vmem:[%s6] sm:$0x1]
    %v98 = vld [vmem:[%s7] sm:$0xff]
    %v99 = vld [vmem:[%s7 + $0x8] sm:$0xff]
    %v100 = vld [vmem:[%s7 + $0x10] sm:$0xff]
    %v101 = vld [vmem:[%s7 + $0x18] sm:$0xff]
    %s102 = sld [smem:[#allocation4]]
    %s103 = sld [smem:[#allocation5]]
    %s104 = sld [smem:[#allocation5 + $0x1]]
    %s105 = sld [smem:[#allocation5 + $0x2]]
    %s106 = scalar_lea.vmem [#allocation6], %s102
    %v107 = vld [vmem:[%s106] sm:$0x1]
    %s108 = scalar_lea.vmem [#allocation9], %s103
    %v109 = vld [vmem:[%s108] sm:$0x1]
    %v110 = vadd.f32 %v107, %v109
    %s111 = scalar_lea.vmem [#allocation11], %s104
    %v112 = vld [vmem:[%s111] sm:$0x1]
    %v113 = vadd.f32 %v110, %v112
    %s114 = scalar_lea.vmem [#allocation12], %s105
    %v115 = vld [vmem:[%s114] sm:$0x1]
    %v116 = vadd.f32 %v113, %v115
    %v117 = vadd.f32 %v116, %v97
    %s118 = sld [smem:[#allocation4 + $0x1]]
    %s119 = sld [smem:[#allocation5 + $0x3]]
    %s120 = sld [smem:[#allocation5 + $0x4]]
    %s121 = sld [smem:[#allocation5 + $0x5]]
    %s122 = scalar_lea.vmem [#allocation6], %s118
    %v123 = vld [vmem:[%s122] sm:$0x1]
    %s124 = scalar_lea.vmem [#allocation9], %s119
    %v125 = vld [vmem:[%s124] sm:$0x1]
    %v126 = vadd.f32 %v123, %v125
    %s127 = scalar_lea.vmem [#allocation11], %s120
    %v128 = vld [vmem:[%s127] sm:$0x1]
    %v129 = vadd.f32 %v126, %v128
    %s130 = scalar_lea.vmem [#allocation12], %s121
    %v131 = vld [vmem:[%s130] sm:$0x1]
    %v132 = vadd.f32 %v129, %v131
    %v133 = vadd.f32 %v132, %v97
    %s134 = sld [smem:[#allocation4 + $0x2]]
    %s135 = sld [smem:[#allocation5 + $0x6]]
    %s136 = sld [smem:[#allocation5 + $0x7]]
    %s137 = sld [smem:[#allocation5 + $0x8]]
    %s138 = scalar_lea.vmem [#allocation6], %s134
    %v139 = vld [vmem:[%s138] sm:$0x1]
    %s140 = scalar_lea.vmem [#allocation9], %s135
    %v141 = vld [vmem:[%s140] sm:$0x1]
    %v142 = vadd.f32 %v139, %v141
    %s143 = scalar_lea.vmem [#allocation11], %s136
    %v144 = vld [vmem:[%s143] sm:$0x1]
    %v145 = vadd.f32 %v142, %v144
    %s146 = scalar_lea.vmem [#allocation12], %s137
    %v147 = vld [vmem:[%s146] sm:$0x1]
    %v148 = vadd.f32 %v145, %v147
    %v149 = vadd.f32 %v148, %v97
    %s150 = sld [smem:[#allocation4 + $0x3]]
    %s151 = sld [smem:[#allocation5 + $0x9]]
    %s152 = sld [smem:[#allocation5 + $0xa]]
    %s153 = sld [smem:[#allocation5 + $0xb]]
    %s154 = scalar_lea.vmem [#allocation6], %s150
    %v155 = vld [vmem:[%s154] sm:$0x1]
    %s156 = scalar_lea.vmem [#allocation9], %s151
    %v157 = vld [vmem:[%s156] sm:$0x1]
    %v158 = vadd.f32 %v155, %v157
    %s159 = scalar_lea.vmem [#allocation11], %s152
    %v160 = vld [vmem:[%s159] sm:$0x1]
    %v161 = vadd.f32 %v158, %v160
    %s162 = scalar_lea.vmem [#allocation12], %s153
    %v163 = vld [vmem:[%s162] sm:$0x1]
    %v164 = vadd.f32 %v161, %v163
    %v165 = vadd.f32 %v164, %v97
    %s166 = sld [smem:[#allocation4 + $0x4]]
    %s167 = sld [smem:[#allocation5 + $0xc]]
    %s168 = sld [smem:[#allocation5 + $0xd]]
    %s169 = sld [smem:[#allocation5 + $0xe]]
    %s170 = scalar_lea.vmem [#allocation6], %s166
    %v171 = vld [vmem:[%s170] sm:$0x1]
    %s172 = scalar_lea.vmem [#allocation9], %s167
    %v173 = vld [vmem:[%s172] sm:$0x1]
    %v174 = vadd.f32 %v171, %v173
    %s175 = scalar_lea.vmem [#allocation11], %s168
    %v176 = vld [vmem:[%s175] sm:$0x1]
    %v177 = vadd.f32 %v174, %v176
    %s178 = scalar_lea.vmem [#allocation12], %s169
    %v179 = vld [vmem:[%s178] sm:$0x1]
    %v180 = vadd.f32 %v177, %v179
    %v181 = vadd.f32 %v180, %v97
    %s182 = sld [smem:[#allocation4 + $0x5]]
    %s183 = sld [smem:[#allocation5 + $0xf]]
    %s184 = sld [smem:[#allocation5 + $0x10]]
    %s185 = sld [smem:[#allocation5 + $0x11]]
    %s186 = scalar_lea.vmem [#allocation6], %s182
    %v187 = vld [vmem:[%s186] sm:$0x1]
    %s188 = scalar_lea.vmem [#allocation9], %s183
    %v189 = vld [vmem:[%s188] sm:$0x1]
    %v190 = vadd.f32 %v187, %v189
    %s191 = scalar_lea.vmem [#allocation11], %s184
    %v192 = vld [vmem:[%s191] sm:$0x1]
    %v193 = vadd.f32 %v190, %v192
    %s194 = scalar_lea.vmem [#allocation12], %s185
    %v195 = vld [vmem:[%s194] sm:$0x1]
    %v196 = vadd.f32 %v193, %v195
    %v197 = vadd.f32 %v196, %v97
    %s198 = sld [smem:[#allocation4 + $0x6]]
    %s199 = sld [smem:[#allocation5 + $0x12]]
    %s200 = sld [smem:[#allocation5 + $0x13]]
    %s201 = sld [smem:[#allocation5 + $0x14]]
    %s202 = scalar_lea.vmem [#allocation6], %s198
    %v203 = vld [vmem:[%s202] sm:$0x1]
    %s204 = scalar_lea.vmem [#allocation9], %s199
    %v205 = vld [vmem:[%s204] sm:$0x1]
    %v206 = vadd.f32 %v203, %v205
    %s207 = scalar_lea.vmem [#allocation11], %s200
    %v208 = vld [vmem:[%s207] sm:$0x1]
    %v209 = vadd.f32 %v206, %v208
    %s210 = scalar_lea.vmem [#allocation12], %s201
    %v211 = vld [vmem:[%s210] sm:$0x1]
    %v212 = vadd.f32 %v209, %v211
    %v213 = vadd.f32 %v212, %v97
    %s214 = sld [smem:[#allocation4 + $0x7]]
    %s215 = sld [smem:[#allocation5 + $0x15]]
    %s216 = sld [smem:[#allocation5 + $0x16]]
    %s217 = sld [smem:[#allocation5 + $0x17]]
    %s218 = scalar_lea.vmem [#allocation6], %s214
    %v219 = vld [vmem:[%s218] sm:$0x1]
    %s220 = scalar_lea.vmem [#allocation9], %s215
    %v221 = vld [vmem:[%s220] sm:$0x1]
    %v222 = vadd.f32 %v219, %v221
    %s223 = scalar_lea.vmem [#allocation11], %s216
    %v224 = vld [vmem:[%s223] sm:$0x1]
    %v225 = vadd.f32 %v222, %v224
    %s226 = scalar_lea.vmem [#allocation12], %s217
    %v227 = vld [vmem:[%s226] sm:$0x1]
    %v228 = vadd.f32 %v225, %v227
    %v229 = vadd.f32 %v228, %v97
    %vm230 = vcmask 261120
    %v232 = vsel %vm230, 0.0, 0
    %234 = vmatprep.subr.mxu0 0.0
    %v235 = vand.u32 %v98, 4294901760
    %236 = vmatpush1.msra.mxu0 %v235
    %237 = vmatprep.subr.mxu0 0.0
    %v238 = vand.u32 %v99, 4294901760
    %239 = vmatpush1.msra.mxu0 %v238
    %240 = vmatprep.subr.mxu0 0.0
    %v241 = vand.u32 %v100, 4294901760
    %242 = vmatpush1.msra.mxu0 %v241
    %243 = vmatprep.subr.mxu0 0.0
    %v244 = vand.u32 %v101, 4294901760
    %245 = vmatpush1.msra.mxu0 %v244
    %246 = vmatprep.subr.mxu0 0.0
    %247 = vmatpush1.msra.mxu0 0.0
    %248 = vmatprep.subr.mxu0 0.0
    %249 = vmatpush1.msra.mxu0 0.0
    %250 = vmatprep.subr.mxu0 0.0
    %251 = vmatpush1.msra.mxu0 0.0
    %252 = vmatprep.subr.mxu0 0.0
    %253 = vmatpush1.msra.mxu0 0.0
    %254 = vmatprep.subr.mxu0 0.0
    %255 = vmatpush1.msra.mxu0 0.0
    %256 = vmatprep.subr.mxu0 0.0
    %257 = vmatpush1.msra.mxu0 0.0
    %258 = vmatprep.subr.mxu0 0.0
    %259 = vmatpush1.msra.mxu0 0.0
    %260 = vmatprep.subr.mxu0 0.0
    %261 = vmatpush1.msra.mxu0 0.0
    %262 = vmatprep.subr.mxu0 0.0
    %263 = vmatpush1.msra.mxu0 0.0
    %264 = vmatprep.subr.mxu0 0.0
    %265 = vmatpush1.msra.mxu0 0.0
    %266 = vmatprep.subr.mxu0 0.0
    %267 = vmatpush1.msra.mxu0 0.0
    %268 = vmatprep.subr.mxu0 0.0
    %269 = vmatpush1.msra.mxu0 0.0
    %270 = vmatprep.subr.mxu0 0.0
    %271 = vmatpush1.msra.mxu0 0.0
    %272 = vmatprep.subr.mxu0 0.0
    %273 = vmatpush1.msra.mxu0 0.0
    %274 = vmatprep.subr.mxu0 0.0
    %275 = vmatpush1.msra.mxu0 0.0
    %276 = vmatprep.subr.mxu0 0.0
    %277 = vmatpush1.msra.mxu0 0.0
    %278 = vmatprep.subr.mxu0 0.0
    %279 = vmatpush1.msra.mxu0 0.0
    %280 = vmatprep.subr.mxu0 0.0
    %281 = vmatpush1.msra.mxu0 0.0
    %282 = vmatprep.subr.mxu0 0.0
    %283 = vmatpush1.msra.mxu0 0.0
    %284 = vmatprep.subr.mxu0 0.0
    %285 = vmatpush1.msra.mxu0 0.0
    %286 = vmatprep.subr.mxu0 0.0
    %287 = vmatpush1.msra.mxu0 0.0
    %288 = vmatprep.subr.mxu0 0.0
    %289 = vmatpush1.msra.mxu0 0.0
    %290 = vmatprep.subr.mxu0 0.0
    %291 = vmatpush1.msra.mxu0 0.0
    %292 = vmatprep.subr.mxu0 0.0
    %293 = vmatpush1.msra.mxu0 0.0
    %294 = vmatprep.subr.mxu0 0.0
    %295 = vmatpush1.msra.mxu0 0.0
    %296 = vmatprep.subr.mxu0 0.0
    %297 = vmatpush1.msra.mxu0 0.0
    %298 = vmatprep.subr.mxu0 0.0
    %299 = vmatpush1.msra.mxu0 0.0
    %300 = vmatprep.subr.mxu0 0.0
    %301 = vmatpush1.msra.mxu0 0.0
    %302 = vmatprep.mubr.f32.mxu0 0.0
    %v303 = vand.u32 %v232, 4294901760
    %v304 = vsub.f32 %v232, %v303
    %v305 = vand.u32 %v304, 4294901760
    %v306 = vsub.f32 %v304, %v305
    %v307 = vand.u32 %v306, 4294901760
    %308 = vmatmul.mubr.f32.gmra.mrb[0].mxu0 %v307
    %v309 = vpop.f32.mrb[0].mxu0
    %v310 = vadd.f32 0.0, %v309
    %v311 = vpop.f32.mrb[0].mxu0
    %312 = vdwg.mxu0
    %313 = vmatprep.subr.mxu0 0.0
    %v314 = vand.u32 %v98, 4294901760
    %v315 = vsub.f32 %v98, %v314
    %v316 = vand.u32 %v315, 4294901760
    %v317 = vsub.f32 %v315, %v316
    %v318 = vand.u32 %v317, 4294901760
    %319 = vmatpush1.msra.mxu0 %v318
    %320 = vmatprep.subr.mxu0 0.0
    %v321 = vand.u32 %v99, 4294901760
    %v322 = vsub.f32 %v99, %v321
    %v323 = vand.u32 %v322, 4294901760
    %v324 = vsub.f32 %v322, %v323
    %v325 = vand.u32 %v324, 4294901760
    %326 = vmatpush1.msra.mxu0 %v325
    %327 = vmatprep.subr.mxu0 0.0
    %v328 = vand.u32 %v100, 4294901760
    %v329 = vsub.f32 %v100, %v328
    %v330 = vand.u32 %v329, 4294901760
    %v331 = vsub.f32 %v329, %v330
    %v332 = vand.u32 %v331, 4294901760
    %333 = vmatpush1.msra.mxu0 %v332
    %334 = vmatprep.subr.mxu0 0.0
    %v335 = vand.u32 %v101, 4294901760
    %v336 = vsub.f32 %v101, %v335
    %v337 = vand.u32 %v336, 4294901760
    %v338 = vsub.f32 %v336, %v337
    %v339 = vand.u32 %v338, 4294901760
    %340 = vmatpush1.msra.mxu0 %v339
    %341 = vmatprep.subr.mxu0 0.0
    %342 = vmatpush1.msra.mxu0 0.0
    %343 = vmatprep.subr.mxu0 0.0
    %344 = vmatpush1.msra.mxu0 0.0
    %345 = vmatprep.subr.mxu0 0.0
    %346 = vmatpush1.msra.mxu0 0.0
    %347 = vmatprep.subr.mxu0 0.0
    %348 = vmatpush1.msra.mxu0 0.0
    %349 = vmatprep.subr.mxu0 0.0
    %350 = vmatpush1.msra.mxu0 0.0
    %351 = vmatprep.subr.mxu0 0.0
    %352 = vmatpush1.msra.mxu0 0.0
    %353 = vmatprep.subr.mxu0 0.0
    %354 = vmatpush1.msra.mxu0 0.0
    %355 = vmatprep.subr.mxu0 0.0
    %356 = vmatpush1.msra.mxu0 0.0
    %357 = vmatprep.subr.mxu0 0.0
    %358 = vmatpush1.msra.mxu0 0.0
    %359 = vmatprep.subr.mxu0 0.0
    %360 = vmatpush1.msra.mxu0 0.0
    %361 = vmatprep.subr.mxu0 0.0
    %362 = vmatpush1.msra.mxu0 0.0
    %363 = vmatprep.subr.mxu0 0.0
    %364 = vmatpush1.msra.mxu0 0.0
    %365 = vmatprep.subr.mxu0 0.0
    %366 = vmatpush1.msra.mxu0 0.0
    %367 = vmatprep.subr.mxu0 0.0
    %368 = vmatpush1.msra.mxu0 0.0
    %369 = vmatprep.subr.mxu0 0.0
    %370 = vmatpush1.msra.mxu0 0.0
    %371 = vmatprep.subr.mxu0 0.0
    %372 = vmatpush1.msra.mxu0 0.0
    %373 = vmatprep.subr.mxu0 0.0
    %374 = vmatpush1.msra.mxu0 0.0
    %375 = vmatprep.subr.mxu0 0.0
    %376 = vmatpush1.msra.mxu0 0.0
    %377 = vmatprep.subr.mxu0 0.0
    %378 = vmatpush1.msra.mxu0 0.0
    %379 = vmatprep.subr.mxu0 0.0
    %380 = vmatpush1.msra.mxu0 0.0
    %381 = vmatprep.subr.mxu0 0.0
    %382 = vmatpush1.msra.mxu0 0.0
    %383 = vmatprep.subr.mxu0 0.0
    %384 = vmatpush1.msra.mxu0 0.0
    %385 = vmatprep.subr.mxu0 0.0
    %386 = vmatpush1.msra.mxu0 0.0
    %387 = vmatprep.subr.mxu0 0.0
    %388 = vmatpush1.msra.mxu0 0.0
    %389 = vmatprep.subr.mxu0 0.0
    %390 = vmatpush1.msra.mxu0 0.0
    %391 = vmatprep.subr.mxu0 0.0
    %392 = vmatpush1.msra.mxu0 0.0
    %393 = vmatprep.subr.mxu0 0.0
    %394 = vmatpush1.msra.mxu0 0.0
    %395 = vmatprep.subr.mxu0 0.0
    %396 = vmatpush1.msra.mxu0 0.0
    %397 = vmatprep.mubr.f32.mxu0 0.0
    %v398 = vand.u32 %v232, 4294901760
    %399 = vmatmul.mubr.f32.gmra.mrb[0].mxu0 %v398
    %v400 = vpop.f32.mrb[0].mxu0
    %v401 = vadd.f32 %v310, %v400
    %v402 = vpop.f32.mrb[0].mxu0
    %403 = vdwg.mxu0
    %404 = vmatprep.subr.mxu0 0.0
    %v405 = vand.u32 %v98, 4294901760
    %v406 = vsub.f32 %v98, %v405
    %407 = vmatpush1.msra.mxu0 %v406
    %408 = vmatprep.subr.mxu0 0.0
    %v409 = vand.u32 %v99, 4294901760
    %v410 = vsub.f32 %v99, %v409
    %411 = vmatpush1.msra.mxu0 %v410
    %412 = vmatprep.subr.mxu0 0.0
    %v413 = vand.u32 %v100, 4294901760
    %v414 = vsub.f32 %v100, %v413
    %415 = vmatpush1.msra.mxu0 %v414
    %416 = vmatprep.subr.mxu0 0.0
    %v417 = vand.u32 %v101, 4294901760
    %v418 = vsub.f32 %v101, %v417
    %419 = vmatpush1.msra.mxu0 %v418
    %420 = vmatprep.subr.mxu0 0.0
    %421 = vmatpush1.msra.mxu0 0.0
    %422 = vmatprep.subr.mxu0 0.0
    %423 = vmatpush1.msra.mxu0 0.0
    %424 = vmatprep.subr.mxu0 0.0
    %425 = vmatpush1.msra.mxu0 0.0
    %426 = vmatprep.subr.mxu0 0.0
    %427 = vmatpush1.msra.mxu0 0.0
    %428 = vmatprep.subr.mxu0 0.0
    %429 = vmatpush1.msra.mxu0 0.0
    %430 = vmatprep.subr.mxu0 0.0
    %431 = vmatpush1.msra.mxu0 0.0
    %432 = vmatprep.subr.mxu0 0.0
    %433 = vmatpush1.msra.mxu0 0.0
    %434 = vmatprep.subr.mxu0 0.0
    %435 = vmatpush1.msra.mxu0 0.0
    %436 = vmatprep.subr.mxu0 0.0
    %437 = vmatpush1.msra.mxu0 0.0
    %438 = vmatprep.subr.mxu0 0.0
    %439 = vmatpush1.msra.mxu0 0.0
    %440 = vmatprep.subr.mxu0 0.0
    %441 = vmatpush1.msra.mxu0 0.0
    %442 = vmatprep.subr.mxu0 0.0
    %443 = vmatpush1.msra.mxu0 0.0
    %444 = vmatprep.subr.mxu0 0.0
    %445 = vmatpush1.msra.mxu0 0.0
    %446 = vmatprep.subr.mxu0 0.0
    %447 = vmatpush1.msra.mxu0 0.0
    %448 = vmatprep.subr.mxu0 0.0
    %449 = vmatpush1.msra.mxu0 0.0
    %450 = vmatprep.subr.mxu0 0.0
    %451 = vmatpush1.msra.mxu0 0.0
    %452 = vmatprep.subr.mxu0 0.0
    %453 = vmatpush1.msra.mxu0 0.0
    %454 = vmatprep.subr.mxu0 0.0
    %455 = vmatpush1.msra.mxu0 0.0
    %456 = vmatprep.subr.mxu0 0.0
    %457 = vmatpush1.msra.mxu0 0.0
    %458 = vmatprep.subr.mxu0 0.0
    %459 = vmatpush1.msra.mxu0 0.0
    %460 = vmatprep.subr.mxu0 0.0
    %461 = vmatpush1.msra.mxu0 0.0
    %462 = vmatprep.subr.mxu0 0.0
    %463 = vmatpush1.msra.mxu0 0.0
    %464 = vmatprep.subr.mxu0 0.0
    %465 = vmatpush1.msra.mxu0 0.0
    %466 = vmatprep.subr.mxu0 0.0
    %467 = vmatpush1.msra.mxu0 0.0
    %468 = vmatprep.subr.mxu0 0.0
    %469 = vmatpush1.msra.mxu0 0.0
    %470 = vmatprep.subr.mxu0 0.0
    %471 = vmatpush1.msra.mxu0 0.0
    %472 = vmatprep.subr.mxu0 0.0
    %473 = vmatpush1.msra.mxu0 0.0
    %474 = vmatprep.subr.mxu0 0.0
    %475 = vmatpush1.msra.mxu0 0.0
    %476 = vmatprep.mubr.f32.mxu0 0.0
    %v477 = vand.u32 %v232, 4294901760
    %v478 = vsub.f32 %v232, %v477
    %479 = vmatmul.mubr.f32.gmra.mrb[0].mxu0 %v478
    %v480 = vpop.f32.mrb[0].mxu0
    %v481 = vadd.f32 %v401, %v480
    %v482 = vpop.f32.mrb[0].mxu0
    %483 = vdwg.mxu0
    %484 = vmatprep.subr.mxu0 0.0
    %v485 = vand.u32 %v98, 4294901760
    %486 = vmatpush1.msra.mxu0 %v485
    %487 = vmatprep.subr.mxu0 0.0
    %v488 = vand.u32 %v99, 4294901760
    %489 = vmatpush1.msra.mxu0 %v488
    %490 = vmatprep.subr.mxu0 0.0
    %v491 = vand.u32 %v100, 4294901760
    %492 = vmatpush1.msra.mxu0 %v491
    %493 = vmatprep.subr.mxu0 0.0
    %v494 = vand.u32 %v101, 4294901760
    %495 = vmatpush1.msra.mxu0 %v494
    %496 = vmatprep.subr.mxu0 0.0
    %497 = vmatpush1.msra.mxu0 0.0
    %498 = vmatprep.subr.mxu0 0.0
    %499 = vmatpush1.msra.mxu0 0.0
    %500 = vmatprep.subr.mxu0 0.0
    %501 = vmatpush1.msra.mxu0 0.0
    %502 = vmatprep.subr.mxu0 0.0
    %503 = vmatpush1.msra.mxu0 0.0
    %504 = vmatprep.subr.mxu0 0.0
    %505 = vmatpush1.msra.mxu0 0.0
    %506 = vmatprep.subr.mxu0 0.0
    %507 = vmatpush1.msra.mxu0 0.0
    %508 = vmatprep.subr.mxu0 0.0
    %509 = vmatpush1.msra.mxu0 0.0
    %510 = vmatprep.subr.mxu0 0.0
    %511 = vmatpush1.msra.mxu0 0.0
    %512 = vmatprep.subr.mxu0 0.0
    %513 = vmatpush1.msra.mxu0 0.0
    %514 = vmatprep.subr.mxu0 0.0
    %515 = vmatpush1.msra.mxu0 0.0
    %516 = vmatprep.subr.mxu0 0.0
    %517 = vmatpush1.msra.mxu0 0.0
    %518 = vmatprep.subr.mxu0 0.0
    %519 = vmatpush1.msra.mxu0 0.0
    %520 = vmatprep.subr.mxu0 0.0
    %521 = vmatpush1.msra.mxu0 0.0
    %522 = vmatprep.subr.mxu0 0.0
    %523 = vmatpush1.msra.mxu0 0.0
    %524 = vmatprep.subr.mxu0 0.0
    %525 = vmatpush1.msra.mxu0 0.0
    %526 = vmatprep.subr.mxu0 0.0
    %527 = vmatpush1.msra.mxu0 0.0
    %528 = vmatprep.subr.mxu0 0.0
    %529 = vmatpush1.msra.mxu0 0.0
    %530 = vmatprep.subr.mxu0 0.0
    %531 = vmatpush1.msra.mxu0 0.0
    %532 = vmatprep.subr.mxu0 0.0
    %533 = vmatpush1.msra.mxu0 0.0
    %534 = vmatprep.subr.mxu0 0.0
    %535 = vmatpush1.msra.mxu0 0.0
    %536 = vmatprep.subr.mxu0 0.0
    %537 = vmatpush1.msra.mxu0 0.0
    %538 = vmatprep.subr.mxu0 0.0
    %539 = vmatpush1.msra.mxu0 0.0
    %540 = vmatprep.subr.mxu0 0.0
    %541 = vmatpush1.msra.mxu0 0.0
    %542 = vmatprep.subr.mxu0 0.0
    %543 = vmatpush1.msra.mxu0 0.0
    %544 = vmatprep.subr.mxu0 0.0
    %545 = vmatpush1.msra.mxu0 0.0
    %546 = vmatprep.subr.mxu0 0.0
    %547 = vmatpush1.msra.mxu0 0.0
    %548 = vmatprep.subr.mxu0 0.0
    %549 = vmatpush1.msra.mxu0 0.0
    %550 = vmatprep.subr.mxu0 0.0
    %551 = vmatpush1.msra.mxu0 0.0
    %552 = vmatprep.mubr.f32.mxu0 0.0
    %v553 = vand.u32 %v232, 4294901760
    %v554 = vsub.f32 %v232, %v553
    %v555 = vand.u32 %v554, 4294901760
    %556 = vmatmul.mubr.f32.gmra.mrb[0].mxu0 %v555
    %v557 = vpop.f32.mrb[0].mxu0
    %v558 = vadd.f32 %v481, %v557
    %v559 = vpop.f32.mrb[0].mxu0
    %560 = vdwg.mxu0
    %561 = vmatprep.subr.mxu0 0.0
    %v562 = vand.u32 %v98, 4294901760
    %v563 = vsub.f32 %v98, %v562
    %v564 = vand.u32 %v563, 4294901760
    %565 = vmatpush1.msra.mxu0 %v564
    %566 = vmatprep.subr.mxu0 0.0
    %v567 = vand.u32 %v99, 4294901760
    %v568 = vsub.f32 %v99, %v567
    %v569 = vand.u32 %v568, 4294901760
    %570 = vmatpush1.msra.mxu0 %v569
    %571 = vmatprep.subr.mxu0 0.0
    %v572 = vand.u32 %v100, 4294901760
    %v573 = vsub.f32 %v100, %v572
    %v574 = vand.u32 %v573, 4294901760
    %575 = vmatpush1.msra.mxu0 %v574
    %576 = vmatprep.subr.mxu0 0.0
    %v577 = vand.u32 %v101, 4294901760
    %v578 = vsub.f32 %v101, %v577
    %v579 = vand.u32 %v578, 4294901760
    %580 = vmatpush1.msra.mxu0 %v579
    %581 = vmatprep.subr.mxu0 0.0
    %582 = vmatpush1.msra.mxu0 0.0
    %583 = vmatprep.subr.mxu0 0.0
    %584 = vmatpush1.msra.mxu0 0.0
    %585 = vmatprep.subr.mxu0 0.0
    %586 = vmatpush1.msra.mxu0 0.0
    %587 = vmatprep.subr.mxu0 0.0
    %588 = vmatpush1.msra.mxu0 0.0
    %589 = vmatprep.subr.mxu0 0.0
    %590 = vmatpush1.msra.mxu0 0.0
    %591 = vmatprep.subr.mxu0 0.0
    %592 = vmatpush1.msra.mxu0 0.0
    %593 = vmatprep.subr.mxu0 0.0
    %594 = vmatpush1.msra.mxu0 0.0
    %595 = vmatprep.subr.mxu0 0.0
    %596 = vmatpush1.msra.mxu0 0.0
    %597 = vmatprep.subr.mxu0 0.0
    %598 = vmatpush1.msra.mxu0 0.0
    %599 = vmatprep.subr.mxu0 0.0
    %600 = vmatpush1.msra.mxu0 0.0
    %601 = vmatprep.subr.mxu0 0.0
    %602 = vmatpush1.msra.mxu0 0.0
    %603 = vmatprep.subr.mxu0 0.0
    %604 = vmatpush1.msra.mxu0 0.0
    %605 = vmatprep.subr.mxu0 0.0
    %606 = vmatpush1.msra.mxu0 0.0
    %607 = vmatprep.subr.mxu0 0.0
    %608 = vmatpush1.msra.mxu0 0.0
    %609 = vmatprep.subr.mxu0 0.0
    %610 = vmatpush1.msra.mxu0 0.0
    %611 = vmatprep.subr.mxu0 0.0
    %612 = vmatpush1.msra.mxu0 0.0
    %613 = vmatprep.subr.mxu0 0.0
    %614 = vmatpush1.msra.mxu0 0.0
    %615 = vmatprep.subr.mxu0 0.0
    %616 = vmatpush1.msra.mxu0 0.0
    %617 = vmatprep.subr.mxu0 0.0
    %618 = vmatpush1.msra.mxu0 0.0
    %619 = vmatprep.subr.mxu0 0.0
    %620 = vmatpush1.msra.mxu0 0.0
    %621 = vmatprep.subr.mxu0 0.0
    %622 = vmatpush1.msra.mxu0 0.0
    %623 = vmatprep.subr.mxu0 0.0
    %624 = vmatpush1.msra.mxu0 0.0
    %625 = vmatprep.subr.mxu0 0.0
    %626 = vmatpush1.msra.mxu0 0.0
    %627 = vmatprep.subr.mxu0 0.0
    %628 = vmatpush1.msra.mxu0 0.0
    %629 = vmatprep.subr.mxu0 0.0
    %630 = vmatpush1.msra.mxu0 0.0
    %631 = vmatprep.subr.mxu0 0.0
    %632 = vmatpush1.msra.mxu0 0.0
    %633 = vmatprep.subr.mxu0 0.0
    %634 = vmatpush1.msra.mxu0 0.0
    %635 = vmatprep.subr.mxu0 0.0
    %636 = vmatpush1.msra.mxu0 0.0
    %637 = vmatprep.mubr.f32.mxu0 0.0
    %v638 = vand.u32 %v232, 4294901760
    %639 = vmatmul.mubr.f32.gmra.mrb[0].mxu0 %v638
    %v640 = vpop.f32.mrb[0].mxu0
    %v641 = vadd.f32 %v558, %v640
    %v642 = vpop.f32.mrb[0].mxu0
    %643 = vdwg.mxu0
    %644 = vmatprep.subr.mxu0 0.0
    %v645 = vand.u32 %v98, 4294901760
    %646 = vmatpush1.msra.mxu0 %v645
    %647 = vmatprep.subr.mxu0 0.0
    %v648 = vand.u32 %v99, 4294901760
    %649 = vmatpush1.msra.mxu0 %v648
    %650 = vmatprep.subr.mxu0 0.0
    %v651 = vand.u32 %v100, 4294901760
    %652 = vmatpush1.msra.mxu0 %v651
    %653 = vmatprep.subr.mxu0 0.0
    %v654 = vand.u32 %v101, 4294901760
    %655 = vmatpush1.msra.mxu0 %v654
    %656 = vmatprep.subr.mxu0 0.0
    %657 = vmatpush1.msra.mxu0 0.0
    %658 = vmatprep.subr.mxu0 0.0
    %659 = vmatpush1.msra.mxu0 0.0
    %660 = vmatprep.subr.mxu0 0.0
    %661 = vmatpush1.msra.mxu0 0.0
    %662 = vmatprep.subr.mxu0 0.0
    %663 = vmatpush1.msra.mxu0 0.0
    %664 = vmatprep.subr.mxu0 0.0
    %665 = vmatpush1.msra.mxu0 0.0
    %666 = vmatprep.subr.mxu0 0.0
    %667 = vmatpush1.msra.mxu0 0.0
    %668 = vmatprep.subr.mxu0 0.0
    %669 = vmatpush1.msra.mxu0 0.0
    %670 = vmatprep.subr.mxu0 0.0
    %671 = vmatpush1.msra.mxu0 0.0
    %672 = vmatprep.subr.mxu0 0.0
    %673 = vmatpush1.msra.mxu0 0.0
    %674 = vmatprep.subr.mxu0 0.0
    %675 = vmatpush1.msra.mxu0 0.0
    %676 = vmatprep.subr.mxu0 0.0
    %677 = vmatpush1.msra.mxu0 0.0
    %678 = vmatprep.subr.mxu0 0.0
    %679 = vmatpush1.msra.mxu0 0.0
    %680 = vmatprep.subr.mxu0 0.0
    %681 = vmatpush1.msra.mxu0 0.0
    %682 = vmatprep.subr.mxu0 0.0
    %683 = vmatpush1.msra.mxu0 0.0
    %684 = vmatprep.subr.mxu0 0.0
    %685 = vmatpush1.msra.mxu0 0.0
    %686 = vmatprep.subr.mxu0 0.0
    %687 = vmatpush1.msra.mxu0 0.0
    %688 = vmatprep.subr.mxu0 0.0
    %689 = vmatpush1.msra.mxu0 0.0
    %690 = vmatprep.subr.mxu0 0.0
    %691 = vmatpush1.msra.mxu0 0.0
    %692 = vmatprep.subr.mxu0 0.0
    %693 = vmatpush1.msra.mxu0 0.0
    %694 = vmatprep.subr.mxu0 0.0
    %695 = vmatpush1.msra.mxu0 0.0
    %696 = vmatprep.subr.mxu0 0.0
    %697 = vmatpush1.msra.mxu0 0.0
    %698 = vmatprep.subr.mxu0 0.0
    %699 = vmatpush1.msra.mxu0 0.0
    %700 = vmatprep.subr.mxu0 0.0
    %701 = vmatpush1.msra.mxu0 0.0
    %702 = vmatprep.subr.mxu0 0.0
    %703 = vmatpush1.msra.mxu0 0.0
    %704 = vmatprep.subr.mxu0 0.0
    %705 = vmatpush1.msra.mxu0 0.0
    %706 = vmatprep.subr.mxu0 0.0
    %707 = vmatpush1.msra.mxu0 0.0
    %708 = vmatprep.subr.mxu0 0.0
    %709 = vmatpush1.msra.mxu0 0.0
    %710 = vmatprep.subr.mxu0 0.0
    %711 = vmatpush1.msra.mxu0 0.0
    %712 = vmatprep.mubr.f32.mxu0 0.0
    %v713 = vand.u32 %v232, 4294901760
    %714 = vmatmul.mubr.f32.gmra.mrb[0].mxu0 %v713
    %v715 = vpop.f32.mrb[0].mxu0
    %v716 = vadd.f32 %v641, %v715
    %v717 = vpop.f32.mrb[0].mxu0
    %718 = vdwg.mxu0
    %v719 = vadd.f32 %v117, %v716
    %v720 = vxor.u32 %v719, 2147483648
    %v721 = vmul.f32 %v720, 1.442695
    %v722 = vpow.pop %v721
    %v723 = vadd.f32 %v722, 1.0
    %v724 = vrcp.pop %v723
    %v725 = vmul.f32 1.0, %v724
    %v726 = vtanh.pop %v719
    %v727 = vmul.f32 %v725, 0.0
    %729 = vrot.lane.b32.xlu0 %v726, 64
    %v730 = vpop.permute.xlu0 %729
    %v732 = vmul.f32 %v725, %v730
    %734 = vrot.lane.b32.xlu0 %v732, 32
    %v735 = vpop.permute.xlu0 %734
    %v737 = vadd.f32 %v727, %v735
    %v738 = vtanh.pop %v737
    %740 = vrot.lane.b32.xlu0 %v738, 64
    %v741 = vpop.permute.xlu0 %740
    %v743 = vmul.f32 %v725, %v741
    %745 = vrot.lane.b32.xlu0 %v743, 32
    %v746 = vpop.permute.xlu0 %745
    %vm748 = vcmask 253952
    %749 = vst.msk [vmem:[#allocation2] sm:$0x1] %vm748, %v746
    %v750 = vsel %vm230, %v746, 0
    %752 = vmatprep.subr.mxu0 0.0
    %v753 = vand.u32 %v98, 4294901760
    %754 = vmatpush1.msra.mxu0 %v753
    %755 = vmatprep.subr.mxu0 0.0
    %v756 = vand.u32 %v99, 4294901760
    %757 = vmatpush1.msra.mxu0 %v756
    %758 = vmatprep.subr.mxu0 0.0
    %v759 = vand.u32 %v100, 4294901760
    %760 = vmatpush1.msra.mxu0 %v759
    %761 = vmatprep.subr.mxu0 0.0
    %v762 = vand.u32 %v101, 4294901760
    %763 = vmatpush1.msra.mxu0 %v762
    %764 = vmatprep.subr.mxu0 0.0
    %765 = vmatpush1.msra.mxu0 0.0
    %766 = vmatprep.subr.mxu0 0.0
    %767 = vmatpush1.msra.mxu0 0.0
    %768 = vmatprep.subr.mxu0 0.0
    %769 = vmatpush1.msra.mxu0 0.0
    %770 = vmatprep.subr.mxu0 0.0
    %771 = vmatpush1.msra.mxu0 0.0
    %772 = vmatprep.subr.mxu0 0.0
    %773 = vmatpush1.msra.mxu0 0.0
    %774 = vmatprep.subr.mxu0 0.0
    %775 = vmatpush1.msra.mxu0 0.0
    %776 = vmatprep.subr.mxu0 0.0
    %777 = vmatpush1.msra.mxu0 0.0
    %778 = vmatprep.subr.mxu0 0.0
    %779 = vmatpush1.msra.mxu0 0.0
    %780 = vmatprep.subr.mxu0 0.0
    %781 = vmatpush1.msra.mxu0 0.0
    %782 = vmatprep.subr.mxu0 0.0
    %783 = vmatpush1.msra.mxu0 0.0
    %784 = vmatprep.subr.mxu0 0.0
    %785 = vmatpush1.msra.mxu0 0.0
    %786 = vmatprep.subr.mxu0 0.0
    %787 = vmatpush1.msra.mxu0 0.0
    %788 = vmatprep.subr.mxu0 0.0
    %789 = vmatpush1.msra.mxu0 0.0
    %790 = vmatprep.subr.mxu0 0.0
    %791 = vmatpush1.msra.mxu0 0.0
    %792 = vmatprep.subr.mxu0 0.0
    %793 = vmatpush1.msra.mxu0 0.0
    %794 = vmatprep.subr.mxu0 0.0
    %795 = vmatpush1.msra.mxu0 0.0
    %796 = vmatprep.subr.mxu0 0.0
    %797 = vmatpush1.msra.mxu0 0.0
    %798 = vmatprep.subr.mxu0 0.0
    %799 = vmatpush1.msra.mxu0 0.0
    %800 = vmatprep.subr.mxu0 0.0
    %801 = vmatpush1.msra.mxu0 0.0
    %802 = vmatprep.subr.mxu0 0.0
    %803 = vmatpush1.msra.mxu0 0.0
    %804 = vmatprep.subr.mxu0 0.0
    %805 = vmatpush1.msra.mxu0 0.0
    %806 = vmatprep.subr.mxu0 0.0
    %807 = vmatpush1.msra.mxu0 0.0
    %808 = vmatprep.subr.mxu0 0.0
    %809 = vmatpush1.msra.mxu0 0.0
    %810 = vmatprep.subr.mxu0 0.0
    %811 = vmatpush1.msra.mxu0 0.0
    %812 = vmatprep.subr.mxu0 0.0
    %813 = vmatpush1.msra.mxu0 0.0
    %814 = vmatprep.subr.mxu0 0.0
    %815 = vmatpush1.msra.mxu0 0.0
    %816 = vmatprep.subr.mxu0 0.0
    %817 = vmatpush1.msra.mxu0 0.0
    %818 = vmatprep.subr.mxu0 0.0
    %819 = vmatpush1.msra.mxu0 0.0
    %820 = vmatprep.mubr.f32.mxu0 0.0
    %v821 = vand.u32 %v750, 4294901760
    %v822 = vsub.f32 %v750, %v821
    %v823 = vand.u32 %v822, 4294901760
    %v824 = vsub.f32 %v822, %v823
    %v825 = vand.u32 %v824, 4294901760
    %826 = vmatmul.mubr.f32.gmra.mrb[0].mxu0 %v825
    %v827 = vpop.f32.mrb[0].mxu0
    %v828 = vadd.f32 0.0, %v827
    %v829 = vpop.f32.mrb[0].mxu0
    %830 = vdwg.mxu0
    %831 = vmatprep.subr.mxu0 0.0
    %v832 = vand.u32 %v98, 4294901760
    %v833 = vsub.f32 %v98, %v832
    %v834 = vand.u32 %v833, 4294901760
    %v835 = vsub.f32 %v833, %v834
    %v836 = vand.u32 %v835, 4294901760
    %837 = vmatpush1.msra.mxu0 %v836
    %838 = vmatprep.subr.mxu0 0.0
    %v839 = vand.u32 %v99, 4294901760
    %v840 = vsub.f32 %v99, %v839
    %v841 = vand.u32 %v840, 4294901760
    %v842 = vsub.f32 %v840, %v841
    %v843 = vand.u32 %v842, 4294901760
    %844 = vmatpush1.msra.mxu0 %v843
    %845 = vmatprep.subr.mxu0 0.0
    %v846 = vand.u32 %v100, 4294901760
    %v847 = vsub.f32 %v100, %v846
    %v848 = vand.u32 %v847, 4294901760
    %v849 = vsub.f32 %v847, %v848
    %v850 = vand.u32 %v849, 4294901760
    %851 = vmatpush1.msra.mxu0 %v850
    %852 = vmatprep.subr.mxu0 0.0
    %v853 = vand.u32 %v101, 4294901760
    %v854 = vsub.f32 %v101, %v853
    %v855 = vand.u32 %v854, 4294901760
    %v856 = vsub.f32 %v854, %v855
    %v857 = vand.u32 %v856, 4294901760
    %858 = vmatpush1.msra.mxu0 %v857
    %859 = vmatprep.subr.mxu0 0.0
    %860 = vmatpush1.msra.mxu0 0.0
    %861 = vmatprep.subr.mxu0 0.0
    %862 = vmatpush1.msra.mxu0 0.0
    %863 = vmatprep.subr.mxu0 0.0
    %864 = vmatpush1.msra.mxu0 0.0
    %865 = vmatprep.subr.mxu0 0.0
    %866 = vmatpush1.msra.mxu0 0.0
    %867 = vmatprep.subr.mxu0 0.0
    %868 = vmatpush1.msra.mxu0 0.0
    %869 = vmatprep.subr.mxu0 0.0
    %870 = vmatpush1.msra.mxu0 0.0
    %871 = vmatprep.subr.mxu0 0.0
    %872 = vmatpush1.msra.mxu0 0.0
    %873 = vmatprep.subr.mxu0 0.0
    %874 = vmatpush1.msra.mxu0 0.0
    %875 = vmatprep.subr.mxu0 0.0
    %876 = vmatpush1.msra.mxu0 0.0
    %877 = vmatprep.subr.mxu0 0.0
    %878 = vmatpush1.msra.mxu0 0.0
    %879 = vmatprep.subr.mxu0 0.0
    %880 = vmatpush1.msra.mxu0 0.0
    %881 = vmatprep.subr.mxu0 0.0
    %882 = vmatpush1.msra.mxu0 0.0
    %883 = vmatprep.subr.mxu0 0.0
    %884 = vmatpush1.msra.mxu0 0.0
    %885 = vmatprep.subr.mxu0 0.0
    %886 = vmatpush1.msra.mxu0 0.0
    %887 = vmatprep.subr.mxu0 0.0
    %888 = vmatpush1.msra.mxu0 0.0
    %889 = vmatprep.subr.mxu0 0.0
    %890 = vmatpush1.msra.mxu0 0.0
    %891 = vmatprep.subr.mxu0 0.0
    %892 = vmatpush1.msra.mxu0 0.0
    %893 = vmatprep.subr.mxu0 0.0
    %894 = vmatpush1.msra.mxu0 0.0
    %895 = vmatprep.subr.mxu0 0.0
    %896 = vmatpush1.msra.mxu0 0.0
    %897 = vmatprep.subr.mxu0 0.0
    %898 = vmatpush1.msra.mxu0 0.0
    %899 = vmatprep.subr.mxu0 0.0
    %900 = vmatpush1.msra.mxu0 0.0
    %901 = vmatprep.subr.mxu0 0.0
    %902 = vmatpush1.msra.mxu0 0.0
    %903 = vmatprep.subr.mxu0 0.0
    %904 = vmatpush1.msra.mxu0 0.0
    %905 = vmatprep.subr.mxu0 0.0
    %906 = vmatpush1.msra.mxu0 0.0
    %907 = vmatprep.subr.mxu0 0.0
    %908 = vmatpush1.msra.mxu0 0.0
    %909 = vmatprep.subr.mxu0 0.0
    %910 = vmatpush1.msra.mxu0 0.0
    %911 = vmatprep.subr.mxu0 0.0
    %912 = vmatpush1.msra.mxu0 0.0
    %913 = vmatprep.subr.mxu0 0.0
    %914 = vmatpush1.msra.mxu0 0.0
    %915 = vmatprep.mubr.f32.mxu0 0.0
    %v916 = vand.u32 %v750, 4294901760
    %917 = vmatmul.mubr.f32.gmra.mrb[0].mxu0 %v916
    %v918 = vpop.f32.mrb[0].mxu0
    %v919 = vadd.f32 %v828, %v918
    %v920 = vpop.f32.mrb[0].mxu0
    %921 = vdwg.mxu0
    %922 = vmatprep.subr.mxu0 0.0
    %v923 = vand.u32 %v98, 4294901760
    %v924 = vsub.f32 %v98, %v923
    %925 = vmatpush1.msra.mxu0 %v924
    %926 = vmatprep.subr.mxu0 0.0
    %v927 = vand.u32 %v99, 4294901760
    %v928 = vsub.f32 %v99, %v927
    %929 = vmatpush1.msra.mxu0 %v928
    %930 = vmatprep.subr.mxu0 0.0
    %v931 = vand.u32 %v100, 4294901760
    %v932 = vsub.f32 %v100, %v931
    %933 = vmatpush1.msra.mxu0 %v932
    %934 = vmatprep.subr.mxu0 0.0
    %v935 = vand.u32 %v101, 4294901760
    %v936 = vsub.f32 %v101, %v935
    %937 = vmatpush1.msra.mxu0 %v936
    %938 = vmatprep.subr.mxu0 0.0
    %939 = vmatpush1.msra.mxu0 0.0
    %940 = vmatprep.subr.mxu0 0.0
    %941 = vmatpush1.msra.mxu0 0.0
    %942 = vmatprep.subr.mxu0 0.0
    %943 = vmatpush1.msra.mxu0 0.0
    %944 = vmatprep.subr.mxu0 0.0
    %945 = vmatpush1.msra.mxu0 0.0
    %946 = vmatprep.subr.mxu0 0.0
    %947 = vmatpush1.msra.mxu0 0.0
    %948 = vmatprep.subr.mxu0 0.0
    %949 = vmatpush1.msra.mxu0 0.0
    %950 = vmatprep.subr.mxu0 0.0
    %951 = vmatpush1.msra.mxu0 0.0
    %952 = vmatprep.subr.mxu0 0.0
    %953 = vmatpush1.msra.mxu0 0.0
    %954 = vmatprep.subr.mxu0 0.0
    %955 = vmatpush1.msra.mxu0 0.0
    %956 = vmatprep.subr.mxu0 0.0
    %957 = vmatpush1.msra.mxu0 0.0
    %958 = vmatprep.subr.mxu0 0.0
    %959 = vmatpush1.msra.mxu0 0.0
    %960 = vmatprep.subr.mxu0 0.0
    %961 = vmatpush1.msra.mxu0 0.0
    %962 = vmatprep.subr.mxu0 0.0
    %963 = vmatpush1.msra.mxu0 0.0
    %964 = vmatprep.subr.mxu0 0.0
    %965 = vmatpush1.msra.mxu0 0.0
    %966 = vmatprep.subr.mxu0 0.0
    %967 = vmatpush1.msra.mxu0 0.0
    %968 = vmatprep.subr.mxu0 0.0
    %969 = vmatpush1.msra.mxu0 0.0
    %970 = vmatprep.subr.mxu0 0.0
    %971 = vmatpush1.msra.mxu0 0.0
    %972 = vmatprep.subr.mxu0 0.0
    %973 = vmatpush1.msra.mxu0 0.0
    %974 = vmatprep.subr.mxu0 0.0
    %975 = vmatpush1.msra.mxu0 0.0
    %976 = vmatprep.subr.mxu0 0.0
    %977 = vmatpush1.msra.mxu0 0.0
    %978 = vmatprep.subr.mxu0 0.0
    %979 = vmatpush1.msra.mxu0 0.0
    %980 = vmatprep.subr.mxu0 0.0
    %981 = vmatpush1.msra.mxu0 0.0
    %982 = vmatprep.subr.mxu0 0.0
    %983 = vmatpush1.msra.mxu0 0.0
    %984 = vmatprep.subr.mxu0 0.0
    %985 = vmatpush1.msra.mxu0 0.0
    %986 = vmatprep.subr.mxu0 0.0
    %987 = vmatpush1.msra.mxu0 0.0
    %988 = vmatprep.subr.mxu0 0.0
    %989 = vmatpush1.msra.mxu0 0.0
    %990 = vmatprep.subr.mxu0 0.0
    %991 = vmatpush1.msra.mxu0 0.0
    %992 = vmatprep.subr.mxu0 0.0
    %993 = vmatpush1.msra.mxu0 0.0
    %994 = vmatprep.mubr.f32.mxu0 0.0
    %v995 = vand.u32 %v750, 4294901760
    %v996 = vsub.f32 %v750, %v995
    %997 = vmatmul.mubr.f32.gmra.mrb[0].mxu0 %v996
    %v998 = vpop.f32.mrb[0].mxu0
    %v999 = vadd.f32 %v919, %v998
    %v1000 = vpop.f32.mrb[0].mxu0
    %1001 = vdwg.mxu0
    %1002 = vmatprep.subr.mxu0 0.0
    %v1003 = vand.u32 %v98, 4294901760
    %1004 = vmatpush1.msra.mxu0 %v1003
    %1005 = vmatprep.subr.mxu0 0.0
    %v1006 = vand.u32 %v99, 4294901760
    %1007 = vmatpush1.msra.mxu0 %v1006
    %1008 = vmatprep.subr.mxu0 0.0
    %v1009 = vand.u32 %v100, 4294901760
    %1010 = vmatpush1.msra.mxu0 %v1009
    %1011 = vmatprep.subr.mxu0 0.0
    %v1012 = vand.u32 %v101, 4294901760
    %1013 = vmatpush1.msra.mxu0 %v1012
    %1014 = vmatprep.subr.mxu0 0.0
    %1015 = vmatpush1.msra.mxu0 0.0
    %1016 = vmatprep.subr.mxu0 0.0
    %1017 = vmatpush1.msra.mxu0 0.0
    %1018 = vmatprep.subr.mxu0 0.0
    %1019 = vmatpush1.msra.mxu0 0.0
    %1020 = vmatprep.subr.mxu0 0.0
    %1021 = vmatpush1.msra.mxu0 0.0
    %1022 = vmatprep.subr.mxu0 0.0
    %1023 = vmatpush1.msra.mxu0 0.0
    %1024 = vmatprep.subr.mxu0 0.0
    %1025 = vmatpush1.msra.mxu0 0.0
    %1026 = vmatprep.subr.mxu0 0.0
    %1027 = vmatpush1.msra.mxu0 0.0
    %1028 = vmatprep.subr.mxu0 0.0
    %1029 = vmatpush1.msra.mxu0 0.0
    %1030 = vmatprep.subr.mxu0 0.0
    %1031 = vmatpush1.msra.mxu0 0.0
    %1032 = vmatprep.subr.mxu0 0.0
    %1033 = vmatpush1.msra.mxu0 0.0
    %1034 = vmatprep.subr.mxu0 0.0
    %1035 = vmatpush1.msra.mxu0 0.0
    %1036 = vmatprep.subr.mxu0 0.0
    %1037 = vmatpush1.msra.mxu0 0.0
    %1038 = vmatprep.subr.mxu0 0.0
    %1039 = vmatpush1.msra.mxu0 0.0
    %1040 = vmatprep.subr.mxu0 0.0
    %1041 = vmatpush1.msra.mxu0 0.0
    %1042 = vmatprep.subr.mxu0 0.0
    %1043 = vmatpush1.msra.mxu0 0.0
    %1044 = vmatprep.subr.mxu0 0.0
    %1045 = vmatpush1.msra.mxu0 0.0
    %1046 = vmatprep.subr.mxu0 0.0
    %1047 = vmatpush1.msra.mxu0 0.0
    %1048 = vmatprep.subr.mxu0 0.0
    %1049 = vmatpush1.msra.mxu0 0.0
    %1050 = vmatprep.subr.mxu0 0.0
    %1051 = vmatpush1.msra.mxu0 0.0
    %1052 = vmatprep.subr.mxu0 0.0
    %1053 = vmatpush1.msra.mxu0 0.0
    %1054 = vmatprep.subr.mxu0 0.0
    %1055 = vmatpush1.msra.mxu0 0.0
    %1056 = vmatprep.subr.mxu0 0.0
    %1057 = vmatpush1.msra.mxu0 0.0
    %1058 = vmatprep.subr.mxu0 0.0
    %1059 = vmatpush1.msra.mxu0 0.0
    %1060 = vmatprep.subr.mxu0 0.0
    %1061 = vmatpush1.msra.mxu0 0.0
    %1062 = vmatprep.subr.mxu0 0.0
    %1063 = vmatpush1.msra.mxu0 0.0
    %1064 = vmatprep.subr.mxu0 0.0
    %1065 = vmatpush1.msra.mxu0 0.0
    %1066 = vmatprep.subr.mxu0 0.0
    %1067 = vmatpush1.msra.mxu0 0.0
    %1068 = vmatprep.subr.mxu0 0.0
    %1069 = vmatpush1.msra.mxu0 0.0
    %1070 = vmatprep.mubr.f32.mxu0 0.0
    %v1071 = vand.u32 %v750, 4294901760
    %v1072 = vsub.f32 %v750, %v1071
    %v1073 = vand.u32 %v1072, 4294901760
    %1074 = vmatmul.mubr.f32.gmra.mrb[0].mxu0 %v1073
    %v1075 = vpop.f32.mrb[0].mxu0
    %v1076 = vadd.f32 %v999, %v1075
    %v1077 = vpop.f32.mrb[0].mxu0
    %1078 = vdwg.mxu0
    %1079 = vmatprep.subr.mxu0 0.0
    %v1080 = vand.u32 %v98, 4294901760
    %v1081 = vsub.f32 %v98, %v1080
    %v1082 = vand.u32 %v1081, 4294901760
    %1083 = vmatpush1.msra.mxu0 %v1082
    %1084 = vmatprep.subr.mxu0 0.0
    %v1085 = vand.u32 %v99, 4294901760
    %v1086 = vsub.f32 %v99, %v1085
    %v1087 = vand.u32 %v1086, 4294901760
    %1088 = vmatpush1.msra.mxu0 %v1087
    %1089 = vmatprep.subr.mxu0 0.0
    %v1090 = vand.u32 %v100, 4294901760
    %v1091 = vsub.f32 %v100, %v1090
    %v1092 = vand.u32 %v1091, 4294901760
    %1093 = vmatpush1.msra.mxu0 %v1092
    %1094 = vmatprep.subr.mxu0 0.0
    %v1095 = vand.u32 %v101, 4294901760
    %v1096 = vsub.f32 %v101, %v1095
    %v1097 = vand.u32 %v1096, 4294901760
    %1098 = vmatpush1.msra.mxu0 %v1097
    %1099 = vmatprep.subr.mxu0 0.0
    %1100 = vmatpush1.msra.mxu0 0.0
    %1101 = vmatprep.subr.mxu0 0.0
    %1102 = vmatpush1.msra.mxu0 0.0
    %1103 = vmatprep.subr.mxu0 0.0
    %1104 = vmatpush1.msra.mxu0 0.0
    %1105 = vmatprep.subr.mxu0 0.0
    %1106 = vmatpush1.msra.mxu0 0.0
    %1107 = vmatprep.subr.mxu0 0.0
    %1108 = vmatpush1.msra.mxu0 0.0
    %1109 = vmatprep.subr.mxu0 0.0
    %1110 = vmatpush1.msra.mxu0 0.0
    %1111 = vmatprep.subr.mxu0 0.0
    %1112 = vmatpush1.msra.mxu0 0.0
    %1113 = vmatprep.subr.mxu0 0.0
    %1114 = vmatpush1.msra.mxu0 0.0
    %1115 = vmatprep.subr.mxu0 0.0
    %1116 = vmatpush1.msra.mxu0 0.0
    %1117 = vmatprep.subr.mxu0 0.0
    %1118 = vmatpush1.msra.mxu0 0.0
    %1119 = vmatprep.subr.mxu0 0.0
    %1120 = vmatpush1.msra.mxu0 0.0
    %1121 = vmatprep.subr.mxu0 0.0
    %1122 = vmatpush1.msra.mxu0 0.0
    %1123 = vmatprep.subr.mxu0 0.0
    %1124 = vmatpush1.msra.mxu0 0.0
    %1125 = vmatprep.subr.mxu0 0.0
    %1126 = vmatpush1.msra.mxu0 0.0
    %1127 = vmatprep.subr.mxu0 0.0
    %1128 = vmatpush1.msra.mxu0 0.0
    %1129 = vmatprep.subr.mxu0 0.0
    %1130 = vmatpush1.msra.mxu0 0.0
    %1131 = vmatprep.subr.mxu0 0.0
    %1132 = vmatpush1.msra.mxu0 0.0
    %1133 = vmatprep.subr.mxu0 0.0
    %1134 = vmatpush1.msra.mxu0 0.0
    %1135 = vmatprep.subr.mxu0 0.0
    %1136 = vmatpush1.msra.mxu0 0.0
    %1137 = vmatprep.subr.mxu0 0.0
    %1138 = vmatpush1.msra.mxu0 0.0
    %1139 = vmatprep.subr.mxu0 0.0
    %1140 = vmatpush1.msra.mxu0 0.0
    %1141 = vmatprep.subr.mxu0 0.0
    %1142 = vmatpush1.msra.mxu0 0.0
    %1143 = vmatprep.subr.mxu0 0.0
    %1144 = vmatpush1.msra.mxu0 0.0
    %1145 = vmatprep.subr.mxu0 0.0
    %1146 = vmatpush1.msra.mxu0 0.0
    %1147 = vmatprep.subr.mxu0 0.0
    %1148 = vmatpush1.msra.mxu0 0.0
    %1149 = vmatprep.subr.mxu0 0.0
    %1150 = vmatpush1.msra.mxu0 0.0
    %1151 = vmatprep.subr.mxu0 0.0
    %1152 = vmatpush1.msra.mxu0 0.0
    %1153 = vmatprep.subr.mxu0 0.0
    %1154 = vmatpush1.msra.mxu0 0.0
    %1155 = vmatprep.mubr.f32.mxu0 0.0
    %v1156 = vand.u32 %v750, 4294901760
    %1157 = vmatmul.mubr.f32.gmra.mrb[0].mxu0 %v1156
    %v1158 = vpop.f32.mrb[0].mxu0
    %v1159 = vadd.f32 %v1076, %v1158
    %v1160 = vpop.f32.mrb[0].mxu0
    %1161 = vdwg.mxu0
    %1162 = vmatprep.subr.mxu0 0.0
    %v1163 = vand.u32 %v98, 4294901760
    %1164 = vmatpush1.msra.mxu0 %v1163
    %1165 = vmatprep.subr.mxu0 0.0
    %v1166 = vand.u32 %v99, 4294901760
    %1167 = vmatpush1.msra.mxu0 %v1166
    %1168 = vmatprep.subr.mxu0 0.0
    %v1169 = vand.u32 %v100, 4294901760
    %1170 = vmatpush1.msra.mxu0 %v1169
    %1171 = vmatprep.subr.mxu0 0.0
    %v1172 = vand.u32 %v101, 4294901760
    %1173 = vmatpush1.msra.mxu0 %v1172
    %1174 = vmatprep.subr.mxu0 0.0
    %1175 = vmatpush1.msra.mxu0 0.0
    %1176 = vmatprep.subr.mxu0 0.0
    %1177 = vmatpush1.msra.mxu0 0.0
    %1178 = vmatprep.subr.mxu0 0.0
    %1179 = vmatpush1.msra.mxu0 0.0
    %1180 = vmatprep.subr.mxu0 0.0
    %1181 = vmatpush1.msra.mxu0 0.0
    %1182 = vmatprep.subr.mxu0 0.0
    %1183 = vmatpush1.msra.mxu0 0.0
    %1184 = vmatprep.subr.mxu0 0.0
    %1185 = vmatpush1.msra.mxu0 0.0
    %1186 = vmatprep.subr.mxu0 0.0
    %1187 = vmatpush1.msra.mxu0 0.0
    %1188 = vmatprep.subr.mxu0 0.0
    %1189 = vmatpush1.msra.mxu0 0.0
    %1190 = vmatprep.subr.mxu0 0.0
    %1191 = vmatpush1.msra.mxu0 0.0
    %1192 = vmatprep.subr.mxu0 0.0
    %1193 = vmatpush1.msra.mxu0 0.0
    %1194 = vmatprep.subr.mxu0 0.0
    %1195 = vmatpush1.msra.mxu0 0.0
    %1196 = vmatprep.subr.mxu0 0.0
    %1197 = vmatpush1.msra.mxu0 0.0
    %1198 = vmatprep.subr.mxu0 0.0
    %1199 = vmatpush1.msra.mxu0 0.0
    %1200 = vmatprep.subr.mxu0 0.0
    %1201 = vmatpush1.msra.mxu0 0.0
    %1202 = vmatprep.subr.mxu0 0.0
    %1203 = vmatpush1.msra.mxu0 0.0
    %1204 = vmatprep.subr.mxu0 0.0
    %1205 = vmatpush1.msra.mxu0 0.0
    %1206 = vmatprep.subr.mxu0 0.0
    %1207 = vmatpush1.msra.mxu0 0.0
    %1208 = vmatprep.subr.mxu0 0.0
    %1209 = vmatpush1.msra.mxu0 0.0
    %1210 = vmatprep.subr.mxu0 0.0
    %1211 = vmatpush1.msra.mxu0 0.0
    %1212 = vmatprep.subr.mxu0 0.0
    %1213 = vmatpush1.msra.mxu0 0.0
    %1214 = vmatprep.subr.mxu0 0.0
    %1215 = vmatpush1.msra.mxu0 0.0
    %1216 = vmatprep.subr.mxu0 0.0
    %1217 = vmatpush1.msra.mxu0 0.0
    %1218 = vmatprep.subr.mxu0 0.0
    %1219 = vmatpush1.msra.mxu0 0.0
    %1220 = vmatprep.subr.mxu0 0.0
    %1221 = vmatpush1.msra.mxu0 0.0
    %1222 = vmatprep.subr.mxu0 0.0
    %1223 = vmatpush1.msra.mxu0 0.0
    %1224 = vmatprep.subr.mxu0 0.0
    %1225 = vmatpush1.msra.mxu0 0.0
    %1226 = vmatprep.subr.mxu0 0.0
    %1227 = vmatpush1.msra.mxu0 0.0
    %1228 = vmatprep.subr.mxu0 0.0
    %1229 = vmatpush1.msra.mxu0 0.0
    %1230 = vmatprep.mubr.f32.mxu0 0.0
    %v1231 = vand.u32 %v750, 4294901760
    %1232 = vmatmul.mubr.f32.gmra.mrb[0].mxu0 %v1231
    %v1233 = vpop.f32.mrb[0].mxu0
    %v1234 = vadd.f32 %v1159, %v1233
    %v1235 = vpop.f32.mrb[0].mxu0
    %1236 = vdwg.mxu0
    %v1237 = vadd.f32 %v133, %v1234
    %v1238 = vxor.u32 %v1237, 2147483648
    %v1239 = vmul.f32 %v1238, 1.442695
    %v1240 = vpow.pop %v1239
    %v1241 = vadd.f32 %v1240, 1.0
    %v1242 = vrcp.pop %v1241
    %v1243 = vmul.f32 1.0, %v1242
    %v1244 = vtanh.pop %v1237
    %v1245 = vmul.f32 %v1243, %v737
    %1247 = vrot.lane.b32.xlu0 %v1244, 64
    %v1248 = vpop.permute.xlu0 %1247
    %v1250 = vmul.f32 %v1243, %v1248
    %1252 = vrot.lane.b32.xlu0 %v1250, 32
    %v1253 = vpop.permute.xlu0 %1252
    %v1255 = vadd.f32 %v1245, %v1253
    %v1256 = vtanh.pop %v1255
    %1258 = vrot.lane.b32.xlu0 %v1256, 64
    %v1259 = vpop.permute.xlu0 %1258
    %v1261 = vmul.f32 %v1243, %v1259
    %1263 = vrot.lane.b32.xlu0 %v1261, 32
    %v1264 = vpop.permute.xlu0 %1263
    %1266 = vst.msk [vmem:[#allocation2 + $0x1] sm:$0x1] %vm748, %v1264
    %v1267 = vsel %vm230, %v1264, 0
    %1269 = vmatprep.subr.mxu0 0.0
    %v1270 = vand.u32 %v98, 4294901760
    %1271 = vmatpush1.msra.mxu0 %v1270
    %1272 = vmatprep.subr.mxu0 0.0
    %v1273 = vand.u32 %v99, 4294901760
    %1274 = vmatpush1.msra.mxu0 %v1273
    %1275 = vmatprep.subr.mxu0 0.0
    %v1276 = vand.u32 %v100, 4294901760
    %1277 = vmatpush1.msra.mxu0 %v1276
    %1278 = vmatprep.subr.mxu0 0.0
    %v1279 = vand.u32 %v101, 4294901760
    %1280 = vmatpush1.msra.mxu0 %v1279
    %1281 = vmatprep.subr.mxu0 0.0
    %1282 = vmatpush1.msra.mxu0 0.0
    %1283 = vmatprep.subr.mxu0 0.0
    %1284 = vmatpush1.msra.mxu0 0.0
    %1285 = vmatprep.subr.mxu0 0.0
    %1286 = vmatpush1.msra.mxu0 0.0
    %1287 = vmatprep.subr.mxu0 0.0
    %1288 = vmatpush1.msra.mxu0 0.0
    %1289 = vmatprep.subr.mxu0 0.0
    %1290 = vmatpush1.msra.mxu0 0.0
    %1291 = vmatprep.subr.mxu0 0.0
    %1292 = vmatpush1.msra.mxu0 0.0
    %1293 = vmatprep.subr.mxu0 0.0
    %1294 = vmatpush1.msra.mxu0 0.0
    %1295 = vmatprep.subr.mxu0 0.0
    %1296 = vmatpush1.msra.mxu0 0.0
    %1297 = vmatprep.subr.mxu0 0.0
    %1298 = vmatpush1.msra.mxu0 0.0
    %1299 = vmatprep.subr.mxu0 0.0
    %1300 = vmatpush1.msra.mxu0 0.0
    %1301 = vmatprep.subr.mxu0 0.0
    %1302 = vmatpush1.msra.mxu0 0.0
    %1303 = vmatprep.subr.mxu0 0.0
    %1304 = vmatpush1.msra.mxu0 0.0
    %1305 = vmatprep.subr.mxu0 0.0
    %1306 = vmatpush1.msra.mxu0 0.0
    %1307 = vmatprep.subr.mxu0 0.0
    %1308 = vmatpush1.msra.mxu0 0.0
    %1309 = vmatprep.subr.mxu0 0.0
    %1310 = vmatpush1.msra.mxu0 0.0
    %1311 = vmatprep.subr.mxu0 0.0
    %1312 = vmatpush1.msra.mxu0 0.0
    %1313 = vmatprep.subr.mxu0 0.0
    %1314 = vmatpush1.msra.mxu0 0.0
    %1315 = vmatprep.subr.mxu0 0.0
    %1316 = vmatpush1.msra.mxu0 0.0
    %1317 = vmatprep.subr.mxu0 0.0
    %1318 = vmatpush1.msra.mxu0 0.0
    %1319 = vmatprep.subr.mxu0 0.0
    %1320 = vmatpush1.msra.mxu0 0.0
    %1321 = vmatprep.subr.mxu0 0.0
    %1322 = vmatpush1.msra.mxu0 0.0
    %1323 = vmatprep.subr.mxu0 0.0
    %1324 = vmatpush1.msra.mxu0 0.0
    %1325 = vmatprep.subr.mxu0 0.0
    %1326 = vmatpush1.msra.mxu0 0.0
    %1327 = vmatprep.subr.mxu0 0.0
    %1328 = vmatpush1.msra.mxu0 0.0
    %1329 = vmatprep.subr.mxu0 0.0
    %1330 = vmatpush1.msra.mxu0 0.0
    %1331 = vmatprep.subr.mxu0 0.0
    %1332 = vmatpush1.msra.mxu0 0.0
    %1333 = vmatprep.subr.mxu0 0.0
    %1334 = vmatpush1.msra.mxu0 0.0
    %1335 = vmatprep.subr.mxu0 0.0
    %1336 = vmatpush1.msra.mxu0 0.0
    %1337 = vmatprep.mubr.f32.mxu0 0.0
    %v1338 = vand.u32 %v1267, 4294901760
    %v1339 = vsub.f32 %v1267, %v1338
    %v1340 = vand.u32 %v1339, 4294901760
    %v1341 = vsub.f32 %v1339, %v1340
    %v1342 = vand.u32 %v1341, 4294901760
    %1343 = vmatmul.mubr.f32.gmra.mrb[0].mxu0 %v1342
    %v1344 = vpop.f32.mrb[0].mxu0
    %v1345 = vadd.f32 0.0, %v1344
    %v1346 = vpop.f32.mrb[0].mxu0
    %1347 = vdwg.mxu0
    %1348 = vmatprep.subr.mxu0 0.0
    %v1349 = vand.u32 %v98, 4294901760
    %v1350 = vsub.f32 %v98, %v1349
    %v1351 = vand.u32 %v1350, 4294901760
    %v1352 = vsub.f32 %v1350, %v1351
    %v1353 = vand.u32 %v1352, 4294901760
    %1354 = vmatpush1.msra.mxu0 %v1353
    %1355 = vmatprep.subr.mxu0 0.0
    %v1356 = vand.u32 %v99, 4294901760
    %v1357 = vsub.f32 %v99, %v1356
    %v1358 = vand.u32 %v1357, 4294901760
    %v1359 = vsub.f32 %v1357, %v1358
    %v1360 = vand.u32 %v1359, 4294901760
    %1361 = vmatpush1.msra.mxu0 %v1360
    %1362 = vmatprep.subr.mxu0 0.0
    %v1363 = vand.u32 %v100, 4294901760
    %v1364 = vsub.f32 %v100, %v1363
    %v1365 = vand.u32 %v1364, 4294901760
    %v1366 = vsub.f32 %v1364, %v1365
    %v1367 = vand.u32 %v1366, 4294901760
    %1368 = vmatpush1.msra.mxu0 %v1367
    %1369 = vmatprep.subr.mxu0 0.0
    %v1370 = vand.u32 %v101, 4294901760
    %v1371 = vsub.f32 %v101, %v1370
    %v1372 = vand.u32 %v1371, 4294901760
    %v1373 = vsub.f32 %v1371, %v1372
    %v1374 = vand.u32 %v1373, 4294901760
    %1375 = vmatpush1.msra.mxu0 %v1374
    %1376 = vmatprep.subr.mxu0 0.0
    %1377 = vmatpush1.msra.mxu0 0.0
    %1378 = vmatprep.subr.mxu0 0.0
    %1379 = vmatpush1.msra.mxu0 0.0
    %1380 = vmatprep.subr.mxu0 0.0
    %1381 = vmatpush1.msra.mxu0 0.0
    %1382 = vmatprep.subr.mxu0 0.0
    %1383 = vmatpush1.msra.mxu0 0.0
    %1384 = vmatprep.subr.mxu0 0.0
    %1385 = vmatpush1.msra.mxu0 0.0
    %1386 = vmatprep.subr.mxu0 0.0
    %1387 = vmatpush1.msra.mxu0 0.0
    %1388 = vmatprep.subr.mxu0 0.0
    %1389 = vmatpush1.msra.mxu0 0.0
    %1390 = vmatprep.subr.mxu0 0.0
    %1391 = vmatpush1.msra.mxu0 0.0
    %1392 = vmatprep.subr.mxu0 0.0
    %1393 = vmatpush1.msra.mxu0 0.0
    %1394 = vmatprep.subr.mxu0 0.0
    %1395 = vmatpush1.msra.mxu0 0.0
    %1396 = vmatprep.subr.mxu0 0.0
    %1397 = vmatpush1.msra.mxu0 0.0
    %1398 = vmatprep.subr.mxu0 0.0
    %1399 = vmatpush1.msra.mxu0 0.0
    %1400 = vmatprep.subr.mxu0 0.0
    %1401 = vmatpush1.msra.mxu0 0.0
    %1402 = vmatprep.subr.mxu0 0.0
    %1403 = vmatpush1.msra.mxu0 0.0
    %1404 = vmatprep.subr.mxu0 0.0
    %1405 = vmatpush1.msra.mxu0 0.0
    %1406 = vmatprep.subr.mxu0 0.0
    %1407 = vmatpush1.msra.mxu0 0.0
    %1408 = vmatprep.subr.mxu0 0.0
    %1409 = vmatpush1.msra.mxu0 0.0
    %1410 = vmatprep.subr.mxu0 0.0
    %1411 = vmatpush1.msra.mxu0 0.0
    %1412 = vmatprep.subr.mxu0 0.0
    %1413 = vmatpush1.msra.mxu0 0.0
    %1414 = vmatprep.subr.mxu0 0.0
    %1415 = vmatpush1.msra.mxu0 0.0
    %1416 = vmatprep.subr.mxu0 0.0
    %1417 = vmatpush1.msra.mxu0 0.0
    %1418 = vmatprep.subr.mxu0 0.0
    %1419 = vmatpush1.msra.mxu0 0.0
    %1420 = vmatprep.subr.mxu0 0.0
    %1421 = vmatpush1.msra.mxu0 0.0
    %1422 = vmatprep.subr.mxu0 0.0
    %1423 = vmatpush1.msra.mxu0 0.0
    %1424 = vmatprep.subr.mxu0 0.0
    %1425 = vmatpush1.msra.mxu0 0.0
    %1426 = vmatprep.subr.mxu0 0.0
    %1427 = vmatpush1.msra.mxu0 0.0
    %1428 = vmatprep.subr.mxu0 0.0
    %1429 = vmatpush1.msra.mxu0 0.0
    %1430 = vmatprep.subr.mxu0 0.0
    %1431 = vmatpush1.msra.mxu0 0.0
    %1432 = vmatprep.mubr.f32.mxu0 0.0
    %v1433 = vand.u32 %v1267, 4294901760
    %1434 = vmatmul.mubr.f32.gmra.mrb[0].mxu0 %v1433
    %v1435 = vpop.f32.mrb[0].mxu0
    %v1436 = vadd.f32 %v1345, %v1435
    %v1437 = vpop.f32.mrb[0].mxu0
    %1438 = vdwg.mxu0
    %1439 = vmatprep.subr.mxu0 0.0
    %v1440 = vand.u32 %v98, 4294901760
    %v1441 = vsub.f32 %v98, %v1440
    %1442 = vmatpush1.msra.mxu0 %v1441
    %1443 = vmatprep.subr.mxu0 0.0
    %v1444 = vand.u32 %v99, 4294901760
    %v1445 = vsub.f32 %v99, %v1444
    %1446 = vmatpush1.msra.mxu0 %v1445
    %1447 = vmatprep.subr.mxu0 0.0
    %v1448 = vand.u32 %v100, 4294901760
    %v1449 = vsub.f32 %v100, %v1448
    %1450 = vmatpush1.msra.mxu0 %v1449
    %1451 = vmatprep.subr.mxu0 0.0
    %v1452 = vand.u32 %v101, 4294901760
    %v1453 = vsub.f32 %v101, %v1452
    %1454 = vmatpush1.msra.mxu0 %v1453
    %1455 = vmatprep.subr.mxu0 0.0
    %1456 = vmatpush1.msra.mxu0 0.0
    %1457 = vmatprep.subr.mxu0 0.0
    %1458 = vmatpush1.msra.mxu0 0.0
    %1459 = vmatprep.subr.mxu0 0.0
    %1460 = vmatpush1.msra.mxu0 0.0
    %1461 = vmatprep.subr.mxu0 0.0
    %1462 = vmatpush1.msra.mxu0 0.0
    %1463 = vmatprep.subr.mxu0 0.0
    %1464 = vmatpush1.msra.mxu0 0.0
    %1465 = vmatprep.subr.mxu0 0.0
    %1466 = vmatpush1.msra.mxu0 0.0
    %1467 = vmatprep.subr.mxu0 0.0
    %1468 = vmatpush1.msra.mxu0 0.0
    %1469 = vmatprep.subr.mxu0 0.0
    %1470 = vmatpush1.msra.mxu0 0.0
    %1471 = vmatprep.subr.mxu0 0.0
    %1472 = vmatpush1.msra.mxu0 0.0
    %1473 = vmatprep.subr.mxu0 0.0
    %1474 = vmatpush1.msra.mxu0 0.0
    %1475 = vmatprep.subr.mxu0 0.0
    %1476 = vmatpush1.msra.mxu0 0.0
    %1477 = vmatprep.subr.mxu0 0.0
    %1478 = vmatpush1.msra.mxu0 0.0
    %1479 = vmatprep.subr.mxu0 0.0
    %1480 = vmatpush1.msra.mxu0 0.0
    %1481 = vmatprep.subr.mxu0 0.0
    %1482 = vmatpush1.msra.mxu0 0.0
    %1483 = vmatprep.subr.mxu0 0.0
    %1484 = vmatpush1.msra.mxu0 0.0
    %1485 = vmatprep.subr.mxu0 0.0
    %1486 = vmatpush1.msra.mxu0 0.0
    %1487 = vmatprep.subr.mxu0 0.0
    %1488 = vmatpush1.msra.mxu0 0.0
    %1489 = vmatprep.subr.mxu0 0.0
    %1490 = vmatpush1.msra.mxu0 0.0
    %1491 = vmatprep.subr.mxu0 0.0
    %1492 = vmatpush1.msra.mxu0 0.0
    %1493 = vmatprep.subr.mxu0 0.0
    %1494 = vmatpush1.msra.mxu0 0.0
    %1495 = vmatprep.subr.mxu0 0.0
    %1496 = vmatpush1.msra.mxu0 0.0
    %1497 = vmatprep.subr.mxu0 0.0
    %1498 = vmatpush1.msra.mxu0 0.0
    %1499 = vmatprep.subr.mxu0 0.0
    %1500 = vmatpush1.msra.mxu0 0.0
    %1501 = vmatprep.subr.mxu0 0.0
    %1502 = vmatpush1.msra.mxu0 0.0
    %1503 = vmatprep.subr.mxu0 0.0
    %1504 = vmatpush1.msra.mxu0 0.0
    %1505 = vmatprep.subr.mxu0 0.0
    %1506 = vmatpush1.msra.mxu0 0.0
    %1507 = vmatprep.subr.mxu0 0.0
    %1508 = vmatpush1.msra.mxu0 0.0
    %1509 = vmatprep.subr.mxu0 0.0
    %1510 = vmatpush1.msra.mxu0 0.0
    %1511 = vmatprep.mubr.f32.mxu0 0.0
    %v1512 = vand.u32 %v1267, 4294901760
    %v1513 = vsub.f32 %v1267, %v1512
    %1514 = vmatmul.mubr.f32.gmra.mrb[0].mxu0 %v1513
    %v1515 = vpop.f32.mrb[0].mxu0
    %v1516 = vadd.f32 %v1436, %v1515
    %v1517 = vpop.f32.mrb[0].mxu0
    %1518 = vdwg.mxu0
    %1519 = vmatprep.subr.mxu0 0.0
    %v1520 = vand.u32 %v98, 4294901760
    %1521 = vmatpush1.msra.mxu0 %v1520
    %1522 = vmatprep.subr.mxu0 0.0
    %v1523 = vand.u32 %v99, 4294901760
    %1524 = vmatpush1.msra.mxu0 %v1523
    %1525 = vmatprep.subr.mxu0 0.0
    %v1526 = vand.u32 %v100, 4294901760
    %1527 = vmatpush1.msra.mxu0 %v1526
    %1528 = vmatprep.subr.mxu0 0.0
    %v1529 = vand.u32 %v101, 4294901760
    %1530 = vmatpush1.msra.mxu0 %v1529
    %1531 = vmatprep.subr.mxu0 0.0
    %1532 = vmatpush1.msra.mxu0 0.0
    %1533 = vmatprep.subr.mxu0 0.0
    %1534 = vmatpush1.msra.mxu0 0.0
    %1535 = vmatprep.subr.mxu0 0.0
    %1536 = vmatpush1.msra.mxu0 0.0
    %1537 = vmatprep.subr.mxu0 0.0
    %1538 = vmatpush1.msra.mxu0 0.0
    %1539 = vmatprep.subr.mxu0 0.0
    %1540 = vmatpush1.msra.mxu0 0.0
    %1541 = vmatprep.subr.mxu0 0.0
    %1542 = vmatpush1.msra.mxu0 0.0
    %1543 = vmatprep.subr.mxu0 0.0
    %1544 = vmatpush1.msra.mxu0 0.0
    %1545 = vmatprep.subr.mxu0 0.0
    %1546 = vmatpush1.msra.mxu0 0.0
    %1547 = vmatprep.subr.mxu0 0.0
    %1548 = vmatpush1.msra.mxu0 0.0
    %1549 = vmatprep.subr.mxu0 0.0
    %1550 = vmatpush1.msra.mxu0 0.0
    %1551 = vmatprep.subr.mxu0 0.0
    %1552 = vmatpush1.msra.mxu0 0.0
    %1553 = vmatprep.subr.mxu0 0.0
    %1554 = vmatpush1.msra.mxu0 0.0
    %1555 = vmatprep.subr.mxu0 0.0
    %1556 = vmatpush1.msra.mxu0 0.0
    %1557 = vmatprep.subr.mxu0 0.0
    %1558 = vmatpush1.msra.mxu0 0.0
    %1559 = vmatprep.subr.mxu0 0.0
    %1560 = vmatpush1.msra.mxu0 0.0
    %1561 = vmatprep.subr.mxu0 0.0
    %1562 = vmatpush1.msra.mxu0 0.0
    %1563 = vmatprep.subr.mxu0 0.0
    %1564 = vmatpush1.msra.mxu0 0.0
    %1565 = vmatprep.subr.mxu0 0.0
    %1566 = vmatpush1.msra.mxu0 0.0
    %1567 = vmatprep.subr.mxu0 0.0
    %1568 = vmatpush1.msra.mxu0 0.0
    %1569 = vmatprep.subr.mxu0 0.0
    %1570 = vmatpush1.msra.mxu0 0.0
    %1571 = vmatprep.subr.mxu0 0.0
    %1572 = vmatpush1.msra.mxu0 0.0
    %1573 = vmatprep.subr.mxu0 0.0
    %1574 = vmatpush1.msra.mxu0 0.0
    %1575 = vmatprep.subr.mxu0 0.0
    %1576 = vmatpush1.msra.mxu0 0.0
    %1577 = vmatprep.subr.mxu0 0.0
    %1578 = vmatpush1.msra.mxu0 0.0
    %1579 = vmatprep.subr.mxu0 0.0
    %1580 = vmatpush1.msra.mxu0 0.0
    %1581 = vmatprep.subr.mxu0 0.0
    %1582 = vmatpush1.msra.mxu0 0.0
    %1583 = vmatprep.subr.mxu0 0.0
    %1584 = vmatpush1.msra.mxu0 0.0
    %1585 = vmatprep.subr.mxu0 0.0
    %1586 = vmatpush1.msra.mxu0 0.0
    %1587 = vmatprep.mubr.f32.mxu0 0.0
    %v1588 = vand.u32 %v1267, 4294901760
    %v1589 = vsub.f32 %v1267, %v1588
    %v1590 = vand.u32 %v1589, 4294901760
    %1591 = vmatmul.mubr.f32.gmra.mrb[0].mxu0 %v1590
    %v1592 = vpop.f32.mrb[0].mxu0
    %v1593 = vadd.f32 %v1516, %v1592
    %v1594 = vpop.f32.mrb[0].mxu0
    %1595 = vdwg.mxu0
    %1596 = vmatprep.subr.mxu0 0.0
    %v1597 = vand.u32 %v98, 4294901760
    %v1598 = vsub.f32 %v98, %v1597
    %v1599 = vand.u32 %v1598, 4294901760
    %1600 = vmatpush1.msra.mxu0 %v1599
    %1601 = vmatprep.subr.mxu0 0.0
    %v1602 = vand.u32 %v99, 4294901760
    %v1603 = vsub.f32 %v99, %v1602
    %v1604 = vand.u32 %v1603, 4294901760
    %1605 = vmatpush1.msra.mxu0 %v1604
    %1606 = vmatprep.subr.mxu0 0.0
    %v1607 = vand.u32 %v100, 4294901760
    %v1608 = vsub.f32 %v100, %v1607
    %v1609 = vand.u32 %v1608, 4294901760
    %1610 = vmatpush1.msra.mxu0 %v1609
    %1611 = vmatprep.subr.mxu0 0.0
    %v1612 = vand.u32 %v101, 4294901760
    %v1613 = vsub.f32 %v101, %v1612
    %v1614 = vand.u32 %v1613, 4294901760
    %1615 = vmatpush1.msra.mxu0 %v1614
    %1616 = vmatprep.subr.mxu0 0.0
    %1617 = vmatpush1.msra.mxu0 0.0
    %1618 = vmatprep.subr.mxu0 0.0
    %1619 = vmatpush1.msra.mxu0 0.0
    %1620 = vmatprep.subr.mxu0 0.0
    %1621 = vmatpush1.msra.mxu0 0.0
    %1622 = vmatprep.subr.mxu0 0.0
    %1623 = vmatpush1.msra.mxu0 0.0
    %1624 = vmatprep.subr.mxu0 0.0
    %1625 = vmatpush1.msra.mxu0 0.0
    %1626 = vmatprep.subr.mxu0 0.0
    %1627 = vmatpush1.msra.mxu0 0.0
    %1628 = vmatprep.subr.mxu0 0.0
    %1629 = vmatpush1.msra.mxu0 0.0
    %1630 = vmatprep.subr.mxu0 0.0
    %1631 = vmatpush1.msra.mxu0 0.0
    %1632 = vmatprep.subr.mxu0 0.0
    %1633 = vmatpush1.msra.mxu0 0.0
    %1634 = vmatprep.subr.mxu0 0.0
    %1635 = vmatpush1.msra.mxu0 0.0
    %1636 = vmatprep.subr.mxu0 0.0
    %1637 = vmatpush1.msra.mxu0 0.0
    %1638 = vmatprep.subr.mxu0 0.0
    %1639 = vmatpush1.msra.mxu0 0.0
    %1640 = vmatprep.subr.mxu0 0.0
    %1641 = vmatpush1.msra.mxu0 0.0
    %1642 = vmatprep.subr.mxu0 0.0
    %1643 = vmatpush1.msra.mxu0 0.0
    %1644 = vmatprep.subr.mxu0 0.0
    %1645 = vmatpush1.msra.mxu0 0.0
    %1646 = vmatprep.subr.mxu0 0.0
    %1647 = vmatpush1.msra.mxu0 0.0
    %1648 = vmatprep.subr.mxu0 0.0
    %1649 = vmatpush1.msra.mxu0 0.0
    %1650 = vmatprep.subr.mxu0 0.0
    %1651 = vmatpush1.msra.mxu0 0.0
    %1652 = vmatprep.subr.mxu0 0.0
    %1653 = vmatpush1.msra.mxu0 0.0
    %1654 = vmatprep.subr.mxu0 0.0
    %1655 = vmatpush1.msra.mxu0 0.0
    %1656 = vmatprep.subr.mxu0 0.0
    %1657 = vmatpush1.msra.mxu0 0.0
    %1658 = vmatprep.subr.mxu0 0.0
    %1659 = vmatpush1.msra.mxu0 0.0
    %1660 = vmatprep.subr.mxu0 0.0
    %1661 = vmatpush1.msra.mxu0 0.0
    %1662 = vmatprep.subr.mxu0 0.0
    %1663 = vmatpush1.msra.mxu0 0.0
    %1664 = vmatprep.subr.mxu0 0.0
    %1665 = vmatpush1.msra.mxu0 0.0
    %1666 = vmatprep.subr.mxu0 0.0
    %1667 = vmatpush1.msra.mxu0 0.0
    %1668 = vmatprep.subr.mxu0 0.0
    %1669 = vmatpush1.msra.mxu0 0.0
    %1670 = vmatprep.subr.mxu0 0.0
    %1671 = vmatpush1.msra.mxu0 0.0
    %1672 = vmatprep.mubr.f32.mxu0 0.0
    %v1673 = vand.u32 %v1267, 4294901760
    %1674 = vmatmul.mubr.f32.gmra.mrb[0].mxu0 %v1673
    %v1675 = vpop.f32.mrb[0].mxu0
    %v1676 = vadd.f32 %v1593, %v1675
    %v1677 = vpop.f32.mrb[0].mxu0
    %1678 = vdwg.mxu0
    %1679 = vmatprep.subr.mxu0 0.0
    %v1680 = vand.u32 %v98, 4294901760
    %1681 = vmatpush1.msra.mxu0 %v1680
    %1682 = vmatprep.subr.mxu0 0.0
    %v1683 = vand.u32 %v99, 4294901760
    %1684 = vmatpush1.msra.mxu0 %v1683
    %1685 = vmatprep.subr.mxu0 0.0
    %v1686 = vand.u32 %v100, 4294901760
    %1687 = vmatpush1.msra.mxu0 %v1686
    %1688 = vmatprep.subr.mxu0 0.0
    %v1689 = vand.u32 %v101, 4294901760
    %1690 = vmatpush1.msra.mxu0 %v1689
    %1691 = vmatprep.subr.mxu0 0.0
    %1692 = vmatpush1.msra.mxu0 0.0
    %1693 = vmatprep.subr.mxu0 0.0
    %1694 = vmatpush1.msra.mxu0 0.0
    %1695 = vmatprep.subr.mxu0 0.0
    %1696 = vmatpush1.msra.mxu0 0.0
    %1697 = vmatprep.subr.mxu0 0.0
    %1698 = vmatpush1.msra.mxu0 0.0
    %1699 = vmatprep.subr.mxu0 0.0
    %1700 = vmatpush1.msra.mxu0 0.0
    %1701 = vmatprep.subr.mxu0 0.0
    %1702 = vmatpush1.msra.mxu0 0.0
    %1703 = vmatprep.subr.mxu0 0.0
    %1704 = vmatpush1.msra.mxu0 0.0
    %1705 = vmatprep.subr.mxu0 0.0
    %1706 = vmatpush1.msra.mxu0 0.0
    %1707 = vmatprep.subr.mxu0 0.0
    %1708 = vmatpush1.msra.mxu0 0.0
    %1709 = vmatprep.subr.mxu0 0.0
    %1710 = vmatpush1.msra.mxu0 0.0
    %1711 = vmatprep.subr.mxu0 0.0
    %1712 = vmatpush1.msra.mxu0 0.0
    %1713 = vmatprep.subr.mxu0 0.0
    %1714 = vmatpush1.msra.mxu0 0.0
    %1715 = vmatprep.subr.mxu0 0.0
    %1716 = vmatpush1.msra.mxu0 0.0
    %1717 = vmatprep.subr.mxu0 0.0
    %1718 = vmatpush1.msra.mxu0 0.0
    %1719 = vmatprep.subr.mxu0 0.0
    %1720 = vmatpush1.msra.mxu0 0.0
    %1721 = vmatprep.subr.mxu0 0.0
    %1722 = vmatpush1.msra.mxu0 0.0
    %1723 = vmatprep.subr.mxu0 0.0
    %1724 = vmatpush1.msra.mxu0 0.0
    %1725 = vmatprep.subr.mxu0 0.0
    %1726 = vmatpush1.msra.mxu0 0.0
    %1727 = vmatprep.subr.mxu0 0.0
    %1728 = vmatpush1.msra.mxu0 0.0
    %1729 = vmatprep.subr.mxu0 0.0
    %1730 = vmatpush1.msra.mxu0 0.0
    %1731 = vmatprep.subr.mxu0 0.0
    %1732 = vmatpush1.msra.mxu0 0.0
    %1733 = vmatprep.subr.mxu0 0.0
    %1734 = vmatpush1.msra.mxu0 0.0
    %1735 = vmatprep.subr.mxu0 0.0
    %1736 = vmatpush1.msra.mxu0 0.0
    %1737 = vmatprep.subr.mxu0 0.0
    %1738 = vmatpush1.msra.mxu0 0.0
    %1739 = vmatprep.subr.mxu0 0.0
    %1740 = vmatpush1.msra.mxu0 0.0
    %1741 = vmatprep.subr.mxu0 0.0
    %1742 = vmatpush1.msra.mxu0 0.0
    %1743 = vmatprep.subr.mxu0 0.0
    %1744 = vmatpush1.msra.mxu0 0.0
    %1745 = vmatprep.subr.mxu0 0.0
    %1746 = vmatpush1.msra.mxu0 0.0
    %1747 = vmatprep.mubr.f32.mxu0 0.0
    %v1748 = vand.u32 %v1267, 4294901760
    %1749 = vmatmul.mubr.f32.gmra.mrb[0].mxu0 %v1748
    %v1750 = vpop.f32.mrb[0].mxu0
    %v1751 = vadd.f32 %v1676, %v1750
    %v1752 = vpop.f32.mrb[0].mxu0
    %1753 = vdwg.mxu0
    %v1754 = vadd.f32 %v149, %v1751
    %v1755 = vxor.u32 %v1754, 2147483648
    %v1756 = vmul.f32 %v1755, 1.442695
    %v1757 = vpow.pop %v1756
    %v1758 = vadd.f32 %v1757, 1.0
    %v1759 = vrcp.pop %v1758
    %v1760 = vmul.f32 1.0, %v1759
    %v1761 = vtanh.pop %v1754
    %v1762 = vmul.f32 %v1760, %v1255
    %1764 = vrot.lane.b32.xlu0 %v1761, 64
    %v1765 = vpop.permute.xlu0 %1764
    %v1767 = vmul.f32 %v1760, %v1765
    %1769 = vrot.lane.b32.xlu0 %v1767, 32
    %v1770 = vpop.permute.xlu0 %1769
    %v1772 = vadd.f32 %v1762, %v1770
    %v1773 = vtanh.pop %v1772
    %1775 = vrot.lane.b32.xlu0 %v1773, 64
    %v1776 = vpop.permute.xlu0 %1775
    %v1778 = vmul.f32 %v1760, %v1776
    %1780 = vrot.lane.b32.xlu0 %v1778, 32
    %v1781 = vpop.permute.xlu0 %1780
    %1783 = vst.msk [vmem:[#allocation2 + $0x2] sm:$0x1] %vm748, %v1781
    %v1784 = vsel %vm230, %v1781, 0
    %1786 = vmatprep.subr.mxu0 0.0
    %v1787 = vand.u32 %v98, 4294901760
    %1788 = vmatpush1.msra.mxu0 %v1787
    %1789 = vmatprep.subr.mxu0 0.0
    %v1790 = vand.u32 %v99, 4294901760
    %1791 = vmatpush1.msra.mxu0 %v1790
    %1792 = vmatprep.subr.mxu0 0.0
    %v1793 = vand.u32 %v100, 4294901760
    %1794 = vmatpush1.msra.mxu0 %v1793
    %1795 = vmatprep.subr.mxu0 0.0
    %v1796 = vand.u32 %v101, 4294901760
    %1797 = vmatpush1.msra.mxu0 %v1796
    %1798 = vmatprep.subr.mxu0 0.0
    %1799 = vmatpush1.msra.mxu0 0.0
    %1800 = vmatprep.subr.mxu0 0.0
    %1801 = vmatpush1.msra.mxu0 0.0
    %1802 = vmatprep.subr.mxu0 0.0
    %1803 = vmatpush1.msra.mxu0 0.0
    %1804 = vmatprep.subr.mxu0 0.0
    %1805 = vmatpush1.msra.mxu0 0.0
    %1806 = vmatprep.subr.mxu0 0.0
    %1807 = vmatpush1.msra.mxu0 0.0
    %1808 = vmatprep.subr.mxu0 0.0
    %1809 = vmatpush1.msra.mxu0 0.0
    %1810 = vmatprep.subr.mxu0 0.0
    %1811 = vmatpush1.msra.mxu0 0.0
    %1812 = vmatprep.subr.mxu0 0.0
    %1813 = vmatpush1.msra.mxu0 0.0
    %1814 = vmatprep.subr.mxu0 0.0
    %1815 = vmatpush1.msra.mxu0 0.0
    %1816 = vmatprep.subr.mxu0 0.0
    %1817 = vmatpush1.msra.mxu0 0.0
    %1818 = vmatprep.subr.mxu0 0.0
    %1819 = vmatpush1.msra.mxu0 0.0
    %1820 = vmatprep.subr.mxu0 0.0
    %1821 = vmatpush1.msra.mxu0 0.0
    %1822 = vmatprep.subr.mxu0 0.0
    %1823 = vmatpush1.msra.mxu0 0.0
    %1824 = vmatprep.subr.mxu0 0.0
    %1825 = vmatpush1.msra.mxu0 0.0
    %1826 = vmatprep.subr.mxu0 0.0
    %1827 = vmatpush1.msra.mxu0 0.0
    %1828 = vmatprep.subr.mxu0 0.0
    %1829 = vmatpush1.msra.mxu0 0.0
    %1830 = vmatprep.subr.mxu0 0.0
    %1831 = vmatpush1.msra.mxu0 0.0
    %1832 = vmatprep.subr.mxu0 0.0
    %1833 = vmatpush1.msra.mxu0 0.0
    %1834 = vmatprep.subr.mxu0 0.0
    %1835 = vmatpush1.msra.mxu0 0.0
    %1836 = vmatprep.subr.mxu0 0.0
    %1837 = vmatpush1.msra.mxu0 0.0
    %1838 = vmatprep.subr.mxu0 0.0
    %1839 = vmatpush1.msra.mxu0 0.0
    %1840 = vmatprep.subr.mxu0 0.0
    %1841 = vmatpush1.msra.mxu0 0.0
    %1842 = vmatprep.subr.mxu0 0.0
    %1843 = vmatpush1.msra.mxu0 0.0
    %1844 = vmatprep.subr.mxu0 0.0
    %1845 = vmatpush1.msra.mxu0 0.0
    %1846 = vmatprep.subr.mxu0 0.0
    %1847 = vmatpush1.msra.mxu0 0.0
    %1848 = vmatprep.subr.mxu0 0.0
    %1849 = vmatpush1.msra.mxu0 0.0
    %1850 = vmatprep.subr.mxu0 0.0
    %1851 = vmatpush1.msra.mxu0 0.0
    %1852 = vmatprep.subr.mxu0 0.0
    %1853 = vmatpush1.msra.mxu0 0.0
    %1854 = vmatprep.mubr.f32.mxu0 0.0
    %v1855 = vand.u32 %v1784, 4294901760
    %v1856 = vsub.f32 %v1784, %v1855
    %v1857 = vand.u32 %v1856, 4294901760
    %v1858 = vsub.f32 %v1856, %v1857
    %v1859 = vand.u32 %v1858, 4294901760
    %1860 = vmatmul.mubr.f32.gmra.mrb[0].mxu0 %v1859
    %v1861 = vpop.f32.mrb[0].mxu0
    %v1862 = vadd.f32 0.0, %v1861
    %v1863 = vpop.f32.mrb[0].mxu0
    %1864 = vdwg.mxu0
    %1865 = vmatprep.subr.mxu0 0.0
    %v1866 = vand.u32 %v98, 4294901760
    %v1867 = vsub.f32 %v98, %v1866
    %v1868 = vand.u32 %v1867, 4294901760
    %v1869 = vsub.f32 %v1867, %v1868
    %v1870 = vand.u32 %v1869, 4294901760
    %1871 = vmatpush1.msra.mxu0 %v1870
    %1872 = vmatprep.subr.mxu0 0.0
    %v1873 = vand.u32 %v99, 4294901760
    %v1874 = vsub.f32 %v99, %v1873
    %v1875 = vand.u32 %v1874, 4294901760
    %v1876 = vsub.f32 %v1874, %v1875
    %v1877 = vand.u32 %v1876, 4294901760
    %1878 = vmatpush1.msra.mxu0 %v1877
    %1879 = vmatprep.subr.mxu0 0.0
    %v1880 = vand.u32 %v100, 4294901760
    %v1881 = vsub.f32 %v100, %v1880
    %v1882 = vand.u32 %v1881, 4294901760
    %v1883 = vsub.f32 %v1881, %v1882
    %v1884 = vand.u32 %v1883, 4294901760
    %1885 = vmatpush1.msra.mxu0 %v1884
    %1886 = vmatprep.subr.mxu0 0.0
    %v1887 = vand.u32 %v101, 4294901760
    %v1888 = vsub.f32 %v101, %v1887
    %v1889 = vand.u32 %v1888, 4294901760
    %v1890 = vsub.f32 %v1888, %v1889
    %v1891 = vand.u32 %v1890, 4294901760
    %1892 = vmatpush1.msra.mxu0 %v1891
    %1893 = vmatprep.subr.mxu0 0.0
    %1894 = vmatpush1.msra.mxu0 0.0
    %1895 = vmatprep.subr.mxu0 0.0
    %1896 = vmatpush1.msra.mxu0 0.0
    %1897 = vmatprep.subr.mxu0 0.0
    %1898 = vmatpush1.msra.mxu0 0.0
    %1899 = vmatprep.subr.mxu0 0.0
    %1900 = vmatpush1.msra.mxu0 0.0
    %1901 = vmatprep.subr.mxu0 0.0
    %1902 = vmatpush1.msra.mxu0 0.0
    %1903 = vmatprep.subr.mxu0 0.0
    %1904 = vmatpush1.msra.mxu0 0.0
    %1905 = vmatprep.subr.mxu0 0.0
    %1906 = vmatpush1.msra.mxu0 0.0
    %1907 = vmatprep.subr.mxu0 0.0
    %1908 = vmatpush1.msra.mxu0 0.0
    %1909 = vmatprep.subr.mxu0 0.0
    %1910 = vmatpush1.msra.mxu0 0.0
    %1911 = vmatprep.subr.mxu0 0.0
    %1912 = vmatpush1.msra.mxu0 0.0
    %1913 = vmatprep.subr.mxu0 0.0
    %1914 = vmatpush1.msra.mxu0 0.0
    %1915 = vmatprep.subr.mxu0 0.0
    %1916 = vmatpush1.msra.mxu0 0.0
    %1917 = vmatprep.subr.mxu0 0.0
    %1918 = vmatpush1.msra.mxu0 0.0
    %1919 = vmatprep.subr.mxu0 0.0
    %1920 = vmatpush1.msra.mxu0 0.0
    %1921 = vmatprep.subr.mxu0 0.0
    %1922 = vmatpush1.msra.mxu0 0.0
    %1923 = vmatprep.subr.mxu0 0.0
    %1924 = vmatpush1.msra.mxu0 0.0
    %1925 = vmatprep.subr.mxu0 0.0
    %1926 = vmatpush1.msra.mxu0 0.0
    %1927 = vmatprep.subr.mxu0 0.0
    %1928 = vmatpush1.msra.mxu0 0.0
    %1929 = vmatprep.subr.mxu0 0.0
    %1930 = vmatpush1.msra.mxu0 0.0
    %1931 = vmatprep.subr.mxu0 0.0
    %1932 = vmatpush1.msra.mxu0 0.0
    %1933 = vmatprep.subr.mxu0 0.0
    %1934 = vmatpush1.msra.mxu0 0.0
    %1935 = vmatprep.subr.mxu0 0.0
    %1936 = vmatpush1.msra.mxu0 0.0
    %1937 = vmatprep.subr.mxu0 0.0
    %1938 = vmatpush1.msra.mxu0 0.0
    %1939 = vmatprep.subr.mxu0 0.0
    %1940 = vmatpush1.msra.mxu0 0.0
    %1941 = vmatprep.subr.mxu0 0.0
    %1942 = vmatpush1.msra.mxu0 0.0
    %1943 = vmatprep.subr.mxu0 0.0
    %1944 = vmatpush1.msra.mxu0 0.0
    %1945 = vmatprep.subr.mxu0 0.0
    %1946 = vmatpush1.msra.mxu0 0.0
    %1947 = vmatprep.subr.mxu0 0.0
    %1948 = vmatpush1.msra.mxu0 0.0
    %1949 = vmatprep.mubr.f32.mxu0 0.0
    %v1950 = vand.u32 %v1784, 4294901760
    %1951 = vmatmul.mubr.f32.gmra.mrb[0].mxu0 %v1950
    %v1952 = vpop.f32.mrb[0].mxu0
    %v1953 = vadd.f32 %v1862, %v1952
    %v1954 = vpop.f32.mrb[0].mxu0
    %1955 = vdwg.mxu0
    %1956 = vmatprep.subr.mxu0 0.0
    %v1957 = vand.u32 %v98, 4294901760
    %v1958 = vsub.f32 %v98, %v1957
    %1959 = vmatpush1.msra.mxu0 %v1958
    %1960 = vmatprep.subr.mxu0 0.0
    %v1961 = vand.u32 %v99, 4294901760
    %v1962 = vsub.f32 %v99, %v1961
    %1963 = vmatpush1.msra.mxu0 %v1962
    %1964 = vmatprep.subr.mxu0 0.0
    %v1965 = vand.u32 %v100, 4294901760
    %v1966 = vsub.f32 %v100, %v1965
    %1967 = vmatpush1.msra.mxu0 %v1966
    %1968 = vmatprep.subr.mxu0 0.0
    %v1969 = vand.u32 %v101, 4294901760
    %v1970 = vsub.f32 %v101, %v1969
    %1971 = vmatpush1.msra.mxu0 %v1970
    %1972 = vmatprep.subr.mxu0 0.0
    %1973 = vmatpush1.msra.mxu0 0.0
    %1974 = vmatprep.subr.mxu0 0.0
    %1975 = vmatpush1.msra.mxu0 0.0
    %1976 = vmatprep.subr.mxu0 0.0
    %1977 = vmatpush1.msra.mxu0 0.0
    %1978 = vmatprep.subr.mxu0 0.0
    %1979 = vmatpush1.msra.mxu0 0.0
    %1980 = vmatprep.subr.mxu0 0.0
    %1981 = vmatpush1.msra.mxu0 0.0
    %1982 = vmatprep.subr.mxu0 0.0
    %1983 = vmatpush1.msra.mxu0 0.0
    %1984 = vmatprep.subr.mxu0 0.0
    %1985 = vmatpush1.msra.mxu0 0.0
    %1986 = vmatprep.subr.mxu0 0.0
    %1987 = vmatpush1.msra.mxu0 0.0
    %1988 = vmatprep.subr.mxu0 0.0
    %1989 = vmatpush1.msra.mxu0 0.0
    %1990 = vmatprep.subr.mxu0 0.0
    %1991 = vmatpush1.msra.mxu0 0.0
    %1992 = vmatprep.subr.mxu0 0.0
    %1993 = vmatpush1.msra.mxu0 0.0
    %1994 = vmatprep.subr.mxu0 0.0
    %1995 = vmatpush1.msra.mxu0 0.0
    %1996 = vmatprep.subr.mxu0 0.0
    %1997 = vmatpush1.msra.mxu0 0.0
    %1998 = vmatprep.subr.mxu0 0.0
    %1999 = vmatpush1.msra.mxu0 0.0
    %2000 = vmatprep.subr.mxu0 0.0
    %2001 = vmatpush1.msra.mxu0 0.0
    %2002 = vmatprep.subr.mxu0 0.0
    %2003 = vmatpush1.msra.mxu0 0.0
    %2004 = vmatprep.subr.mxu0 0.0
    %2005 = vmatpush1.msra.mxu0 0.0
    %2006 = vmatprep.subr.mxu0 0.0
    %2007 = vmatpush1.msra.mxu0 0.0
    %2008 = vmatprep.subr.mxu0 0.0
    %2009 = vmatpush1.msra.mxu0 0.0
    %2010 = vmatprep.subr.mxu0 0.0
    %2011 = vmatpush1.msra.mxu0 0.0
    %2012 = vmatprep.subr.mxu0 0.0
    %2013 = vmatpush1.msra.mxu0 0.0
    %2014 = vmatprep.subr.mxu0 0.0
    %2015 = vmatpush1.msra.mxu0 0.0
    %2016 = vmatprep.subr.mxu0 0.0
    %2017 = vmatpush1.msra.mxu0 0.0
    %2018 = vmatprep.subr.mxu0 0.0
    %2019 = vmatpush1.msra.mxu0 0.0
    %2020 = vmatprep.subr.mxu0 0.0
    %2021 = vmatpush1.msra.mxu0 0.0
    %2022 = vmatprep.subr.mxu0 0.0
    %2023 = vmatpush1.msra.mxu0 0.0
    %2024 = vmatprep.subr.mxu0 0.0
    %2025 = vmatpush1.msra.mxu0 0.0
    %2026 = vmatprep.subr.mxu0 0.0
    %2027 = vmatpush1.msra.mxu0 0.0
    %2028 = vmatprep.mubr.f32.mxu0 0.0
    %v2029 = vand.u32 %v1784, 4294901760
    %v2030 = vsub.f32 %v1784, %v2029
    %2031 = vmatmul.mubr.f32.gmra.mrb[0].mxu0 %v2030
    %v2032 = vpop.f32.mrb[0].mxu0
    %v2033 = vadd.f32 %v1953, %v2032
    %v2034 = vpop.f32.mrb[0].mxu0
    %2035 = vdwg.mxu0
    %2036 = vmatprep.subr.mxu0 0.0
    %v2037 = vand.u32 %v98, 4294901760
    %2038 = vmatpush1.msra.mxu0 %v2037
    %2039 = vmatprep.subr.mxu0 0.0
    %v2040 = vand.u32 %v99, 4294901760
    %2041 = vmatpush1.msra.mxu0 %v2040
    %2042 = vmatprep.subr.mxu0 0.0
    %v2043 = vand.u32 %v100, 4294901760
    %2044 = vmatpush1.msra.mxu0 %v2043
    %2045 = vmatprep.subr.mxu0 0.0
    %v2046 = vand.u32 %v101, 4294901760
    %2047 = vmatpush1.msra.mxu0 %v2046
    %2048 = vmatprep.subr.mxu0 0.0
    %2049 = vmatpush1.msra.mxu0 0.0
    %2050 = vmatprep.subr.mxu0 0.0
    %2051 = vmatpush1.msra.mxu0 0.0
    %2052 = vmatprep.subr.mxu0 0.0
    %2053 = vmatpush1.msra.mxu0 0.0
    %2054 = vmatprep.subr.mxu0 0.0
    %2055 = vmatpush1.msra.mxu0 0.0
    %2056 = vmatprep.subr.mxu0 0.0
    %2057 = vmatpush1.msra.mxu0 0.0
    %2058 = vmatprep.subr.mxu0 0.0
    %2059 = vmatpush1.msra.mxu0 0.0
    %2060 = vmatprep.subr.mxu0 0.0
    %2061 = vmatpush1.msra.mxu0 0.0
    %2062 = vmatprep.subr.mxu0 0.0
    %2063 = vmatpush1.msra.mxu0 0.0
    %2064 = vmatprep.subr.mxu0 0.0
    %2065 = vmatpush1.msra.mxu0 0.0
    %2066 = vmatprep.subr.mxu0 0.0
    %2067 = vmatpush1.msra.mxu0 0.0
    %2068 = vmatprep.subr.mxu0 0.0
    %2069 = vmatpush1.msra.mxu0 0.0
    %2070 = vmatprep.subr.mxu0 0.0
    %2071 = vmatpush1.msra.mxu0 0.0
    %2072 = vmatprep.subr.mxu0 0.0
    %2073 = vmatpush1.msra.mxu0 0.0
    %2074 = vmatprep.subr.mxu0 0.0
    %2075 = vmatpush1.msra.mxu0 0.0
    %2076 = vmatprep.subr.mxu0 0.0
    %2077 = vmatpush1.msra.mxu0 0.0
    %2078 = vmatprep.subr.mxu0 0.0
    %2079 = vmatpush1.msra.mxu0 0.0
    %2080 = vmatprep.subr.mxu0 0.0
    %2081 = vmatpush1.msra.mxu0 0.0
    %2082 = vmatprep.subr.mxu0 0.0
    %2083 = vmatpush1.msra.mxu0 0.0
    %2084 = vmatprep.subr.mxu0 0.0
    %2085 = vmatpush1.msra.mxu0 0.0
    %2086 = vmatprep.subr.mxu0 0.0
    %2087 = vmatpush1.msra.mxu0 0.0
    %2088 = vmatprep.subr.mxu0 0.0
    %2089 = vmatpush1.msra.mxu0 0.0
    %2090 = vmatprep.subr.mxu0 0.0
    %2091 = vmatpush1.msra.mxu0 0.0
    %2092 = vmatprep.subr.mxu0 0.0
    %2093 = vmatpush1.msra.mxu0 0.0
    %2094 = vmatprep.subr.mxu0 0.0
    %2095 = vmatpush1.msra.mxu0 0.0
    %2096 = vmatprep.subr.mxu0 0.0
    %2097 = vmatpush1.msra.mxu0 0.0
    %2098 = vmatprep.subr.mxu0 0.0
    %2099 = vmatpush1.msra.mxu0 0.0
    %2100 = vmatprep.subr.mxu0 0.0
    %2101 = vmatpush1.msra.mxu0 0.0
    %2102 = vmatprep.subr.mxu0 0.0
    %2103 = vmatpush1.msra.mxu0 0.0
    %2104 = vmatprep.mubr.f32.mxu0 0.0
    %v2105 = vand.u32 %v1784, 4294901760
    %v2106 = vsub.f32 %v1784, %v2105
    %v2107 = vand.u32 %v2106, 4294901760
    %2108 = vmatmul.mubr.f32.gmra.mrb[0].mxu0 %v2107
    %v2109 = vpop.f32.mrb[0].mxu0
    %v2110 = vadd.f32 %v2033, %v2109
    %v2111 = vpop.f32.mrb[0].mxu0
    %2112 = vdwg.mxu0
    %2113 = vmatprep.subr.mxu0 0.0
    %v2114 = vand.u32 %v98, 4294901760
    %v2115 = vsub.f32 %v98, %v2114
    %v2116 = vand.u32 %v2115, 4294901760
    %2117 = vmatpush1.msra.mxu0 %v2116
    %2118 = vmatprep.subr.mxu0 0.0
    %v2119 = vand.u32 %v99, 4294901760
    %v2120 = vsub.f32 %v99, %v2119
    %v2121 = vand.u32 %v2120, 4294901760
    %2122 = vmatpush1.msra.mxu0 %v2121
    %2123 = vmatprep.subr.mxu0 0.0
    %v2124 = vand.u32 %v100, 4294901760
    %v2125 = vsub.f32 %v100, %v2124
    %v2126 = vand.u32 %v2125, 4294901760
    %2127 = vmatpush1.msra.mxu0 %v2126
    %2128 = vmatprep.subr.mxu0 0.0
    %v2129 = vand.u32 %v101, 4294901760
    %v2130 = vsub.f32 %v101, %v2129
    %v2131 = vand.u32 %v2130, 4294901760
    %2132 = vmatpush1.msra.mxu0 %v2131
    %2133 = vmatprep.subr.mxu0 0.0
    %2134 = vmatpush1.msra.mxu0 0.0
    %2135 = vmatprep.subr.mxu0 0.0
    %2136 = vmatpush1.msra.mxu0 0.0
    %2137 = vmatprep.subr.mxu0 0.0
    %2138 = vmatpush1.msra.mxu0 0.0
    %2139 = vmatprep.subr.mxu0 0.0
    %2140 = vmatpush1.msra.mxu0 0.0
    %2141 = vmatprep.subr.mxu0 0.0
    %2142 = vmatpush1.msra.mxu0 0.0
    %2143 = vmatprep.subr.mxu0 0.0
    %2144 = vmatpush1.msra.mxu0 0.0
    %2145 = vmatprep.subr.mxu0 0.0
    %2146 = vmatpush1.msra.mxu0 0.0
    %2147 = vmatprep.subr.mxu0 0.0
    %2148 = vmatpush1.msra.mxu0 0.0
    %2149 = vmatprep.subr.mxu0 0.0
    %2150 = vmatpush1.msra.mxu0 0.0
    %2151 = vmatprep.subr.mxu0 0.0
    %2152 = vmatpush1.msra.mxu0 0.0
    %2153 = vmatprep.subr.mxu0 0.0
    %2154 = vmatpush1.msra.mxu0 0.0
    %2155 = vmatprep.subr.mxu0 0.0
    %2156 = vmatpush1.msra.mxu0 0.0
    %2157 = vmatprep.subr.mxu0 0.0
    %2158 = vmatpush1.msra.mxu0 0.0
    %2159 = vmatprep.subr.mxu0 0.0
    %2160 = vmatpush1.msra.mxu0 0.0
    %2161 = vmatprep.subr.mxu0 0.0
    %2162 = vmatpush1.msra.mxu0 0.0
    %2163 = vmatprep.subr.mxu0 0.0
    %2164 = vmatpush1.msra.mxu0 0.0
    %2165 = vmatprep.subr.mxu0 0.0
    %2166 = vmatpush1.msra.mxu0 0.0
    %2167 = vmatprep.subr.mxu0 0.0
    %2168 = vmatpush1.msra.mxu0 0.0
    %2169 = vmatprep.subr.mxu0 0.0
    %2170 = vmatpush1.msra.mxu0 0.0
    %2171 = vmatprep.subr.mxu0 0.0
    %2172 = vmatpush1.msra.mxu0 0.0
    %2173 = vmatprep.subr.mxu0 0.0
    %2174 = vmatpush1.msra.mxu0 0.0
    %2175 = vmatprep.subr.mxu0 0.0
    %2176 = vmatpush1.msra.mxu0 0.0
    %2177 = vmatprep.subr.mxu0 0.0
    %2178 = vmatpush1.msra.mxu0 0.0
    %2179 = vmatprep.subr.mxu0 0.0
    %2180 = vmatpush1.msra.mxu0 0.0
    %2181 = vmatprep.subr.mxu0 0.0
    %2182 = vmatpush1.msra.mxu0 0.0
    %2183 = vmatprep.subr.mxu0 0.0
    %2184 = vmatpush1.msra.mxu0 0.0
    %2185 = vmatprep.subr.mxu0 0.0
    %2186 = vmatpush1.msra.mxu0 0.0
    %2187 = vmatprep.subr.mxu0 0.0
    %2188 = vmatpush1.msra.mxu0 0.0
    %2189 = vmatprep.mubr.f32.mxu0 0.0
    %v2190 = vand.u32 %v1784, 4294901760
    %2191 = vmatmul.mubr.f32.gmra.mrb[0].mxu0 %v2190
    %v2192 = vpop.f32.mrb[0].mxu0
    %v2193 = vadd.f32 %v2110, %v2192
    %v2194 = vpop.f32.mrb[0].mxu0
    %2195 = vdwg.mxu0
    %2196 = vmatprep.subr.mxu0 0.0
    %v2197 = vand.u32 %v98, 4294901760
    %2198 = vmatpush1.msra.mxu0 %v2197
    %2199 = vmatprep.subr.mxu0 0.0
    %v2200 = vand.u32 %v99, 4294901760
    %2201 = vmatpush1.msra.mxu0 %v2200
    %2202 = vmatprep.subr.mxu0 0.0
    %v2203 = vand.u32 %v100, 4294901760
    %2204 = vmatpush1.msra.mxu0 %v2203
    %2205 = vmatprep.subr.mxu0 0.0
    %v2206 = vand.u32 %v101, 4294901760
    %2207 = vmatpush1.msra.mxu0 %v2206
    %2208 = vmatprep.subr.mxu0 0.0
    %2209 = vmatpush1.msra.mxu0 0.0
    %2210 = vmatprep.subr.mxu0 0.0
    %2211 = vmatpush1.msra.mxu0 0.0
    %2212 = vmatprep.subr.mxu0 0.0
    %2213 = vmatpush1.msra.mxu0 0.0
    %2214 = vmatprep.subr.mxu0 0.0
    %2215 = vmatpush1.msra.mxu0 0.0
    %2216 = vmatprep.subr.mxu0 0.0
    %2217 = vmatpush1.msra.mxu0 0.0
    %2218 = vmatprep.subr.mxu0 0.0
    %2219 = vmatpush1.msra.mxu0 0.0
    %2220 = vmatprep.subr.mxu0 0.0
    %2221 = vmatpush1.msra.mxu0 0.0
    %2222 = vmatprep.subr.mxu0 0.0
    %2223 = vmatpush1.msra.mxu0 0.0
    %2224 = vmatprep.subr.mxu0 0.0
    %2225 = vmatpush1.msra.mxu0 0.0
    %2226 = vmatprep.subr.mxu0 0.0
    %2227 = vmatpush1.msra.mxu0 0.0
    %2228 = vmatprep.subr.mxu0 0.0
    %2229 = vmatpush1.msra.mxu0 0.0
    %2230 = vmatprep.subr.mxu0 0.0
    %2231 = vmatpush1.msra.mxu0 0.0
    %2232 = vmatprep.subr.mxu0 0.0
    %2233 = vmatpush1.msra.mxu0 0.0
    %2234 = vmatprep.subr.mxu0 0.0
    %2235 = vmatpush1.msra.mxu0 0.0
    %2236 = vmatprep.subr.mxu0 0.0
    %2237 = vmatpush1.msra.mxu0 0.0
    %2238 = vmatprep.subr.mxu0 0.0
    %2239 = vmatpush1.msra.mxu0 0.0
    %2240 = vmatprep.subr.mxu0 0.0
    %2241 = vmatpush1.msra.mxu0 0.0
    %2242 = vmatprep.subr.mxu0 0.0
    %2243 = vmatpush1.msra.mxu0 0.0
    %2244 = vmatprep.subr.mxu0 0.0
    %2245 = vmatpush1.msra.mxu0 0.0
    %2246 = vmatprep.subr.mxu0 0.0
    %2247 = vmatpush1.msra.mxu0 0.0
    %2248 = vmatprep.subr.mxu0 0.0
    %2249 = vmatpush1.msra.mxu0 0.0
    %2250 = vmatprep.subr.mxu0 0.0
    %2251 = vmatpush1.msra.mxu0 0.0
    %2252 = vmatprep.subr.mxu0 0.0
    %2253 = vmatpush1.msra.mxu0 0.0
    %2254 = vmatprep.subr.mxu0 0.0
    %2255 = vmatpush1.msra.mxu0 0.0
    %2256 = vmatprep.subr.mxu0 0.0
    %2257 = vmatpush1.msra.mxu0 0.0
    %2258 = vmatprep.subr.mxu0 0.0
    %2259 = vmatpush1.msra.mxu0 0.0
    %2260 = vmatprep.subr.mxu0 0.0
    %2261 = vmatpush1.msra.mxu0 0.0
    %2262 = vmatprep.subr.mxu0 0.0
    %2263 = vmatpush1.msra.mxu0 0.0
    %2264 = vmatprep.mubr.f32.mxu0 0.0
    %v2265 = vand.u32 %v1784, 4294901760
    %2266 = vmatmul.mubr.f32.gmra.mrb[0].mxu0 %v2265
    %v2267 = vpop.f32.mrb[0].mxu0
    %v2268 = vadd.f32 %v2193, %v2267
    %v2269 = vpop.f32.mrb[0].mxu0
    %2270 = vdwg.mxu0
    %v2271 = vadd.f32 %v165, %v2268
    %v2272 = vxor.u32 %v2271, 2147483648
    %v2273 = vmul.f32 %v2272, 1.442695
    %v2274 = vpow.pop %v2273
    %v2275 = vadd.f32 %v2274, 1.0
    %v2276 = vrcp.pop %v2275
    %v2277 = vmul.f32 1.0, %v2276
    %v2278 = vtanh.pop %v2271
    %v2279 = vmul.f32 %v2277, %v1772
    %2281 = vrot.lane.b32.xlu0 %v2278, 64
    %v2282 = vpop.permute.xlu0 %2281
    %v2284 = vmul.f32 %v2277, %v2282
    %2286 = vrot.lane.b32.xlu0 %v2284, 32
    %v2287 = vpop.permute.xlu0 %2286
    %v2289 = vadd.f32 %v2279, %v2287
    %v2290 = vtanh.pop %v2289
    %2292 = vrot.lane.b32.xlu0 %v2290, 64
    %v2293 = vpop.permute.xlu0 %2292
    %v2295 = vmul.f32 %v2277, %v2293
    %2297 = vrot.lane.b32.xlu0 %v2295, 32
    %v2298 = vpop.permute.xlu0 %2297
    %2300 = vst.msk [vmem:[#allocation2 + $0x3] sm:$0x1] %vm748, %v2298
    %v2301 = vsel %vm230, %v2298, 0
    %2303 = vmatprep.subr.mxu0 0.0
    %v2304 = vand.u32 %v98, 4294901760
    %2305 = vmatpush1.msra.mxu0 %v2304
    %2306 = vmatprep.subr.mxu0 0.0
    %v2307 = vand.u32 %v99, 4294901760
    %2308 = vmatpush1.msra.mxu0 %v2307
    %2309 = vmatprep.subr.mxu0 0.0
    %v2310 = vand.u32 %v100, 4294901760
    %2311 = vmatpush1.msra.mxu0 %v2310
    %2312 = vmatprep.subr.mxu0 0.0
    %v2313 = vand.u32 %v101, 4294901760
    %2314 = vmatpush1.msra.mxu0 %v2313
    %2315 = vmatprep.subr.mxu0 0.0
    %2316 = vmatpush1.msra.mxu0 0.0
    %2317 = vmatprep.subr.mxu0 0.0
    %2318 = vmatpush1.msra.mxu0 0.0
    %2319 = vmatprep.subr.mxu0 0.0
    %2320 = vmatpush1.msra.mxu0 0.0
    %2321 = vmatprep.subr.mxu0 0.0
    %2322 = vmatpush1.msra.mxu0 0.0
    %2323 = vmatprep.subr.mxu0 0.0
    %2324 = vmatpush1.msra.mxu0 0.0
    %2325 = vmatprep.subr.mxu0 0.0
    %2326 = vmatpush1.msra.mxu0 0.0
    %2327 = vmatprep.subr.mxu0 0.0
    %2328 = vmatpush1.msra.mxu0 0.0
    %2329 = vmatprep.subr.mxu0 0.0
    %2330 = vmatpush1.msra.mxu0 0.0
    %2331 = vmatprep.subr.mxu0 0.0
    %2332 = vmatpush1.msra.mxu0 0.0
    %2333 = vmatprep.subr.mxu0 0.0
    %2334 = vmatpush1.msra.mxu0 0.0
    %2335 = vmatprep.subr.mxu0 0.0
    %2336 = vmatpush1.msra.mxu0 0.0
    %2337 = vmatprep.subr.mxu0 0.0
    %2338 = vmatpush1.msra.mxu0 0.0
    %2339 = vmatprep.subr.mxu0 0.0
    %2340 = vmatpush1.msra.mxu0 0.0
    %2341 = vmatprep.subr.mxu0 0.0
    %2342 = vmatpush1.msra.mxu0 0.0
    %2343 = vmatprep.subr.mxu0 0.0
    %2344 = vmatpush1.msra.mxu0 0.0
    %2345 = vmatprep.subr.mxu0 0.0
    %2346 = vmatpush1.msra.mxu0 0.0
    %2347 = vmatprep.subr.mxu0 0.0
    %2348 = vmatpush1.msra.mxu0 0.0
    %2349 = vmatprep.subr.mxu0 0.0
    %2350 = vmatpush1.msra.mxu0 0.0
    %2351 = vmatprep.subr.mxu0 0.0
    %2352 = vmatpush1.msra.mxu0 0.0
    %2353 = vmatprep.subr.mxu0 0.0
    %2354 = vmatpush1.msra.mxu0 0.0
    %2355 = vmatprep.subr.mxu0 0.0
    %2356 = vmatpush1.msra.mxu0 0.0
    %2357 = vmatprep.subr.mxu0 0.0
    %2358 = vmatpush1.msra.mxu0 0.0
    %2359 = vmatprep.subr.mxu0 0.0
    %2360 = vmatpush1.msra.mxu0 0.0
    %2361 = vmatprep.subr.mxu0 0.0
    %2362 = vmatpush1.msra.mxu0 0.0
    %2363 = vmatprep.subr.mxu0 0.0
    %2364 = vmatpush1.msra.mxu0 0.0
    %2365 = vmatprep.subr.mxu0 0.0
    %2366 = vmatpush1.msra.mxu0 0.0
    %2367 = vmatprep.subr.mxu0 0.0
    %2368 = vmatpush1.msra.mxu0 0.0
    %2369 = vmatprep.subr.mxu0 0.0
    %2370 = vmatpush1.msra.mxu0 0.0
    %2371 = vmatprep.mubr.f32.mxu0 0.0
    %v2372 = vand.u32 %v2301, 4294901760
    %v2373 = vsub.f32 %v2301, %v2372
    %v2374 = vand.u32 %v2373, 4294901760
    %v2375 = vsub.f32 %v2373, %v2374
    %v2376 = vand.u32 %v2375, 4294901760
    %2377 = vmatmul.mubr.f32.gmra.mrb[0].mxu0 %v2376
    %v2378 = vpop.f32.mrb[0].mxu0
    %v2379 = vadd.f32 0.0, %v2378
    %v2380 = vpop.f32.mrb[0].mxu0
    %2381 = vdwg.mxu0
    %2382 = vmatprep.subr.mxu0 0.0
    %v2383 = vand.u32 %v98, 4294901760
    %v2384 = vsub.f32 %v98, %v2383
    %v2385 = vand.u32 %v2384, 4294901760
    %v2386 = vsub.f32 %v2384, %v2385
    %v2387 = vand.u32 %v2386, 4294901760
    %2388 = vmatpush1.msra.mxu0 %v2387
    %2389 = vmatprep.subr.mxu0 0.0
    %v2390 = vand.u32 %v99, 4294901760
    %v2391 = vsub.f32 %v99, %v2390
    %v2392 = vand.u32 %v2391, 4294901760
    %v2393 = vsub.f32 %v2391, %v2392
    %v2394 = vand.u32 %v2393, 4294901760
    %2395 = vmatpush1.msra.mxu0 %v2394
    %2396 = vmatprep.subr.mxu0 0.0
    %v2397 = vand.u32 %v100, 4294901760
    %v2398 = vsub.f32 %v100, %v2397
    %v2399 = vand.u32 %v2398, 4294901760
    %v2400 = vsub.f32 %v2398, %v2399
    %v2401 = vand.u32 %v2400, 4294901760
    %2402 = vmatpush1.msra.mxu0 %v2401
    %2403 = vmatprep.subr.mxu0 0.0
    %v2404 = vand.u32 %v101, 4294901760
    %v2405 = vsub.f32 %v101, %v2404
    %v2406 = vand.u32 %v2405, 4294901760
    %v2407 = vsub.f32 %v2405, %v2406
    %v2408 = vand.u32 %v2407, 4294901760
    %2409 = vmatpush1.msra.mxu0 %v2408
    %2410 = vmatprep.subr.mxu0 0.0
    %2411 = vmatpush1.msra.mxu0 0.0
    %2412 = vmatprep.subr.mxu0 0.0
    %2413 = vmatpush1.msra.mxu0 0.0
    %2414 = vmatprep.subr.mxu0 0.0
    %2415 = vmatpush1.msra.mxu0 0.0
    %2416 = vmatprep.subr.mxu0 0.0
    %2417 = vmatpush1.msra.mxu0 0.0
    %2418 = vmatprep.subr.mxu0 0.0
    %2419 = vmatpush1.msra.mxu0 0.0
    %2420 = vmatprep.subr.mxu0 0.0
    %2421 = vmatpush1.msra.mxu0 0.0
    %2422 = vmatprep.subr.mxu0 0.0
    %2423 = vmatpush1.msra.mxu0 0.0
    %2424 = vmatprep.subr.mxu0 0.0
    %2425 = vmatpush1.msra.mxu0 0.0
    %2426 = vmatprep.subr.mxu0 0.0
    %2427 = vmatpush1.msra.mxu0 0.0
    %2428 = vmatprep.subr.mxu0 0.0
    %2429 = vmatpush1.msra.mxu0 0.0
    %2430 = vmatprep.subr.mxu0 0.0
    %2431 = vmatpush1.msra.mxu0 0.0
    %2432 = vmatprep.subr.mxu0 0.0
    %2433 = vmatpush1.msra.mxu0 0.0
    %2434 = vmatprep.subr.mxu0 0.0
    %2435 = vmatpush1.msra.mxu0 0.0
    %2436 = vmatprep.subr.mxu0 0.0
    %2437 = vmatpush1.msra.mxu0 0.0
    %2438 = vmatprep.subr.mxu0 0.0
    %2439 = vmatpush1.msra.mxu0 0.0
    %2440 = vmatprep.subr.mxu0 0.0
    %2441 = vmatpush1.msra.mxu0 0.0
    %2442 = vmatprep.subr.mxu0 0.0
    %2443 = vmatpush1.msra.mxu0 0.0
    %2444 = vmatprep.subr.mxu0 0.0
    %2445 = vmatpush1.msra.mxu0 0.0
    %2446 = vmatprep.subr.mxu0 0.0
    %2447 = vmatpush1.msra.mxu0 0.0
    %2448 = vmatprep.subr.mxu0 0.0
    %2449 = vmatpush1.msra.mxu0 0.0
    %2450 = vmatprep.subr.mxu0 0.0
    %2451 = vmatpush1.msra.mxu0 0.0
    %2452 = vmatprep.subr.mxu0 0.0
    %2453 = vmatpush1.msra.mxu0 0.0
    %2454 = vmatprep.subr.mxu0 0.0
    %2455 = vmatpush1.msra.mxu0 0.0
    %2456 = vmatprep.subr.mxu0 0.0
    %2457 = vmatpush1.msra.mxu0 0.0
    %2458 = vmatprep.subr.mxu0 0.0
    %2459 = vmatpush1.msra.mxu0 0.0
    %2460 = vmatprep.subr.mxu0 0.0
    %2461 = vmatpush1.msra.mxu0 0.0
    %2462 = vmatprep.subr.mxu0 0.0
    %2463 = vmatpush1.msra.mxu0 0.0
    %2464 = vmatprep.subr.mxu0 0.0
    %2465 = vmatpush1.msra.mxu0 0.0
    %2466 = vmatprep.mubr.f32.mxu0 0.0
    %v2467 = vand.u32 %v2301, 4294901760
    %2468 = vmatmul.mubr.f32.gmra.mrb[0].mxu0 %v2467
    %v2469 = vpop.f32.mrb[0].mxu0
    %v2470 = vadd.f32 %v2379, %v2469
    %v2471 = vpop.f32.mrb[0].mxu0
    %2472 = vdwg.mxu0
    %2473 = vmatprep.subr.mxu0 0.0
    %v2474 = vand.u32 %v98, 4294901760
    %v2475 = vsub.f32 %v98, %v2474
    %2476 = vmatpush1.msra.mxu0 %v2475
    %2477 = vmatprep.subr.mxu0 0.0
    %v2478 = vand.u32 %v99, 4294901760
    %v2479 = vsub.f32 %v99, %v2478
    %2480 = vmatpush1.msra.mxu0 %v2479
    %2481 = vmatprep.subr.mxu0 0.0
    %v2482 = vand.u32 %v100, 4294901760
    %v2483 = vsub.f32 %v100, %v2482
    %2484 = vmatpush1.msra.mxu0 %v2483
    %2485 = vmatprep.subr.mxu0 0.0
    %v2486 = vand.u32 %v101, 4294901760
    %v2487 = vsub.f32 %v101, %v2486
    %2488 = vmatpush1.msra.mxu0 %v2487
    %2489 = vmatprep.subr.mxu0 0.0
    %2490 = vmatpush1.msra.mxu0 0.0
    %2491 = vmatprep.subr.mxu0 0.0
    %2492 = vmatpush1.msra.mxu0 0.0
    %2493 = vmatprep.subr.mxu0 0.0
    %2494 = vmatpush1.msra.mxu0 0.0
    %2495 = vmatprep.subr.mxu0 0.0
    %2496 = vmatpush1.msra.mxu0 0.0
    %2497 = vmatprep.subr.mxu0 0.0
    %2498 = vmatpush1.msra.mxu0 0.0
    %2499 = vmatprep.subr.mxu0 0.0
    %2500 = vmatpush1.msra.mxu0 0.0
    %2501 = vmatprep.subr.mxu0 0.0
    %2502 = vmatpush1.msra.mxu0 0.0
    %2503 = vmatprep.subr.mxu0 0.0
    %2504 = vmatpush1.msra.mxu0 0.0
    %2505 = vmatprep.subr.mxu0 0.0
    %2506 = vmatpush1.msra.mxu0 0.0
    %2507 = vmatprep.subr.mxu0 0.0
    %2508 = vmatpush1.msra.mxu0 0.0
    %2509 = vmatprep.subr.mxu0 0.0
    %2510 = vmatpush1.msra.mxu0 0.0
    %2511 = vmatprep.subr.mxu0 0.0
    %2512 = vmatpush1.msra.mxu0 0.0
    %2513 = vmatprep.subr.mxu0 0.0
    %2514 = vmatpush1.msra.mxu0 0.0
    %2515 = vmatprep.subr.mxu0 0.0
    %2516 = vmatpush1.msra.mxu0 0.0
    %2517 = vmatprep.subr.mxu0 0.0
    %2518 = vmatpush1.msra.mxu0 0.0
    %2519 = vmatprep.subr.mxu0 0.0
    %2520 = vmatpush1.msra.mxu0 0.0
    %2521 = vmatprep.subr.mxu0 0.0
    %2522 = vmatpush1.msra.mxu0 0.0
    %2523 = vmatprep.subr.mxu0 0.0
    %2524 = vmatpush1.msra.mxu0 0.0
    %2525 = vmatprep.subr.mxu0 0.0
    %2526 = vmatpush1.msra.mxu0 0.0
    %2527 = vmatprep.subr.mxu0 0.0
    %2528 = vmatpush1.msra.mxu0 0.0
    %2529 = vmatprep.subr.mxu0 0.0
    %2530 = vmatpush1.msra.mxu0 0.0
    %2531 = vmatprep.subr.mxu0 0.0
    %2532 = vmatpush1.msra.mxu0 0.0
    %2533 = vmatprep.subr.mxu0 0.0
    %2534 = vmatpush1.msra.mxu0 0.0
    %2535 = vmatprep.subr.mxu0 0.0
    %2536 = vmatpush1.msra.mxu0 0.0
    %2537 = vmatprep.subr.mxu0 0.0
    %2538 = vmatpush1.msra.mxu0 0.0
    %2539 = vmatprep.subr.mxu0 0.0
    %2540 = vmatpush1.msra.mxu0 0.0
    %2541 = vmatprep.subr.mxu0 0.0
    %2542 = vmatpush1.msra.mxu0 0.0
    %2543 = vmatprep.subr.mxu0 0.0
    %2544 = vmatpush1.msra.mxu0 0.0
    %2545 = vmatprep.mubr.f32.mxu0 0.0
    %v2546 = vand.u32 %v2301, 4294901760
    %v2547 = vsub.f32 %v2301, %v2546
    %2548 = vmatmul.mubr.f32.gmra.mrb[0].mxu0 %v2547
    %v2549 = vpop.f32.mrb[0].mxu0
    %v2550 = vadd.f32 %v2470, %v2549
    %v2551 = vpop.f32.mrb[0].mxu0
    %2552 = vdwg.mxu0
    %2553 = vmatprep.subr.mxu0 0.0
    %v2554 = vand.u32 %v98, 4294901760
    %2555 = vmatpush1.msra.mxu0 %v2554
    %2556 = vmatprep.subr.mxu0 0.0
    %v2557 = vand.u32 %v99, 4294901760
    %2558 = vmatpush1.msra.mxu0 %v2557
    %2559 = vmatprep.subr.mxu0 0.0
    %v2560 = vand.u32 %v100, 4294901760
    %2561 = vmatpush1.msra.mxu0 %v2560
    %2562 = vmatprep.subr.mxu0 0.0
    %v2563 = vand.u32 %v101, 4294901760
    %2564 = vmatpush1.msra.mxu0 %v2563
    %2565 = vmatprep.subr.mxu0 0.0
    %2566 = vmatpush1.msra.mxu0 0.0
    %2567 = vmatprep.subr.mxu0 0.0
    %2568 = vmatpush1.msra.mxu0 0.0
    %2569 = vmatprep.subr.mxu0 0.0
    %2570 = vmatpush1.msra.mxu0 0.0
    %2571 = vmatprep.subr.mxu0 0.0
    %2572 = vmatpush1.msra.mxu0 0.0
    %2573 = vmatprep.subr.mxu0 0.0
    %2574 = vmatpush1.msra.mxu0 0.0
    %2575 = vmatprep.subr.mxu0 0.0
    %2576 = vmatpush1.msra.mxu0 0.0
    %2577 = vmatprep.subr.mxu0 0.0
    %2578 = vmatpush1.msra.mxu0 0.0
    %2579 = vmatprep.subr.mxu0 0.0
    %2580 = vmatpush1.msra.mxu0 0.0
    %2581 = vmatprep.subr.mxu0 0.0
    %2582 = vmatpush1.msra.mxu0 0.0
    %2583 = vmatprep.subr.mxu0 0.0
    %2584 = vmatpush1.msra.mxu0 0.0
    %2585 = vmatprep.subr.mxu0 0.0
    %2586 = vmatpush1.msra.mxu0 0.0
    %2587 = vmatprep.subr.mxu0 0.0
    %2588 = vmatpush1.msra.mxu0 0.0
    %2589 = vmatprep.subr.mxu0 0.0
    %2590 = vmatpush1.msra.mxu0 0.0
    %2591 = vmatprep.subr.mxu0 0.0
    %2592 = vmatpush1.msra.mxu0 0.0
    %2593 = vmatprep.subr.mxu0 0.0
    %2594 = vmatpush1.msra.mxu0 0.0
    %2595 = vmatprep.subr.mxu0 0.0
    %2596 = vmatpush1.msra.mxu0 0.0
    %2597 = vmatprep.subr.mxu0 0.0
    %2598 = vmatpush1.msra.mxu0 0.0
    %2599 = vmatprep.subr.mxu0 0.0
    %2600 = vmatpush1.msra.mxu0 0.0
    %2601 = vmatprep.subr.mxu0 0.0
    %2602 = vmatpush1.msra.mxu0 0.0
    %2603 = vmatprep.subr.mxu0 0.0
    %2604 = vmatpush1.msra.mxu0 0.0
    %2605 = vmatprep.subr.mxu0 0.0
    %2606 = vmatpush1.msra.mxu0 0.0
    %2607 = vmatprep.subr.mxu0 0.0
    %2608 = vmatpush1.msra.mxu0 0.0
    %2609 = vmatprep.subr.mxu0 0.0
    %2610 = vmatpush1.msra.mxu0 0.0
    %2611 = vmatprep.subr.mxu0 0.0
    %2612 = vmatpush1.msra.mxu0 0.0
    %2613 = vmatprep.subr.mxu0 0.0
    %2614 = vmatpush1.msra.mxu0 0.0
    %2615 = vmatprep.subr.mxu0 0.0
    %2616 = vmatpush1.msra.mxu0 0.0
    %2617 = vmatprep.subr.mxu0 0.0
    %2618 = vmatpush1.msra.mxu0 0.0
    %2619 = vmatprep.subr.mxu0 0.0
    %2620 = vmatpush1.msra.mxu0 0.0
    %2621 = vmatprep.mubr.f32.mxu0 0.0
    %v2622 = vand.u32 %v2301, 4294901760
    %v2623 = vsub.f32 %v2301, %v2622
    %v2624 = vand.u32 %v2623, 4294901760
    %2625 = vmatmul.mubr.f32.gmra.mrb[0].mxu0 %v2624
    %v2626 = vpop.f32.mrb[0].mxu0
    %v2627 = vadd.f32 %v2550, %v2626
    %v2628 = vpop.f32.mrb[0].mxu0
    %2629 = vdwg.mxu0
    %2630 = vmatprep.subr.mxu0 0.0
    %v2631 = vand.u32 %v98, 4294901760
    %v2632 = vsub.f32 %v98, %v2631
    %v2633 = vand.u32 %v2632, 4294901760
    %2634 = vmatpush1.msra.mxu0 %v2633
    %2635 = vmatprep.subr.mxu0 0.0
    %v2636 = vand.u32 %v99, 4294901760
    %v2637 = vsub.f32 %v99, %v2636
    %v2638 = vand.u32 %v2637, 4294901760
    %2639 = vmatpush1.msra.mxu0 %v2638
    %2640 = vmatprep.subr.mxu0 0.0
    %v2641 = vand.u32 %v100, 4294901760
    %v2642 = vsub.f32 %v100, %v2641
    %v2643 = vand.u32 %v2642, 4294901760
    %2644 = vmatpush1.msra.mxu0 %v2643
    %2645 = vmatprep.subr.mxu0 0.0
    %v2646 = vand.u32 %v101, 4294901760
    %v2647 = vsub.f32 %v101, %v2646
    %v2648 = vand.u32 %v2647, 4294901760
    %2649 = vmatpush1.msra.mxu0 %v2648
    %2650 = vmatprep.subr.mxu0 0.0
    %2651 = vmatpush1.msra.mxu0 0.0
    %2652 = vmatprep.subr.mxu0 0.0
    %2653 = vmatpush1.msra.mxu0 0.0
    %2654 = vmatprep.subr.mxu0 0.0
    %2655 = vmatpush1.msra.mxu0 0.0
    %2656 = vmatprep.subr.mxu0 0.0
    %2657 = vmatpush1.msra.mxu0 0.0
    %2658 = vmatprep.subr.mxu0 0.0
    %2659 = vmatpush1.msra.mxu0 0.0
    %2660 = vmatprep.subr.mxu0 0.0
    %2661 = vmatpush1.msra.mxu0 0.0
    %2662 = vmatprep.subr.mxu0 0.0
    %2663 = vmatpush1.msra.mxu0 0.0
    %2664 = vmatprep.subr.mxu0 0.0
    %2665 = vmatpush1.msra.mxu0 0.0
    %2666 = vmatprep.subr.mxu0 0.0
    %2667 = vmatpush1.msra.mxu0 0.0
    %2668 = vmatprep.subr.mxu0 0.0
    %2669 = vmatpush1.msra.mxu0 0.0
    %2670 = vmatprep.subr.mxu0 0.0
    %2671 = vmatpush1.msra.mxu0 0.0
    %2672 = vmatprep.subr.mxu0 0.0
    %2673 = vmatpush1.msra.mxu0 0.0
    %2674 = vmatprep.subr.mxu0 0.0
    %2675 = vmatpush1.msra.mxu0 0.0
    %2676 = vmatprep.subr.mxu0 0.0
    %2677 = vmatpush1.msra.mxu0 0.0
    %2678 = vmatprep.subr.mxu0 0.0
    %2679 = vmatpush1.msra.mxu0 0.0
    %2680 = vmatprep.subr.mxu0 0.0
    %2681 = vmatpush1.msra.mxu0 0.0
    %2682 = vmatprep.subr.mxu0 0.0
    %2683 = vmatpush1.msra.mxu0 0.0
    %2684 = vmatprep.subr.mxu0 0.0
    %2685 = vmatpush1.msra.mxu0 0.0
    %2686 = vmatprep.subr.mxu0 0.0
    %2687 = vmatpush1.msra.mxu0 0.0
    %2688 = vmatprep.subr.mxu0 0.0
    %2689 = vmatpush1.msra.mxu0 0.0
    %2690 = vmatprep.subr.mxu0 0.0
    %2691 = vmatpush1.msra.mxu0 0.0
    %2692 = vmatprep.subr.mxu0 0.0
    %2693 = vmatpush1.msra.mxu0 0.0
    %2694 = vmatprep.subr.mxu0 0.0
    %2695 = vmatpush1.msra.mxu0 0.0
    %2696 = vmatprep.subr.mxu0 0.0
    %2697 = vmatpush1.msra.mxu0 0.0
    %2698 = vmatprep.subr.mxu0 0.0
    %2699 = vmatpush1.msra.mxu0 0.0
    %2700 = vmatprep.subr.mxu0 0.0
    %2701 = vmatpush1.msra.mxu0 0.0
    %2702 = vmatprep.subr.mxu0 0.0
    %2703 = vmatpush1.msra.mxu0 0.0
    %2704 = vmatprep.subr.mxu0 0.0
    %2705 = vmatpush1.msra.mxu0 0.0
    %2706 = vmatprep.mubr.f32.mxu0 0.0
    %v2707 = vand.u32 %v2301, 4294901760
    %2708 = vmatmul.mubr.f32.gmra.mrb[0].mxu0 %v2707
    %v2709 = vpop.f32.mrb[0].mxu0
    %v2710 = vadd.f32 %v2627, %v2709
    %v2711 = vpop.f32.mrb[0].mxu0
    %2712 = vdwg.mxu0
    %2713 = vmatprep.subr.mxu0 0.0
    %v2714 = vand.u32 %v98, 4294901760
    %2715 = vmatpush1.msra.mxu0 %v2714
    %2716 = vmatprep.subr.mxu0 0.0
    %v2717 = vand.u32 %v99, 4294901760
    %2718 = vmatpush1.msra.mxu0 %v2717
    %2719 = vmatprep.subr.mxu0 0.0
    %v2720 = vand.u32 %v100, 4294901760
    %2721 = vmatpush1.msra.mxu0 %v2720
    %2722 = vmatprep.subr.mxu0 0.0
    %v2723 = vand.u32 %v101, 4294901760
    %2724 = vmatpush1.msra.mxu0 %v2723
    %2725 = vmatprep.subr.mxu0 0.0
    %2726 = vmatpush1.msra.mxu0 0.0
    %2727 = vmatprep.subr.mxu0 0.0
    %2728 = vmatpush1.msra.mxu0 0.0
    %2729 = vmatprep.subr.mxu0 0.0
    %2730 = vmatpush1.msra.mxu0 0.0
    %2731 = vmatprep.subr.mxu0 0.0
    %2732 = vmatpush1.msra.mxu0 0.0
    %2733 = vmatprep.subr.mxu0 0.0
    %2734 = vmatpush1.msra.mxu0 0.0
    %2735 = vmatprep.subr.mxu0 0.0
    %2736 = vmatpush1.msra.mxu0 0.0
    %2737 = vmatprep.subr.mxu0 0.0
    %2738 = vmatpush1.msra.mxu0 0.0
    %2739 = vmatprep.subr.mxu0 0.0
    %2740 = vmatpush1.msra.mxu0 0.0
    %2741 = vmatprep.subr.mxu0 0.0
    %2742 = vmatpush1.msra.mxu0 0.0
    %2743 = vmatprep.subr.mxu0 0.0
    %2744 = vmatpush1.msra.mxu0 0.0
    %2745 = vmatprep.subr.mxu0 0.0
    %2746 = vmatpush1.msra.mxu0 0.0
    %2747 = vmatprep.subr.mxu0 0.0
    %2748 = vmatpush1.msra.mxu0 0.0
    %2749 = vmatprep.subr.mxu0 0.0
    %2750 = vmatpush1.msra.mxu0 0.0
    %2751 = vmatprep.subr.mxu0 0.0
    %2752 = vmatpush1.msra.mxu0 0.0
    %2753 = vmatprep.subr.mxu0 0.0
    %2754 = vmatpush1.msra.mxu0 0.0
    %2755 = vmatprep.subr.mxu0 0.0
    %2756 = vmatpush1.msra.mxu0 0.0
    %2757 = vmatprep.subr.mxu0 0.0
    %2758 = vmatpush1.msra.mxu0 0.0
    %2759 = vmatprep.subr.mxu0 0.0
    %2760 = vmatpush1.msra.mxu0 0.0
    %2761 = vmatprep.subr.mxu0 0.0
    %2762 = vmatpush1.msra.mxu0 0.0
    %2763 = vmatprep.subr.mxu0 0.0
    %2764 = vmatpush1.msra.mxu0 0.0
    %2765 = vmatprep.subr.mxu0 0.0
    %2766 = vmatpush1.msra.mxu0 0.0
    %2767 = vmatprep.subr.mxu0 0.0
    %2768 = vmatpush1.msra.mxu0 0.0
    %2769 = vmatprep.subr.mxu0 0.0
    %2770 = vmatpush1.msra.mxu0 0.0
    %2771 = vmatprep.subr.mxu0 0.0
    %2772 = vmatpush1.msra.mxu0 0.0
    %2773 = vmatprep.subr.mxu0 0.0
    %2774 = vmatpush1.msra.mxu0 0.0
    %2775 = vmatprep.subr.mxu0 0.0
    %2776 = vmatpush1.msra.mxu0 0.0
    %2777 = vmatprep.subr.mxu0 0.0
    %2778 = vmatpush1.msra.mxu0 0.0
    %2779 = vmatprep.subr.mxu0 0.0
    %2780 = vmatpush1.msra.mxu0 0.0
    %2781 = vmatprep.mubr.f32.mxu0 0.0
    %v2782 = vand.u32 %v2301, 4294901760
    %2783 = vmatmul.mubr.f32.gmra.mrb[0].mxu0 %v2782
    %v2784 = vpop.f32.mrb[0].mxu0
    %v2785 = vadd.f32 %v2710, %v2784
    %v2786 = vpop.f32.mrb[0].mxu0
    %2787 = vdwg.mxu0
    %v2788 = vadd.f32 %v181, %v2785
    %v2789 = vxor.u32 %v2788, 2147483648
    %v2790 = vmul.f32 %v2789, 1.442695
    %v2791 = vpow.pop %v2790
    %v2792 = vadd.f32 %v2791, 1.0
    %v2793 = vrcp.pop %v2792
    %v2794 = vmul.f32 1.0, %v2793
    %v2795 = vtanh.pop %v2788
    %v2796 = vmul.f32 %v2794, %v2289
    %2798 = vrot.lane.b32.xlu0 %v2795, 64
    %v2799 = vpop.permute.xlu0 %2798
    %v2801 = vmul.f32 %v2794, %v2799
    %2803 = vrot.lane.b32.xlu0 %v2801, 32
    %v2804 = vpop.permute.xlu0 %2803
    %v2806 = vadd.f32 %v2796, %v2804
    %v2807 = vtanh.pop %v2806
    %2809 = vrot.lane.b32.xlu0 %v2807, 64
    %v2810 = vpop.permute.xlu0 %2809
    %v2812 = vmul.f32 %v2794, %v2810
    %2814 = vrot.lane.b32.xlu0 %v2812, 32
    %v2815 = vpop.permute.xlu0 %2814
    %2817 = vst.msk [vmem:[#allocation2 + $0x4] sm:$0x1] %vm748, %v2815
    %v2818 = vsel %vm230, %v2815, 0
    %2820 = vmatprep.subr.mxu0 0.0
    %v2821 = vand.u32 %v98, 4294901760
    %2822 = vmatpush1.msra.mxu0 %v2821
    %2823 = vmatprep.subr.mxu0 0.0
    %v2824 = vand.u32 %v99, 4294901760
    %2825 = vmatpush1.msra.mxu0 %v2824
    %2826 = vmatprep.subr.mxu0 0.0
    %v2827 = vand.u32 %v100, 4294901760
    %2828 = vmatpush1.msra.mxu0 %v2827
    %2829 = vmatprep.subr.mxu0 0.0
    %v2830 = vand.u32 %v101, 4294901760
    %2831 = vmatpush1.msra.mxu0 %v2830
    %2832 = vmatprep.subr.mxu0 0.0
    %2833 = vmatpush1.msra.mxu0 0.0
    %2834 = vmatprep.subr.mxu0 0.0
    %2835 = vmatpush1.msra.mxu0 0.0
    %2836 = vmatprep.subr.mxu0 0.0
    %2837 = vmatpush1.msra.mxu0 0.0
    %2838 = vmatprep.subr.mxu0 0.0
    %2839 = vmatpush1.msra.mxu0 0.0
    %2840 = vmatprep.subr.mxu0 0.0
    %2841 = vmatpush1.msra.mxu0 0.0
    %2842 = vmatprep.subr.mxu0 0.0
    %2843 = vmatpush1.msra.mxu0 0.0
    %2844 = vmatprep.subr.mxu0 0.0
    %2845 = vmatpush1.msra.mxu0 0.0
    %2846 = vmatprep.subr.mxu0 0.0
    %2847 = vmatpush1.msra.mxu0 0.0
    %2848 = vmatprep.subr.mxu0 0.0
    %2849 = vmatpush1.msra.mxu0 0.0
    %2850 = vmatprep.subr.mxu0 0.0
    %2851 = vmatpush1.msra.mxu0 0.0
    %2852 = vmatprep.subr.mxu0 0.0
    %2853 = vmatpush1.msra.mxu0 0.0
    %2854 = vmatprep.subr.mxu0 0.0
    %2855 = vmatpush1.msra.mxu0 0.0
    %2856 = vmatprep.subr.mxu0 0.0
    %2857 = vmatpush1.msra.mxu0 0.0
    %2858 = vmatprep.subr.mxu0 0.0
    %2859 = vmatpush1.msra.mxu0 0.0
    %2860 = vmatprep.subr.mxu0 0.0
    %2861 = vmatpush1.msra.mxu0 0.0
    %2862 = vmatprep.subr.mxu0 0.0
    %2863 = vmatpush1.msra.mxu0 0.0
    %2864 = vmatprep.subr.mxu0 0.0
    %2865 = vmatpush1.msra.mxu0 0.0
    %2866 = vmatprep.subr.mxu0 0.0
    %2867 = vmatpush1.msra.mxu0 0.0
    %2868 = vmatprep.subr.mxu0 0.0
    %2869 = vmatpush1.msra.mxu0 0.0
    %2870 = vmatprep.subr.mxu0 0.0
    %2871 = vmatpush1.msra.mxu0 0.0
    %2872 = vmatprep.subr.mxu0 0.0
    %2873 = vmatpush1.msra.mxu0 0.0
    %2874 = vmatprep.subr.mxu0 0.0
    %2875 = vmatpush1.msra.mxu0 0.0
    %2876 = vmatprep.subr.mxu0 0.0
    %2877 = vmatpush1.msra.mxu0 0.0
    %2878 = vmatprep.subr.mxu0 0.0
    %2879 = vmatpush1.msra.mxu0 0.0
    %2880 = vmatprep.subr.mxu0 0.0
    %2881 = vmatpush1.msra.mxu0 0.0
    %2882 = vmatprep.subr.mxu0 0.0
    %2883 = vmatpush1.msra.mxu0 0.0
    %2884 = vmatprep.subr.mxu0 0.0
    %2885 = vmatpush1.msra.mxu0 0.0
    %2886 = vmatprep.subr.mxu0 0.0
    %2887 = vmatpush1.msra.mxu0 0.0
    %2888 = vmatprep.mubr.f32.mxu0 0.0
    %v2889 = vand.u32 %v2818, 4294901760
    %v2890 = vsub.f32 %v2818, %v2889
    %v2891 = vand.u32 %v2890, 4294901760
    %v2892 = vsub.f32 %v2890, %v2891
    %v2893 = vand.u32 %v2892, 4294901760
    %2894 = vmatmul.mubr.f32.gmra.mrb[0].mxu0 %v2893
    %v2895 = vpop.f32.mrb[0].mxu0
    %v2896 = vadd.f32 0.0, %v2895
    %v2897 = vpop.f32.mrb[0].mxu0
    %2898 = vdwg.mxu0
    %2899 = vmatprep.subr.mxu0 0.0
    %v2900 = vand.u32 %v98, 4294901760
    %v2901 = vsub.f32 %v98, %v2900
    %v2902 = vand.u32 %v2901, 4294901760
    %v2903 = vsub.f32 %v2901, %v2902
    %v2904 = vand.u32 %v2903, 4294901760
    %2905 = vmatpush1.msra.mxu0 %v2904
    %2906 = vmatprep.subr.mxu0 0.0
    %v2907 = vand.u32 %v99, 4294901760
    %v2908 = vsub.f32 %v99, %v2907
    %v2909 = vand.u32 %v2908, 4294901760
    %v2910 = vsub.f32 %v2908, %v2909
    %v2911 = vand.u32 %v2910, 4294901760
    %2912 = vmatpush1.msra.mxu0 %v2911
    %2913 = vmatprep.subr.mxu0 0.0
    %v2914 = vand.u32 %v100, 4294901760
    %v2915 = vsub.f32 %v100, %v2914
    %v2916 = vand.u32 %v2915, 4294901760
    %v2917 = vsub.f32 %v2915, %v2916
    %v2918 = vand.u32 %v2917, 4294901760
    %2919 = vmatpush1.msra.mxu0 %v2918
    %2920 = vmatprep.subr.mxu0 0.0
    %v2921 = vand.u32 %v101, 4294901760
    %v2922 = vsub.f32 %v101, %v2921
    %v2923 = vand.u32 %v2922, 4294901760
    %v2924 = vsub.f32 %v2922, %v2923
    %v2925 = vand.u32 %v2924, 4294901760
    %2926 = vmatpush1.msra.mxu0 %v2925
    %2927 = vmatprep.subr.mxu0 0.0
    %2928 = vmatpush1.msra.mxu0 0.0
    %2929 = vmatprep.subr.mxu0 0.0
    %2930 = vmatpush1.msra.mxu0 0.0
    %2931 = vmatprep.subr.mxu0 0.0
    %2932 = vmatpush1.msra.mxu0 0.0
    %2933 = vmatprep.subr.mxu0 0.0
    %2934 = vmatpush1.msra.mxu0 0.0
    %2935 = vmatprep.subr.mxu0 0.0
    %2936 = vmatpush1.msra.mxu0 0.0
    %2937 = vmatprep.subr.mxu0 0.0
    %2938 = vmatpush1.msra.mxu0 0.0
    %2939 = vmatprep.subr.mxu0 0.0
    %2940 = vmatpush1.msra.mxu0 0.0
    %2941 = vmatprep.subr.mxu0 0.0
    %2942 = vmatpush1.msra.mxu0 0.0
    %2943 = vmatprep.subr.mxu0 0.0
    %2944 = vmatpush1.msra.mxu0 0.0
    %2945 = vmatprep.subr.mxu0 0.0
    %2946 = vmatpush1.msra.mxu0 0.0
    %2947 = vmatprep.subr.mxu0 0.0
    %2948 = vmatpush1.msra.mxu0 0.0
    %2949 = vmatprep.subr.mxu0 0.0
    %2950 = vmatpush1.msra.mxu0 0.0
    %2951 = vmatprep.subr.mxu0 0.0
    %2952 = vmatpush1.msra.mxu0 0.0
    %2953 = vmatprep.subr.mxu0 0.0
    %2954 = vmatpush1.msra.mxu0 0.0
    %2955 = vmatprep.subr.mxu0 0.0
    %2956 = vmatpush1.msra.mxu0 0.0
    %2957 = vmatprep.subr.mxu0 0.0
    %2958 = vmatpush1.msra.mxu0 0.0
    %2959 = vmatprep.subr.mxu0 0.0
    %2960 = vmatpush1.msra.mxu0 0.0
    %2961 = vmatprep.subr.mxu0 0.0
    %2962 = vmatpush1.msra.mxu0 0.0
    %2963 = vmatprep.subr.mxu0 0.0
    %2964 = vmatpush1.msra.mxu0 0.0
    %2965 = vmatprep.subr.mxu0 0.0
    %2966 = vmatpush1.msra.mxu0 0.0
    %2967 = vmatprep.subr.mxu0 0.0
    %2968 = vmatpush1.msra.mxu0 0.0
    %2969 = vmatprep.subr.mxu0 0.0
    %2970 = vmatpush1.msra.mxu0 0.0
    %2971 = vmatprep.subr.mxu0 0.0
    %2972 = vmatpush1.msra.mxu0 0.0
    %2973 = vmatprep.subr.mxu0 0.0
    %2974 = vmatpush1.msra.mxu0 0.0
    %2975 = vmatprep.subr.mxu0 0.0
    %2976 = vmatpush1.msra.mxu0 0.0
    %2977 = vmatprep.subr.mxu0 0.0
    %2978 = vmatpush1.msra.mxu0 0.0
    %2979 = vmatprep.subr.mxu0 0.0
    %2980 = vmatpush1.msra.mxu0 0.0
    %2981 = vmatprep.subr.mxu0 0.0
    %2982 = vmatpush1.msra.mxu0 0.0
    %2983 = vmatprep.mubr.f32.mxu0 0.0
    %v2984 = vand.u32 %v2818, 4294901760
    %2985 = vmatmul.mubr.f32.gmra.mrb[0].mxu0 %v2984
    %v2986 = vpop.f32.mrb[0].mxu0
    %v2987 = vadd.f32 %v2896, %v2986
    %v2988 = vpop.f32.mrb[0].mxu0
    %2989 = vdwg.mxu0
    %2990 = vmatprep.subr.mxu0 0.0
    %v2991 = vand.u32 %v98, 4294901760
    %v2992 = vsub.f32 %v98, %v2991
    %2993 = vmatpush1.msra.mxu0 %v2992
    %2994 = vmatprep.subr.mxu0 0.0
    %v2995 = vand.u32 %v99, 4294901760
    %v2996 = vsub.f32 %v99, %v2995
    %2997 = vmatpush1.msra.mxu0 %v2996
    %2998 = vmatprep.subr.mxu0 0.0
    %v2999 = vand.u32 %v100, 4294901760
    %v3000 = vsub.f32 %v100, %v2999
    %3001 = vmatpush1.msra.mxu0 %v3000
    %3002 = vmatprep.subr.mxu0 0.0
    %v3003 = vand.u32 %v101, 4294901760
    %v3004 = vsub.f32 %v101, %v3003
    %3005 = vmatpush1.msra.mxu0 %v3004
    %3006 = vmatprep.subr.mxu0 0.0
    %3007 = vmatpush1.msra.mxu0 0.0
    %3008 = vmatprep.subr.mxu0 0.0
    %3009 = vmatpush1.msra.mxu0 0.0
    %3010 = vmatprep.subr.mxu0 0.0
    %3011 = vmatpush1.msra.mxu0 0.0
    %3012 = vmatprep.subr.mxu0 0.0
    %3013 = vmatpush1.msra.mxu0 0.0
    %3014 = vmatprep.subr.mxu0 0.0
    %3015 = vmatpush1.msra.mxu0 0.0
    %3016 = vmatprep.subr.mxu0 0.0
    %3017 = vmatpush1.msra.mxu0 0.0
    %3018 = vmatprep.subr.mxu0 0.0
    %3019 = vmatpush1.msra.mxu0 0.0
    %3020 = vmatprep.subr.mxu0 0.0
    %3021 = vmatpush1.msra.mxu0 0.0
    %3022 = vmatprep.subr.mxu0 0.0
    %3023 = vmatpush1.msra.mxu0 0.0
    %3024 = vmatprep.subr.mxu0 0.0
    %3025 = vmatpush1.msra.mxu0 0.0
    %3026 = vmatprep.subr.mxu0 0.0
    %3027 = vmatpush1.msra.mxu0 0.0
    %3028 = vmatprep.subr.mxu0 0.0
    %3029 = vmatpush1.msra.mxu0 0.0
    %3030 = vmatprep.subr.mxu0 0.0
    %3031 = vmatpush1.msra.mxu0 0.0
    %3032 = vmatprep.subr.mxu0 0.0
    %3033 = vmatpush1.msra.mxu0 0.0
    %3034 = vmatprep.subr.mxu0 0.0
    %3035 = vmatpush1.msra.mxu0 0.0
    %3036 = vmatprep.subr.mxu0 0.0
    %3037 = vmatpush1.msra.mxu0 0.0
    %3038 = vmatprep.subr.mxu0 0.0
    %3039 = vmatpush1.msra.mxu0 0.0
    %3040 = vmatprep.subr.mxu0 0.0
    %3041 = vmatpush1.msra.mxu0 0.0
    %3042 = vmatprep.subr.mxu0 0.0
    %3043 = vmatpush1.msra.mxu0 0.0
    %3044 = vmatprep.subr.mxu0 0.0
    %3045 = vmatpush1.msra.mxu0 0.0
    %3046 = vmatprep.subr.mxu0 0.0
    %3047 = vmatpush1.msra.mxu0 0.0
    %3048 = vmatprep.subr.mxu0 0.0
    %3049 = vmatpush1.msra.mxu0 0.0
    %3050 = vmatprep.subr.mxu0 0.0
    %3051 = vmatpush1.msra.mxu0 0.0
    %3052 = vmatprep.subr.mxu0 0.0
    %3053 = vmatpush1.msra.mxu0 0.0
    %3054 = vmatprep.subr.mxu0 0.0
    %3055 = vmatpush1.msra.mxu0 0.0
    %3056 = vmatprep.subr.mxu0 0.0
    %3057 = vmatpush1.msra.mxu0 0.0
    %3058 = vmatprep.subr.mxu0 0.0
    %3059 = vmatpush1.msra.mxu0 0.0
    %3060 = vmatprep.subr.mxu0 0.0
    %3061 = vmatpush1.msra.mxu0 0.0
    %3062 = vmatprep.mubr.f32.mxu0 0.0
    %v3063 = vand.u32 %v2818, 4294901760
    %v3064 = vsub.f32 %v2818, %v3063
    %3065 = vmatmul.mubr.f32.gmra.mrb[0].mxu0 %v3064
    %v3066 = vpop.f32.mrb[0].mxu0
    %v3067 = vadd.f32 %v2987, %v3066
    %v3068 = vpop.f32.mrb[0].mxu0
    %3069 = vdwg.mxu0
    %3070 = vmatprep.subr.mxu0 0.0
    %v3071 = vand.u32 %v98, 4294901760
    %3072 = vmatpush1.msra.mxu0 %v3071
    %3073 = vmatprep.subr.mxu0 0.0
    %v3074 = vand.u32 %v99, 4294901760
    %3075 = vmatpush1.msra.mxu0 %v3074
    %3076 = vmatprep.subr.mxu0 0.0
    %v3077 = vand.u32 %v100, 4294901760
    %3078 = vmatpush1.msra.mxu0 %v3077
    %3079 = vmatprep.subr.mxu0 0.0
    %v3080 = vand.u32 %v101, 4294901760
    %3081 = vmatpush1.msra.mxu0 %v3080
    %3082 = vmatprep.subr.mxu0 0.0
    %3083 = vmatpush1.msra.mxu0 0.0
    %3084 = vmatprep.subr.mxu0 0.0
    %3085 = vmatpush1.msra.mxu0 0.0
    %3086 = vmatprep.subr.mxu0 0.0
    %3087 = vmatpush1.msra.mxu0 0.0
    %3088 = vmatprep.subr.mxu0 0.0
    %3089 = vmatpush1.msra.mxu0 0.0
    %3090 = vmatprep.subr.mxu0 0.0
    %3091 = vmatpush1.msra.mxu0 0.0
    %3092 = vmatprep.subr.mxu0 0.0
    %3093 = vmatpush1.msra.mxu0 0.0
    %3094 = vmatprep.subr.mxu0 0.0
    %3095 = vmatpush1.msra.mxu0 0.0
    %3096 = vmatprep.subr.mxu0 0.0
    %3097 = vmatpush1.msra.mxu0 0.0
    %3098 = vmatprep.subr.mxu0 0.0
    %3099 = vmatpush1.msra.mxu0 0.0
    %3100 = vmatprep.subr.mxu0 0.0
    %3101 = vmatpush1.msra.mxu0 0.0
    %3102 = vmatprep.subr.mxu0 0.0
    %3103 = vmatpush1.msra.mxu0 0.0
    %3104 = vmatprep.subr.mxu0 0.0
    %3105 = vmatpush1.msra.mxu0 0.0
    %3106 = vmatprep.subr.mxu0 0.0
    %3107 = vmatpush1.msra.mxu0 0.0
    %3108 = vmatprep.subr.mxu0 0.0
    %3109 = vmatpush1.msra.mxu0 0.0
    %3110 = vmatprep.subr.mxu0 0.0
    %3111 = vmatpush1.msra.mxu0 0.0
    %3112 = vmatprep.subr.mxu0 0.0
    %3113 = vmatpush1.msra.mxu0 0.0
    %3114 = vmatprep.subr.mxu0 0.0
    %3115 = vmatpush1.msra.mxu0 0.0
    %3116 = vmatprep.subr.mxu0 0.0
    %3117 = vmatpush1.msra.mxu0 0.0
    %3118 = vmatprep.subr.mxu0 0.0
    %3119 = vmatpush1.msra.mxu0 0.0
    %3120 = vmatprep.subr.mxu0 0.0
    %3121 = vmatpush1.msra.mxu0 0.0
    %3122 = vmatprep.subr.mxu0 0.0
    %3123 = vmatpush1.msra.mxu0 0.0
    %3124 = vmatprep.subr.mxu0 0.0
    %3125 = vmatpush1.msra.mxu0 0.0
    %3126 = vmatprep.subr.mxu0 0.0
    %3127 = vmatpush1.msra.mxu0 0.0
    %3128 = vmatprep.subr.mxu0 0.0
    %3129 = vmatpush1.msra.mxu0 0.0
    %3130 = vmatprep.subr.mxu0 0.0
    %3131 = vmatpush1.msra.mxu0 0.0
    %3132 = vmatprep.subr.mxu0 0.0
    %3133 = vmatpush1.msra.mxu0 0.0
    %3134 = vmatprep.subr.mxu0 0.0
    %3135 = vmatpush1.msra.mxu0 0.0
    %3136 = vmatprep.subr.mxu0 0.0
    %3137 = vmatpush1.msra.mxu0 0.0
    %3138 = vmatprep.mubr.f32.mxu0 0.0
    %v3139 = vand.u32 %v2818, 4294901760
    %v3140 = vsub.f32 %v2818, %v3139
    %v3141 = vand.u32 %v3140, 4294901760
    %3142 = vmatmul.mubr.f32.gmra.mrb[0].mxu0 %v3141
    %v3143 = vpop.f32.mrb[0].mxu0
    %v3144 = vadd.f32 %v3067, %v3143
    %v3145 = vpop.f32.mrb[0].mxu0
    %3146 = vdwg.mxu0
    %3147 = vmatprep.subr.mxu0 0.0
    %v3148 = vand.u32 %v98, 4294901760
    %v3149 = vsub.f32 %v98, %v3148
    %v3150 = vand.u32 %v3149, 4294901760
    %3151 = vmatpush1.msra.mxu0 %v3150
    %3152 = vmatprep.subr.mxu0 0.0
    %v3153 = vand.u32 %v99, 4294901760
    %v3154 = vsub.f32 %v99, %v3153
    %v3155 = vand.u32 %v3154, 4294901760
    %3156 = vmatpush1.msra.mxu0 %v3155
    %3157 = vmatprep.subr.mxu0 0.0
    %v3158 = vand.u32 %v100, 4294901760
    %v3159 = vsub.f32 %v100, %v3158
    %v3160 = vand.u32 %v3159, 4294901760
    %3161 = vmatpush1.msra.mxu0 %v3160
    %3162 = vmatprep.subr.mxu0 0.0
    %v3163 = vand.u32 %v101, 4294901760
    %v3164 = vsub.f32 %v101, %v3163
    %v3165 = vand.u32 %v3164, 4294901760
    %3166 = vmatpush1.msra.mxu0 %v3165
    %3167 = vmatprep.subr.mxu0 0.0
    %3168 = vmatpush1.msra.mxu0 0.0
    %3169 = vmatprep.subr.mxu0 0.0
    %3170 = vmatpush1.msra.mxu0 0.0
    %3171 = vmatprep.subr.mxu0 0.0
    %3172 = vmatpush1.msra.mxu0 0.0
    %3173 = vmatprep.subr.mxu0 0.0
    %3174 = vmatpush1.msra.mxu0 0.0
    %3175 = vmatprep.subr.mxu0 0.0
    %3176 = vmatpush1.msra.mxu0 0.0
    %3177 = vmatprep.subr.mxu0 0.0
    %3178 = vmatpush1.msra.mxu0 0.0
    %3179 = vmatprep.subr.mxu0 0.0
    %3180 = vmatpush1.msra.mxu0 0.0
    %3181 = vmatprep.subr.mxu0 0.0
    %3182 = vmatpush1.msra.mxu0 0.0
    %3183 = vmatprep.subr.mxu0 0.0
    %3184 = vmatpush1.msra.mxu0 0.0
    %3185 = vmatprep.subr.mxu0 0.0
    %3186 = vmatpush1.msra.mxu0 0.0
    %3187 = vmatprep.subr.mxu0 0.0
    %3188 = vmatpush1.msra.mxu0 0.0
    %3189 = vmatprep.subr.mxu0 0.0
    %3190 = vmatpush1.msra.mxu0 0.0
    %3191 = vmatprep.subr.mxu0 0.0
    %3192 = vmatpush1.msra.mxu0 0.0
    %3193 = vmatprep.subr.mxu0 0.0
    %3194 = vmatpush1.msra.mxu0 0.0
    %3195 = vmatprep.subr.mxu0 0.0
    %3196 = vmatpush1.msra.mxu0 0.0
    %3197 = vmatprep.subr.mxu0 0.0
    %3198 = vmatpush1.msra.mxu0 0.0
    %3199 = vmatprep.subr.mxu0 0.0
    %3200 = vmatpush1.msra.mxu0 0.0
    %3201 = vmatprep.subr.mxu0 0.0
    %3202 = vmatpush1.msra.mxu0 0.0
    %3203 = vmatprep.subr.mxu0 0.0
    %3204 = vmatpush1.msra.mxu0 0.0
    %3205 = vmatprep.subr.mxu0 0.0
    %3206 = vmatpush1.msra.mxu0 0.0
    %3207 = vmatprep.subr.mxu0 0.0
    %3208 = vmatpush1.msra.mxu0 0.0
    %3209 = vmatprep.subr.mxu0 0.0
    %3210 = vmatpush1.msra.mxu0 0.0
    %3211 = vmatprep.subr.mxu0 0.0
    %3212 = vmatpush1.msra.mxu0 0.0
    %3213 = vmatprep.subr.mxu0 0.0
    %3214 = vmatpush1.msra.mxu0 0.0
    %3215 = vmatprep.subr.mxu0 0.0
    %3216 = vmatpush1.msra.mxu0 0.0
    %3217 = vmatprep.subr.mxu0 0.0
    %3218 = vmatpush1.msra.mxu0 0.0
    %3219 = vmatprep.subr.mxu0 0.0
    %3220 = vmatpush1.msra.mxu0 0.0
    %3221 = vmatprep.subr.mxu0 0.0
    %3222 = vmatpush1.msra.mxu0 0.0
    %3223 = vmatprep.mubr.f32.mxu0 0.0
    %v3224 = vand.u32 %v2818, 4294901760
    %3225 = vmatmul.mubr.f32.gmra.mrb[0].mxu0 %v3224
    %v3226 = vpop.f32.mrb[0].mxu0
    %v3227 = vadd.f32 %v3144, %v3226
    %v3228 = vpop.f32.mrb[0].mxu0
    %3229 = vdwg.mxu0
    %3230 = vmatprep.subr.mxu0 0.0
    %v3231 = vand.u32 %v98, 4294901760
    %3232 = vmatpush1.msra.mxu0 %v3231
    %3233 = vmatprep.subr.mxu0 0.0
    %v3234 = vand.u32 %v99, 4294901760
    %3235 = vmatpush1.msra.mxu0 %v3234
    %3236 = vmatprep.subr.mxu0 0.0
    %v3237 = vand.u32 %v100, 4294901760
    %3238 = vmatpush1.msra.mxu0 %v3237
    %3239 = vmatprep.subr.mxu0 0.0
    %v3240 = vand.u32 %v101, 4294901760
    %3241 = vmatpush1.msra.mxu0 %v3240
    %3242 = vmatprep.subr.mxu0 0.0
    %3243 = vmatpush1.msra.mxu0 0.0
    %3244 = vmatprep.subr.mxu0 0.0
    %3245 = vmatpush1.msra.mxu0 0.0
    %3246 = vmatprep.subr.mxu0 0.0
    %3247 = vmatpush1.msra.mxu0 0.0
    %3248 = vmatprep.subr.mxu0 0.0
    %3249 = vmatpush1.msra.mxu0 0.0
    %3250 = vmatprep.subr.mxu0 0.0
    %3251 = vmatpush1.msra.mxu0 0.0
    %3252 = vmatprep.subr.mxu0 0.0
    %3253 = vmatpush1.msra.mxu0 0.0
    %3254 = vmatprep.subr.mxu0 0.0
    %3255 = vmatpush1.msra.mxu0 0.0
    %3256 = vmatprep.subr.mxu0 0.0
    %3257 = vmatpush1.msra.mxu0 0.0
    %3258 = vmatprep.subr.mxu0 0.0
    %3259 = vmatpush1.msra.mxu0 0.0
    %3260 = vmatprep.subr.mxu0 0.0
    %3261 = vmatpush1.msra.mxu0 0.0
    %3262 = vmatprep.subr.mxu0 0.0
    %3263 = vmatpush1.msra.mxu0 0.0
    %3264 = vmatprep.subr.mxu0 0.0
    %3265 = vmatpush1.msra.mxu0 0.0
    %3266 = vmatprep.subr.mxu0 0.0
    %3267 = vmatpush1.msra.mxu0 0.0
    %3268 = vmatprep.subr.mxu0 0.0
    %3269 = vmatpush1.msra.mxu0 0.0
    %3270 = vmatprep.subr.mxu0 0.0
    %3271 = vmatpush1.msra.mxu0 0.0
    %3272 = vmatprep.subr.mxu0 0.0
    %3273 = vmatpush1.msra.mxu0 0.0
    %3274 = vmatprep.subr.mxu0 0.0
    %3275 = vmatpush1.msra.mxu0 0.0
    %3276 = vmatprep.subr.mxu0 0.0
    %3277 = vmatpush1.msra.mxu0 0.0
    %3278 = vmatprep.subr.mxu0 0.0
    %3279 = vmatpush1.msra.mxu0 0.0
    %3280 = vmatprep.subr.mxu0 0.0
    %3281 = vmatpush1.msra.mxu0 0.0
    %3282 = vmatprep.subr.mxu0 0.0
    %3283 = vmatpush1.msra.mxu0 0.0
    %3284 = vmatprep.subr.mxu0 0.0
    %3285 = vmatpush1.msra.mxu0 0.0
    %3286 = vmatprep.subr.mxu0 0.0
    %3287 = vmatpush1.msra.mxu0 0.0
    %3288 = vmatprep.subr.mxu0 0.0
    %3289 = vmatpush1.msra.mxu0 0.0
    %3290 = vmatprep.subr.mxu0 0.0
    %3291 = vmatpush1.msra.mxu0 0.0
    %3292 = vmatprep.subr.mxu0 0.0
    %3293 = vmatpush1.msra.mxu0 0.0
    %3294 = vmatprep.subr.mxu0 0.0
    %3295 = vmatpush1.msra.mxu0 0.0
    %3296 = vmatprep.subr.mxu0 0.0
    %3297 = vmatpush1.msra.mxu0 0.0
    %3298 = vmatprep.mubr.f32.mxu0 0.0
    %v3299 = vand.u32 %v2818, 4294901760
    %3300 = vmatmul.mubr.f32.gmra.mrb[0].mxu0 %v3299
    %v3301 = vpop.f32.mrb[0].mxu0
    %v3302 = vadd.f32 %v3227, %v3301
    %v3303 = vpop.f32.mrb[0].mxu0
    %3304 = vdwg.mxu0
    %v3305 = vadd.f32 %v197, %v3302
    %v3306 = vxor.u32 %v3305, 2147483648
    %v3307 = vmul.f32 %v3306, 1.442695
    %v3308 = vpow.pop %v3307
    %v3309 = vadd.f32 %v3308, 1.0
    %v3310 = vrcp.pop %v3309
    %v3311 = vmul.f32 1.0, %v3310
    %v3312 = vtanh.pop %v3305
    %v3313 = vmul.f32 %v3311, %v2806
    %3315 = vrot.lane.b32.xlu0 %v3312, 64
    %v3316 = vpop.permute.xlu0 %3315
    %v3318 = vmul.f32 %v3311, %v3316
    %3320 = vrot.lane.b32.xlu0 %v3318, 32
    %v3321 = vpop.permute.xlu0 %3320
    %v3323 = vadd.f32 %v3313, %v3321
    %v3324 = vtanh.pop %v3323
    %3326 = vrot.lane.b32.xlu0 %v3324, 64
    %v3327 = vpop.permute.xlu0 %3326
    %v3329 = vmul.f32 %v3311, %v3327
    %3331 = vrot.lane.b32.xlu0 %v3329, 32
    %v3332 = vpop.permute.xlu0 %3331
    %3334 = vst.msk [vmem:[#allocation2 + $0x5] sm:$0x1] %vm748, %v3332
    %v3335 = vsel %vm230, %v3332, 0
    %3337 = vmatprep.subr.mxu0 0.0
    %v3338 = vand.u32 %v98, 4294901760
    %3339 = vmatpush1.msra.mxu0 %v3338
    %3340 = vmatprep.subr.mxu0 0.0
    %v3341 = vand.u32 %v99, 4294901760
    %3342 = vmatpush1.msra.mxu0 %v3341
    %3343 = vmatprep.subr.mxu0 0.0
    %v3344 = vand.u32 %v100, 4294901760
    %3345 = vmatpush1.msra.mxu0 %v3344
    %3346 = vmatprep.subr.mxu0 0.0
    %v3347 = vand.u32 %v101, 4294901760
    %3348 = vmatpush1.msra.mxu0 %v3347
    %3349 = vmatprep.subr.mxu0 0.0
    %3350 = vmatpush1.msra.mxu0 0.0
    %3351 = vmatprep.subr.mxu0 0.0
    %3352 = vmatpush1.msra.mxu0 0.0
    %3353 = vmatprep.subr.mxu0 0.0
    %3354 = vmatpush1.msra.mxu0 0.0
    %3355 = vmatprep.subr.mxu0 0.0
    %3356 = vmatpush1.msra.mxu0 0.0
    %3357 = vmatprep.subr.mxu0 0.0
    %3358 = vmatpush1.msra.mxu0 0.0
    %3359 = vmatprep.subr.mxu0 0.0
    %3360 = vmatpush1.msra.mxu0 0.0
    %3361 = vmatprep.subr.mxu0 0.0
    %3362 = vmatpush1.msra.mxu0 0.0
    %3363 = vmatprep.subr.mxu0 0.0
    %3364 = vmatpush1.msra.mxu0 0.0
    %3365 = vmatprep.subr.mxu0 0.0
    %3366 = vmatpush1.msra.mxu0 0.0
    %3367 = vmatprep.subr.mxu0 0.0
    %3368 = vmatpush1.msra.mxu0 0.0
    %3369 = vmatprep.subr.mxu0 0.0
    %3370 = vmatpush1.msra.mxu0 0.0
    %3371 = vmatprep.subr.mxu0 0.0
    %3372 = vmatpush1.msra.mxu0 0.0
    %3373 = vmatprep.subr.mxu0 0.0
    %3374 = vmatpush1.msra.mxu0 0.0
    %3375 = vmatprep.subr.mxu0 0.0
    %3376 = vmatpush1.msra.mxu0 0.0
    %3377 = vmatprep.subr.mxu0 0.0
    %3378 = vmatpush1.msra.mxu0 0.0
    %3379 = vmatprep.subr.mxu0 0.0
    %3380 = vmatpush1.msra.mxu0 0.0
    %3381 = vmatprep.subr.mxu0 0.0
    %3382 = vmatpush1.msra.mxu0 0.0
    %3383 = vmatprep.subr.mxu0 0.0
    %3384 = vmatpush1.msra.mxu0 0.0
    %3385 = vmatprep.subr.mxu0 0.0
    %3386 = vmatpush1.msra.mxu0 0.0
    %3387 = vmatprep.subr.mxu0 0.0
    %3388 = vmatpush1.msra.mxu0 0.0
    %3389 = vmatprep.subr.mxu0 0.0
    %3390 = vmatpush1.msra.mxu0 0.0
    %3391 = vmatprep.subr.mxu0 0.0
    %3392 = vmatpush1.msra.mxu0 0.0
    %3393 = vmatprep.subr.mxu0 0.0
    %3394 = vmatpush1.msra.mxu0 0.0
    %3395 = vmatprep.subr.mxu0 0.0
    %3396 = vmatpush1.msra.mxu0 0.0
    %3397 = vmatprep.subr.mxu0 0.0
    %3398 = vmatpush1.msra.mxu0 0.0
    %3399 = vmatprep.subr.mxu0 0.0
    %3400 = vmatpush1.msra.mxu0 0.0
    %3401 = vmatprep.subr.mxu0 0.0
    %3402 = vmatpush1.msra.mxu0 0.0
    %3403 = vmatprep.subr.mxu0 0.0
    %3404 = vmatpush1.msra.mxu0 0.0
    %3405 = vmatprep.mubr.f32.mxu0 0.0
    %v3406 = vand.u32 %v3335, 4294901760
    %v3407 = vsub.f32 %v3335, %v3406
    %v3408 = vand.u32 %v3407, 4294901760
    %v3409 = vsub.f32 %v3407, %v3408
    %v3410 = vand.u32 %v3409, 4294901760
    %3411 = vmatmul.mubr.f32.gmra.mrb[0].mxu0 %v3410
    %v3412 = vpop.f32.mrb[0].mxu0
    %v3413 = vadd.f32 0.0, %v3412
    %v3414 = vpop.f32.mrb[0].mxu0
    %3415 = vdwg.mxu0
    %3416 = vmatprep.subr.mxu0 0.0
    %v3417 = vand.u32 %v98, 4294901760
    %v3418 = vsub.f32 %v98, %v3417
    %v3419 = vand.u32 %v3418, 4294901760
    %v3420 = vsub.f32 %v3418, %v3419
    %v3421 = vand.u32 %v3420, 4294901760
    %3422 = vmatpush1.msra.mxu0 %v3421
    %3423 = vmatprep.subr.mxu0 0.0
    %v3424 = vand.u32 %v99, 4294901760
    %v3425 = vsub.f32 %v99, %v3424
    %v3426 = vand.u32 %v3425, 4294901760
    %v3427 = vsub.f32 %v3425, %v3426
    %v3428 = vand.u32 %v3427, 4294901760
    %3429 = vmatpush1.msra.mxu0 %v3428
    %3430 = vmatprep.subr.mxu0 0.0
    %v3431 = vand.u32 %v100, 4294901760
    %v3432 = vsub.f32 %v100, %v3431
    %v3433 = vand.u32 %v3432, 4294901760
    %v3434 = vsub.f32 %v3432, %v3433
    %v3435 = vand.u32 %v3434, 4294901760
    %3436 = vmatpush1.msra.mxu0 %v3435
    %3437 = vmatprep.subr.mxu0 0.0
    %v3438 = vand.u32 %v101, 4294901760
    %v3439 = vsub.f32 %v101, %v3438
    %v3440 = vand.u32 %v3439, 4294901760
    %v3441 = vsub.f32 %v3439, %v3440
    %v3442 = vand.u32 %v3441, 4294901760
    %3443 = vmatpush1.msra.mxu0 %v3442
    %3444 = vmatprep.subr.mxu0 0.0
    %3445 = vmatpush1.msra.mxu0 0.0
    %3446 = vmatprep.subr.mxu0 0.0
    %3447 = vmatpush1.msra.mxu0 0.0
    %3448 = vmatprep.subr.mxu0 0.0
    %3449 = vmatpush1.msra.mxu0 0.0
    %3450 = vmatprep.subr.mxu0 0.0
    %3451 = vmatpush1.msra.mxu0 0.0
    %3452 = vmatprep.subr.mxu0 0.0
    %3453 = vmatpush1.msra.mxu0 0.0
    %3454 = vmatprep.subr.mxu0 0.0
    %3455 = vmatpush1.msra.mxu0 0.0
    %3456 = vmatprep.subr.mxu0 0.0
    %3457 = vmatpush1.msra.mxu0 0.0
    %3458 = vmatprep.subr.mxu0 0.0
    %3459 = vmatpush1.msra.mxu0 0.0
    %3460 = vmatprep.subr.mxu0 0.0
    %3461 = vmatpush1.msra.mxu0 0.0
    %3462 = vmatprep.subr.mxu0 0.0
    %3463 = vmatpush1.msra.mxu0 0.0
    %3464 = vmatprep.subr.mxu0 0.0
    %3465 = vmatpush1.msra.mxu0 0.0
    %3466 = vmatprep.subr.mxu0 0.0
    %3467 = vmatpush1.msra.mxu0 0.0
    %3468 = vmatprep.subr.mxu0 0.0
    %3469 = vmatpush1.msra.mxu0 0.0
    %3470 = vmatprep.subr.mxu0 0.0
    %3471 = vmatpush1.msra.mxu0 0.0
    %3472 = vmatprep.subr.mxu0 0.0
    %3473 = vmatpush1.msra.mxu0 0.0
    %3474 = vmatprep.subr.mxu0 0.0
    %3475 = vmatpush1.msra.mxu0 0.0
    %3476 = vmatprep.subr.mxu0 0.0
    %3477 = vmatpush1.msra.mxu0 0.0
    %3478 = vmatprep.subr.mxu0 0.0
    %3479 = vmatpush1.msra.mxu0 0.0
    %3480 = vmatprep.subr.mxu0 0.0
    %3481 = vmatpush1.msra.mxu0 0.0
    %3482 = vmatprep.subr.mxu0 0.0
    %3483 = vmatpush1.msra.mxu0 0.0
    %3484 = vmatprep.subr.mxu0 0.0
    %3485 = vmatpush1.msra.mxu0 0.0
    %3486 = vmatprep.subr.mxu0 0.0
    %3487 = vmatpush1.msra.mxu0 0.0
    %3488 = vmatprep.subr.mxu0 0.0
    %3489 = vmatpush1.msra.mxu0 0.0
    %3490 = vmatprep.subr.mxu0 0.0
    %3491 = vmatpush1.msra.mxu0 0.0
    %3492 = vmatprep.subr.mxu0 0.0
    %3493 = vmatpush1.msra.mxu0 0.0
    %3494 = vmatprep.subr.mxu0 0.0
    %3495 = vmatpush1.msra.mxu0 0.0
    %3496 = vmatprep.subr.mxu0 0.0
    %3497 = vmatpush1.msra.mxu0 0.0
    %3498 = vmatprep.subr.mxu0 0.0
    %3499 = vmatpush1.msra.mxu0 0.0
    %3500 = vmatprep.mubr.f32.mxu0 0.0
    %v3501 = vand.u32 %v3335, 4294901760
    %3502 = vmatmul.mubr.f32.gmra.mrb[0].mxu0 %v3501
    %v3503 = vpop.f32.mrb[0].mxu0
    %v3504 = vadd.f32 %v3413, %v3503
    %v3505 = vpop.f32.mrb[0].mxu0
    %3506 = vdwg.mxu0
    %3507 = vmatprep.subr.mxu0 0.0
    %v3508 = vand.u32 %v98, 4294901760
    %v3509 = vsub.f32 %v98, %v3508
    %3510 = vmatpush1.msra.mxu0 %v3509
    %3511 = vmatprep.subr.mxu0 0.0
    %v3512 = vand.u32 %v99, 4294901760
    %v3513 = vsub.f32 %v99, %v3512
    %3514 = vmatpush1.msra.mxu0 %v3513
    %3515 = vmatprep.subr.mxu0 0.0
    %v3516 = vand.u32 %v100, 4294901760
    %v3517 = vsub.f32 %v100, %v3516
    %3518 = vmatpush1.msra.mxu0 %v3517
    %3519 = vmatprep.subr.mxu0 0.0
    %v3520 = vand.u32 %v101, 4294901760
    %v3521 = vsub.f32 %v101, %v3520
    %3522 = vmatpush1.msra.mxu0 %v3521
    %3523 = vmatprep.subr.mxu0 0.0
    %3524 = vmatpush1.msra.mxu0 0.0
    %3525 = vmatprep.subr.mxu0 0.0
    %3526 = vmatpush1.msra.mxu0 0.0
    %3527 = vmatprep.subr.mxu0 0.0
    %3528 = vmatpush1.msra.mxu0 0.0
    %3529 = vmatprep.subr.mxu0 0.0
    %3530 = vmatpush1.msra.mxu0 0.0
    %3531 = vmatprep.subr.mxu0 0.0
    %3532 = vmatpush1.msra.mxu0 0.0
    %3533 = vmatprep.subr.mxu0 0.0
    %3534 = vmatpush1.msra.mxu0 0.0
    %3535 = vmatprep.subr.mxu0 0.0
    %3536 = vmatpush1.msra.mxu0 0.0
    %3537 = vmatprep.subr.mxu0 0.0
    %3538 = vmatpush1.msra.mxu0 0.0
    %3539 = vmatprep.subr.mxu0 0.0
    %3540 = vmatpush1.msra.mxu0 0.0
    %3541 = vmatprep.subr.mxu0 0.0
    %3542 = vmatpush1.msra.mxu0 0.0
    %3543 = vmatprep.subr.mxu0 0.0
    %3544 = vmatpush1.msra.mxu0 0.0
    %3545 = vmatprep.subr.mxu0 0.0
    %3546 = vmatpush1.msra.mxu0 0.0
    %3547 = vmatprep.subr.mxu0 0.0
    %3548 = vmatpush1.msra.mxu0 0.0
    %3549 = vmatprep.subr.mxu0 0.0
    %3550 = vmatpush1.msra.mxu0 0.0
    %3551 = vmatprep.subr.mxu0 0.0
    %3552 = vmatpush1.msra.mxu0 0.0
    %3553 = vmatprep.subr.mxu0 0.0
    %3554 = vmatpush1.msra.mxu0 0.0
    %3555 = vmatprep.subr.mxu0 0.0
    %3556 = vmatpush1.msra.mxu0 0.0
    %3557 = vmatprep.subr.mxu0 0.0
    %3558 = vmatpush1.msra.mxu0 0.0
    %3559 = vmatprep.subr.mxu0 0.0
    %3560 = vmatpush1.msra.mxu0 0.0
    %3561 = vmatprep.subr.mxu0 0.0
    %3562 = vmatpush1.msra.mxu0 0.0
    %3563 = vmatprep.subr.mxu0 0.0
    %3564 = vmatpush1.msra.mxu0 0.0
    %3565 = vmatprep.subr.mxu0 0.0
    %3566 = vmatpush1.msra.mxu0 0.0
    %3567 = vmatprep.subr.mxu0 0.0
    %3568 = vmatpush1.msra.mxu0 0.0
    %3569 = vmatprep.subr.mxu0 0.0
    %3570 = vmatpush1.msra.mxu0 0.0
    %3571 = vmatprep.subr.mxu0 0.0
    %3572 = vmatpush1.msra.mxu0 0.0
    %3573 = vmatprep.subr.mxu0 0.0
    %3574 = vmatpush1.msra.mxu0 0.0
    %3575 = vmatprep.subr.mxu0 0.0
    %3576 = vmatpush1.msra.mxu0 0.0
    %3577 = vmatprep.subr.mxu0 0.0
    %3578 = vmatpush1.msra.mxu0 0.0
    %3579 = vmatprep.mubr.f32.mxu0 0.0
    %v3580 = vand.u32 %v3335, 4294901760
    %v3581 = vsub.f32 %v3335, %v3580
    %3582 = vmatmul.mubr.f32.gmra.mrb[0].mxu0 %v3581
    %v3583 = vpop.f32.mrb[0].mxu0
    %v3584 = vadd.f32 %v3504, %v3583
    %v3585 = vpop.f32.mrb[0].mxu0
    %3586 = vdwg.mxu0
    %3587 = vmatprep.subr.mxu0 0.0
    %v3588 = vand.u32 %v98, 4294901760
    %3589 = vmatpush1.msra.mxu0 %v3588
    %3590 = vmatprep.subr.mxu0 0.0
    %v3591 = vand.u32 %v99, 4294901760
    %3592 = vmatpush1.msra.mxu0 %v3591
    %3593 = vmatprep.subr.mxu0 0.0
    %v3594 = vand.u32 %v100, 4294901760
    %3595 = vmatpush1.msra.mxu0 %v3594
    %3596 = vmatprep.subr.mxu0 0.0
    %v3597 = vand.u32 %v101, 4294901760
    %3598 = vmatpush1.msra.mxu0 %v3597
    %3599 = vmatprep.subr.mxu0 0.0
    %3600 = vmatpush1.msra.mxu0 0.0
    %3601 = vmatprep.subr.mxu0 0.0
    %3602 = vmatpush1.msra.mxu0 0.0
    %3603 = vmatprep.subr.mxu0 0.0
    %3604 = vmatpush1.msra.mxu0 0.0
    %3605 = vmatprep.subr.mxu0 0.0
    %3606 = vmatpush1.msra.mxu0 0.0
    %3607 = vmatprep.subr.mxu0 0.0
    %3608 = vmatpush1.msra.mxu0 0.0
    %3609 = vmatprep.subr.mxu0 0.0
    %3610 = vmatpush1.msra.mxu0 0.0
    %3611 = vmatprep.subr.mxu0 0.0
    %3612 = vmatpush1.msra.mxu0 0.0
    %3613 = vmatprep.subr.mxu0 0.0
    %3614 = vmatpush1.msra.mxu0 0.0
    %3615 = vmatprep.subr.mxu0 0.0
    %3616 = vmatpush1.msra.mxu0 0.0
    %3617 = vmatprep.subr.mxu0 0.0
    %3618 = vmatpush1.msra.mxu0 0.0
    %3619 = vmatprep.subr.mxu0 0.0
    %3620 = vmatpush1.msra.mxu0 0.0
    %3621 = vmatprep.subr.mxu0 0.0
    %3622 = vmatpush1.msra.mxu0 0.0
    %3623 = vmatprep.subr.mxu0 0.0
    %3624 = vmatpush1.msra.mxu0 0.0
    %3625 = vmatprep.subr.mxu0 0.0
    %3626 = vmatpush1.msra.mxu0 0.0
    %3627 = vmatprep.subr.mxu0 0.0
    %3628 = vmatpush1.msra.mxu0 0.0
    %3629 = vmatprep.subr.mxu0 0.0
    %3630 = vmatpush1.msra.mxu0 0.0
    %3631 = vmatprep.subr.mxu0 0.0
    %3632 = vmatpush1.msra.mxu0 0.0
    %3633 = vmatprep.subr.mxu0 0.0
    %3634 = vmatpush1.msra.mxu0 0.0
    %3635 = vmatprep.subr.mxu0 0.0
    %3636 = vmatpush1.msra.mxu0 0.0
    %3637 = vmatprep.subr.mxu0 0.0
    %3638 = vmatpush1.msra.mxu0 0.0
    %3639 = vmatprep.subr.mxu0 0.0
    %3640 = vmatpush1.msra.mxu0 0.0
    %3641 = vmatprep.subr.mxu0 0.0
    %3642 = vmatpush1.msra.mxu0 0.0
    %3643 = vmatprep.subr.mxu0 0.0
    %3644 = vmatpush1.msra.mxu0 0.0
    %3645 = vmatprep.subr.mxu0 0.0
    %3646 = vmatpush1.msra.mxu0 0.0
    %3647 = vmatprep.subr.mxu0 0.0
    %3648 = vmatpush1.msra.mxu0 0.0
    %3649 = vmatprep.subr.mxu0 0.0
    %3650 = vmatpush1.msra.mxu0 0.0
    %3651 = vmatprep.subr.mxu0 0.0
    %3652 = vmatpush1.msra.mxu0 0.0
    %3653 = vmatprep.subr.mxu0 0.0
    %3654 = vmatpush1.msra.mxu0 0.0
    %3655 = vmatprep.mubr.f32.mxu0 0.0
    %v3656 = vand.u32 %v3335, 4294901760
    %v3657 = vsub.f32 %v3335, %v3656
    %v3658 = vand.u32 %v3657, 4294901760
    %3659 = vmatmul.mubr.f32.gmra.mrb[0].mxu0 %v3658
    %v3660 = vpop.f32.mrb[0].mxu0
    %v3661 = vadd.f32 %v3584, %v3660
    %v3662 = vpop.f32.mrb[0].mxu0
    %3663 = vdwg.mxu0
    %3664 = vmatprep.subr.mxu0 0.0
    %v3665 = vand.u32 %v98, 4294901760
    %v3666 = vsub.f32 %v98, %v3665
    %v3667 = vand.u32 %v3666, 4294901760
    %3668 = vmatpush1.msra.mxu0 %v3667
    %3669 = vmatprep.subr.mxu0 0.0
    %v3670 = vand.u32 %v99, 4294901760
    %v3671 = vsub.f32 %v99, %v3670
    %v3672 = vand.u32 %v3671, 4294901760
    %3673 = vmatpush1.msra.mxu0 %v3672
    %3674 = vmatprep.subr.mxu0 0.0
    %v3675 = vand.u32 %v100, 4294901760
    %v3676 = vsub.f32 %v100, %v3675
    %v3677 = vand.u32 %v3676, 4294901760
    %3678 = vmatpush1.msra.mxu0 %v3677
    %3679 = vmatprep.subr.mxu0 0.0
    %v3680 = vand.u32 %v101, 4294901760
    %v3681 = vsub.f32 %v101, %v3680
    %v3682 = vand.u32 %v3681, 4294901760
    %3683 = vmatpush1.msra.mxu0 %v3682
    %3684 = vmatprep.subr.mxu0 0.0
    %3685 = vmatpush1.msra.mxu0 0.0
    %3686 = vmatprep.subr.mxu0 0.0
    %3687 = vmatpush1.msra.mxu0 0.0
    %3688 = vmatprep.subr.mxu0 0.0
    %3689 = vmatpush1.msra.mxu0 0.0
    %3690 = vmatprep.subr.mxu0 0.0
    %3691 = vmatpush1.msra.mxu0 0.0
    %3692 = vmatprep.subr.mxu0 0.0
    %3693 = vmatpush1.msra.mxu0 0.0
    %3694 = vmatprep.subr.mxu0 0.0
    %3695 = vmatpush1.msra.mxu0 0.0
    %3696 = vmatprep.subr.mxu0 0.0
    %3697 = vmatpush1.msra.mxu0 0.0
    %3698 = vmatprep.subr.mxu0 0.0
    %3699 = vmatpush1.msra.mxu0 0.0
    %3700 = vmatprep.subr.mxu0 0.0
    %3701 = vmatpush1.msra.mxu0 0.0
    %3702 = vmatprep.subr.mxu0 0.0
    %3703 = vmatpush1.msra.mxu0 0.0
    %3704 = vmatprep.subr.mxu0 0.0
    %3705 = vmatpush1.msra.mxu0 0.0
    %3706 = vmatprep.subr.mxu0 0.0
    %3707 = vmatpush1.msra.mxu0 0.0
    %3708 = vmatprep.subr.mxu0 0.0
    %3709 = vmatpush1.msra.mxu0 0.0
    %3710 = vmatprep.subr.mxu0 0.0
    %3711 = vmatpush1.msra.mxu0 0.0
    %3712 = vmatprep.subr.mxu0 0.0
    %3713 = vmatpush1.msra.mxu0 0.0
    %3714 = vmatprep.subr.mxu0 0.0
    %3715 = vmatpush1.msra.mxu0 0.0
    %3716 = vmatprep.subr.mxu0 0.0
    %3717 = vmatpush1.msra.mxu0 0.0
    %3718 = vmatprep.subr.mxu0 0.0
    %3719 = vmatpush1.msra.mxu0 0.0
    %3720 = vmatprep.subr.mxu0 0.0
    %3721 = vmatpush1.msra.mxu0 0.0
    %3722 = vmatprep.subr.mxu0 0.0
    %3723 = vmatpush1.msra.mxu0 0.0
    %3724 = vmatprep.subr.mxu0 0.0
    %3725 = vmatpush1.msra.mxu0 0.0
    %3726 = vmatprep.subr.mxu0 0.0
    %3727 = vmatpush1.msra.mxu0 0.0
    %3728 = vmatprep.subr.mxu0 0.0
    %3729 = vmatpush1.msra.mxu0 0.0
    %3730 = vmatprep.subr.mxu0 0.0
    %3731 = vmatpush1.msra.mxu0 0.0
    %3732 = vmatprep.subr.mxu0 0.0
    %3733 = vmatpush1.msra.mxu0 0.0
    %3734 = vmatprep.subr.mxu0 0.0
    %3735 = vmatpush1.msra.mxu0 0.0
    %3736 = vmatprep.subr.mxu0 0.0
    %3737 = vmatpush1.msra.mxu0 0.0
    %3738 = vmatprep.subr.mxu0 0.0
    %3739 = vmatpush1.msra.mxu0 0.0
    %3740 = vmatprep.mubr.f32.mxu0 0.0
    %v3741 = vand.u32 %v3335, 4294901760
    %3742 = vmatmul.mubr.f32.gmra.mrb[0].mxu0 %v3741
    %v3743 = vpop.f32.mrb[0].mxu0
    %v3744 = vadd.f32 %v3661, %v3743
    %v3745 = vpop.f32.mrb[0].mxu0
    %3746 = vdwg.mxu0
    %3747 = vmatprep.subr.mxu0 0.0
    %v3748 = vand.u32 %v98, 4294901760
    %3749 = vmatpush1.msra.mxu0 %v3748
    %3750 = vmatprep.subr.mxu0 0.0
    %v3751 = vand.u32 %v99, 4294901760
    %3752 = vmatpush1.msra.mxu0 %v3751
    %3753 = vmatprep.subr.mxu0 0.0
    %v3754 = vand.u32 %v100, 4294901760
    %3755 = vmatpush1.msra.mxu0 %v3754
    %3756 = vmatprep.subr.mxu0 0.0
    %v3757 = vand.u32 %v101, 4294901760
    %3758 = vmatpush1.msra.mxu0 %v3757
    %3759 = vmatprep.subr.mxu0 0.0
    %3760 = vmatpush1.msra.mxu0 0.0
    %3761 = vmatprep.subr.mxu0 0.0
    %3762 = vmatpush1.msra.mxu0 0.0
    %3763 = vmatprep.subr.mxu0 0.0
    %3764 = vmatpush1.msra.mxu0 0.0
    %3765 = vmatprep.subr.mxu0 0.0
    %3766 = vmatpush1.msra.mxu0 0.0
    %3767 = vmatprep.subr.mxu0 0.0
    %3768 = vmatpush1.msra.mxu0 0.0
    %3769 = vmatprep.subr.mxu0 0.0
    %3770 = vmatpush1.msra.mxu0 0.0
    %3771 = vmatprep.subr.mxu0 0.0
    %3772 = vmatpush1.msra.mxu0 0.0
    %3773 = vmatprep.subr.mxu0 0.0
    %3774 = vmatpush1.msra.mxu0 0.0
    %3775 = vmatprep.subr.mxu0 0.0
    %3776 = vmatpush1.msra.mxu0 0.0
    %3777 = vmatprep.subr.mxu0 0.0
    %3778 = vmatpush1.msra.mxu0 0.0
    %3779 = vmatprep.subr.mxu0 0.0
    %3780 = vmatpush1.msra.mxu0 0.0
    %3781 = vmatprep.subr.mxu0 0.0
    %3782 = vmatpush1.msra.mxu0 0.0
    %3783 = vmatprep.subr.mxu0 0.0
    %3784 = vmatpush1.msra.mxu0 0.0
    %3785 = vmatprep.subr.mxu0 0.0
    %3786 = vmatpush1.msra.mxu0 0.0
    %3787 = vmatprep.subr.mxu0 0.0
    %3788 = vmatpush1.msra.mxu0 0.0
    %3789 = vmatprep.subr.mxu0 0.0
    %3790 = vmatpush1.msra.mxu0 0.0
    %3791 = vmatprep.subr.mxu0 0.0
    %3792 = vmatpush1.msra.mxu0 0.0
    %3793 = vmatprep.subr.mxu0 0.0
    %3794 = vmatpush1.msra.mxu0 0.0
    %3795 = vmatprep.subr.mxu0 0.0
    %3796 = vmatpush1.msra.mxu0 0.0
    %3797 = vmatprep.subr.mxu0 0.0
    %3798 = vmatpush1.msra.mxu0 0.0
    %3799 = vmatprep.subr.mxu0 0.0
    %3800 = vmatpush1.msra.mxu0 0.0
    %3801 = vmatprep.subr.mxu0 0.0
    %3802 = vmatpush1.msra.mxu0 0.0
    %3803 = vmatprep.subr.mxu0 0.0
    %3804 = vmatpush1.msra.mxu0 0.0
    %3805 = vmatprep.subr.mxu0 0.0
    %3806 = vmatpush1.msra.mxu0 0.0
    %3807 = vmatprep.subr.mxu0 0.0
    %3808 = vmatpush1.msra.mxu0 0.0
    %3809 = vmatprep.subr.mxu0 0.0
    %3810 = vmatpush1.msra.mxu0 0.0
    %3811 = vmatprep.subr.mxu0 0.0
    %3812 = vmatpush1.msra.mxu0 0.0
    %3813 = vmatprep.subr.mxu0 0.0
    %3814 = vmatpush1.msra.mxu0 0.0
    %3815 = vmatprep.mubr.f32.mxu0 0.0
    %v3816 = vand.u32 %v3335, 4294901760
    %3817 = vmatmul.mubr.f32.gmra.mrb[0].mxu0 %v3816
    %v3818 = vpop.f32.mrb[0].mxu0
    %v3819 = vadd.f32 %v3744, %v3818
    %v3820 = vpop.f32.mrb[0].mxu0
    %3821 = vdwg.mxu0
    %v3822 = vadd.f32 %v213, %v3819
    %v3823 = vxor.u32 %v3822, 2147483648
    %v3824 = vmul.f32 %v3823, 1.442695
    %v3825 = vpow.pop %v3824
    %v3826 = vadd.f32 %v3825, 1.0
    %v3827 = vrcp.pop %v3826
    %v3828 = vmul.f32 1.0, %v3827
    %v3829 = vtanh.pop %v3822
    %v3830 = vmul.f32 %v3828, %v3323
    %3832 = vrot.lane.b32.xlu0 %v3829, 64
    %v3833 = vpop.permute.xlu0 %3832
    %v3835 = vmul.f32 %v3828, %v3833
    %3837 = vrot.lane.b32.xlu0 %v3835, 32
    %v3838 = vpop.permute.xlu0 %3837
    %v3840 = vadd.f32 %v3830, %v3838
    %v3841 = vtanh.pop %v3840
    %3843 = vrot.lane.b32.xlu0 %v3841, 64
    %v3844 = vpop.permute.xlu0 %3843
    %v3846 = vmul.f32 %v3828, %v3844
    %3848 = vrot.lane.b32.xlu0 %v3846, 32
    %v3849 = vpop.permute.xlu0 %3848
    %3851 = vst.msk [vmem:[#allocation2 + $0x6] sm:$0x1] %vm748, %v3849
    %v3852 = vsel %vm230, %v3849, 0
    %3854 = vmatprep.subr.mxu0 0.0
    %v3855 = vand.u32 %v98, 4294901760
    %3856 = vmatpush1.msra.mxu0 %v3855
    %3857 = vmatprep.subr.mxu0 0.0
    %v3858 = vand.u32 %v99, 4294901760
    %3859 = vmatpush1.msra.mxu0 %v3858
    %3860 = vmatprep.subr.mxu0 0.0
    %v3861 = vand.u32 %v100, 4294901760
    %3862 = vmatpush1.msra.mxu0 %v3861
    %3863 = vmatprep.subr.mxu0 0.0
    %v3864 = vand.u32 %v101, 4294901760
    %3865 = vmatpush1.msra.mxu0 %v3864
    %3866 = vmatprep.subr.mxu0 0.0
    %3867 = vmatpush1.msra.mxu0 0.0
    %3868 = vmatprep.subr.mxu0 0.0
    %3869 = vmatpush1.msra.mxu0 0.0
    %3870 = vmatprep.subr.mxu0 0.0
    %3871 = vmatpush1.msra.mxu0 0.0
    %3872 = vmatprep.subr.mxu0 0.0
    %3873 = vmatpush1.msra.mxu0 0.0
    %3874 = vmatprep.subr.mxu0 0.0
    %3875 = vmatpush1.msra.mxu0 0.0
    %3876 = vmatprep.subr.mxu0 0.0
    %3877 = vmatpush1.msra.mxu0 0.0
    %3878 = vmatprep.subr.mxu0 0.0
    %3879 = vmatpush1.msra.mxu0 0.0
    %3880 = vmatprep.subr.mxu0 0.0
    %3881 = vmatpush1.msra.mxu0 0.0
    %3882 = vmatprep.subr.mxu0 0.0
    %3883 = vmatpush1.msra.mxu0 0.0
    %3884 = vmatprep.subr.mxu0 0.0
    %3885 = vmatpush1.msra.mxu0 0.0
    %3886 = vmatprep.subr.mxu0 0.0
    %3887 = vmatpush1.msra.mxu0 0.0
    %3888 = vmatprep.subr.mxu0 0.0
    %3889 = vmatpush1.msra.mxu0 0.0
    %3890 = vmatprep.subr.mxu0 0.0
    %3891 = vmatpush1.msra.mxu0 0.0
    %3892 = vmatprep.subr.mxu0 0.0
    %3893 = vmatpush1.msra.mxu0 0.0
    %3894 = vmatprep.subr.mxu0 0.0
    %3895 = vmatpush1.msra.mxu0 0.0
    %3896 = vmatprep.subr.mxu0 0.0
    %3897 = vmatpush1.msra.mxu0 0.0
    %3898 = vmatprep.subr.mxu0 0.0
    %3899 = vmatpush1.msra.mxu0 0.0
    %3900 = vmatprep.subr.mxu0 0.0
    %3901 = vmatpush1.msra.mxu0 0.0
    %3902 = vmatprep.subr.mxu0 0.0
    %3903 = vmatpush1.msra.mxu0 0.0
    %3904 = vmatprep.subr.mxu0 0.0
    %3905 = vmatpush1.msra.mxu0 0.0
    %3906 = vmatprep.subr.mxu0 0.0
    %3907 = vmatpush1.msra.mxu0 0.0
    %3908 = vmatprep.subr.mxu0 0.0
    %3909 = vmatpush1.msra.mxu0 0.0
    %3910 = vmatprep.subr.mxu0 0.0
    %3911 = vmatpush1.msra.mxu0 0.0
    %3912 = vmatprep.subr.mxu0 0.0
    %3913 = vmatpush1.msra.mxu0 0.0
    %3914 = vmatprep.subr.mxu0 0.0
    %3915 = vmatpush1.msra.mxu0 0.0
    %3916 = vmatprep.subr.mxu0 0.0
    %3917 = vmatpush1.msra.mxu0 0.0
    %3918 = vmatprep.subr.mxu0 0.0
    %3919 = vmatpush1.msra.mxu0 0.0
    %3920 = vmatprep.subr.mxu0 0.0
    %3921 = vmatpush1.msra.mxu0 0.0
    %3922 = vmatprep.mubr.f32.mxu0 0.0
    %v3923 = vand.u32 %v3852, 4294901760
    %v3924 = vsub.f32 %v3852, %v3923
    %v3925 = vand.u32 %v3924, 4294901760
    %v3926 = vsub.f32 %v3924, %v3925
    %v3927 = vand.u32 %v3926, 4294901760
    %3928 = vmatmul.mubr.f32.gmra.mrb[0].mxu0 %v3927
    %v3929 = vpop.f32.mrb[0].mxu0
    %v3930 = vadd.f32 0.0, %v3929
    %v3931 = vpop.f32.mrb[0].mxu0
    %3932 = vdwg.mxu0
    %3933 = vmatprep.subr.mxu0 0.0
    %v3934 = vand.u32 %v98, 4294901760
    %v3935 = vsub.f32 %v98, %v3934
    %v3936 = vand.u32 %v3935, 4294901760
    %v3937 = vsub.f32 %v3935, %v3936
    %v3938 = vand.u32 %v3937, 4294901760
    %3939 = vmatpush1.msra.mxu0 %v3938
    %3940 = vmatprep.subr.mxu0 0.0
    %v3941 = vand.u32 %v99, 4294901760
    %v3942 = vsub.f32 %v99, %v3941
    %v3943 = vand.u32 %v3942, 4294901760
    %v3944 = vsub.f32 %v3942, %v3943
    %v3945 = vand.u32 %v3944, 4294901760
    %3946 = vmatpush1.msra.mxu0 %v3945
    %3947 = vmatprep.subr.mxu0 0.0
    %v3948 = vand.u32 %v100, 4294901760
    %v3949 = vsub.f32 %v100, %v3948
    %v3950 = vand.u32 %v3949, 4294901760
    %v3951 = vsub.f32 %v3949, %v3950
    %v3952 = vand.u32 %v3951, 4294901760
    %3953 = vmatpush1.msra.mxu0 %v3952
    %3954 = vmatprep.subr.mxu0 0.0
    %v3955 = vand.u32 %v101, 4294901760
    %v3956 = vsub.f32 %v101, %v3955
    %v3957 = vand.u32 %v3956, 4294901760
    %v3958 = vsub.f32 %v3956, %v3957
    %v3959 = vand.u32 %v3958, 4294901760
    %3960 = vmatpush1.msra.mxu0 %v3959
    %3961 = vmatprep.subr.mxu0 0.0
    %3962 = vmatpush1.msra.mxu0 0.0
    %3963 = vmatprep.subr.mxu0 0.0
    %3964 = vmatpush1.msra.mxu0 0.0
    %3965 = vmatprep.subr.mxu0 0.0
    %3966 = vmatpush1.msra.mxu0 0.0
    %3967 = vmatprep.subr.mxu0 0.0
    %3968 = vmatpush1.msra.mxu0 0.0
    %3969 = vmatprep.subr.mxu0 0.0
    %3970 = vmatpush1.msra.mxu0 0.0
    %3971 = vmatprep.subr.mxu0 0.0
    %3972 = vmatpush1.msra.mxu0 0.0
    %3973 = vmatprep.subr.mxu0 0.0
    %3974 = vmatpush1.msra.mxu0 0.0
    %3975 = vmatprep.subr.mxu0 0.0
    %3976 = vmatpush1.msra.mxu0 0.0
    %3977 = vmatprep.subr.mxu0 0.0
    %3978 = vmatpush1.msra.mxu0 0.0
    %3979 = vmatprep.subr.mxu0 0.0
    %3980 = vmatpush1.msra.mxu0 0.0
    %3981 = vmatprep.subr.mxu0 0.0
    %3982 = vmatpush1.msra.mxu0 0.0
    %3983 = vmatprep.subr.mxu0 0.0
    %3984 = vmatpush1.msra.mxu0 0.0
    %3985 = vmatprep.subr.mxu0 0.0
    %3986 = vmatpush1.msra.mxu0 0.0
    %3987 = vmatprep.subr.mxu0 0.0
    %3988 = vmatpush1.msra.mxu0 0.0
    %3989 = vmatprep.subr.mxu0 0.0
    %3990 = vmatpush1.msra.mxu0 0.0
    %3991 = vmatprep.subr.mxu0 0.0
    %3992 = vmatpush1.msra.mxu0 0.0
    %3993 = vmatprep.subr.mxu0 0.0
    %3994 = vmatpush1.msra.mxu0 0.0
    %3995 = vmatprep.subr.mxu0 0.0
    %3996 = vmatpush1.msra.mxu0 0.0
    %3997 = vmatprep.subr.mxu0 0.0
    %3998 = vmatpush1.msra.mxu0 0.0
    %3999 = vmatprep.subr.mxu0 0.0
    %4000 = vmatpush1.msra.mxu0 0.0
    %4001 = vmatprep.subr.mxu0 0.0
    %4002 = vmatpush1.msra.mxu0 0.0
    %4003 = vmatprep.subr.mxu0 0.0
    %4004 = vmatpush1.msra.mxu0 0.0
    %4005 = vmatprep.subr.mxu0 0.0
    %4006 = vmatpush1.msra.mxu0 0.0
    %4007 = vmatprep.subr.mxu0 0.0
    %4008 = vmatpush1.msra.mxu0 0.0
    %4009 = vmatprep.subr.mxu0 0.0
    %4010 = vmatpush1.msra.mxu0 0.0
    %4011 = vmatprep.subr.mxu0 0.0
    %4012 = vmatpush1.msra.mxu0 0.0
    %4013 = vmatprep.subr.mxu0 0.0
    %4014 = vmatpush1.msra.mxu0 0.0
    %4015 = vmatprep.subr.mxu0 0.0
    %4016 = vmatpush1.msra.mxu0 0.0
    %4017 = vmatprep.mubr.f32.mxu0 0.0
    %v4018 = vand.u32 %v3852, 4294901760
    %4019 = vmatmul.mubr.f32.gmra.mrb[0].mxu0 %v4018
    %v4020 = vpop.f32.mrb[0].mxu0
    %v4021 = vadd.f32 %v3930, %v4020
    %v4022 = vpop.f32.mrb[0].mxu0
    %4023 = vdwg.mxu0
    %4024 = vmatprep.subr.mxu0 0.0
    %v4025 = vand.u32 %v98, 4294901760
    %v4026 = vsub.f32 %v98, %v4025
    %4027 = vmatpush1.msra.mxu0 %v4026
    %4028 = vmatprep.subr.mxu0 0.0
    %v4029 = vand.u32 %v99, 4294901760
    %v4030 = vsub.f32 %v99, %v4029
    %4031 = vmatpush1.msra.mxu0 %v4030
    %4032 = vmatprep.subr.mxu0 0.0
    %v4033 = vand.u32 %v100, 4294901760
    %v4034 = vsub.f32 %v100, %v4033
    %4035 = vmatpush1.msra.mxu0 %v4034
    %4036 = vmatprep.subr.mxu0 0.0
    %v4037 = vand.u32 %v101, 4294901760
    %v4038 = vsub.f32 %v101, %v4037
    %4039 = vmatpush1.msra.mxu0 %v4038
    %4040 = vmatprep.subr.mxu0 0.0
    %4041 = vmatpush1.msra.mxu0 0.0
    %4042 = vmatprep.subr.mxu0 0.0
    %4043 = vmatpush1.msra.mxu0 0.0
    %4044 = vmatprep.subr.mxu0 0.0
    %4045 = vmatpush1.msra.mxu0 0.0
    %4046 = vmatprep.subr.mxu0 0.0
    %4047 = vmatpush1.msra.mxu0 0.0
    %4048 = vmatprep.subr.mxu0 0.0
    %4049 = vmatpush1.msra.mxu0 0.0
    %4050 = vmatprep.subr.mxu0 0.0
    %4051 = vmatpush1.msra.mxu0 0.0
    %4052 = vmatprep.subr.mxu0 0.0
    %4053 = vmatpush1.msra.mxu0 0.0
    %4054 = vmatprep.subr.mxu0 0.0
    %4055 = vmatpush1.msra.mxu0 0.0
    %4056 = vmatprep.subr.mxu0 0.0
    %4057 = vmatpush1.msra.mxu0 0.0
    %4058 = vmatprep.subr.mxu0 0.0
    %4059 = vmatpush1.msra.mxu0 0.0
    %4060 = vmatprep.subr.mxu0 0.0
    %4061 = vmatpush1.msra.mxu0 0.0
    %4062 = vmatprep.subr.mxu0 0.0
    %4063 = vmatpush1.msra.mxu0 0.0
    %4064 = vmatprep.subr.mxu0 0.0
    %4065 = vmatpush1.msra.mxu0 0.0
    %4066 = vmatprep.subr.mxu0 0.0
    %4067 = vmatpush1.msra.mxu0 0.0
    %4068 = vmatprep.subr.mxu0 0.0
    %4069 = vmatpush1.msra.mxu0 0.0
    %4070 = vmatprep.subr.mxu0 0.0
    %4071 = vmatpush1.msra.mxu0 0.0
    %4072 = vmatprep.subr.mxu0 0.0
    %4073 = vmatpush1.msra.mxu0 0.0
    %4074 = vmatprep.subr.mxu0 0.0
    %4075 = vmatpush1.msra.mxu0 0.0
    %4076 = vmatprep.subr.mxu0 0.0
    %4077 = vmatpush1.msra.mxu0 0.0
    %4078 = vmatprep.subr.mxu0 0.0
    %4079 = vmatpush1.msra.mxu0 0.0
    %4080 = vmatprep.subr.mxu0 0.0
    %4081 = vmatpush1.msra.mxu0 0.0
    %4082 = vmatprep.subr.mxu0 0.0
    %4083 = vmatpush1.msra.mxu0 0.0
    %4084 = vmatprep.subr.mxu0 0.0
    %4085 = vmatpush1.msra.mxu0 0.0
    %4086 = vmatprep.subr.mxu0 0.0
    %4087 = vmatpush1.msra.mxu0 0.0
    %4088 = vmatprep.subr.mxu0 0.0
    %4089 = vmatpush1.msra.mxu0 0.0
    %4090 = vmatprep.subr.mxu0 0.0
    %4091 = vmatpush1.msra.mxu0 0.0
    %4092 = vmatprep.subr.mxu0 0.0
    %4093 = vmatpush1.msra.mxu0 0.0
    %4094 = vmatprep.subr.mxu0 0.0
    %4095 = vmatpush1.msra.mxu0 0.0
    %4096 = vmatprep.mubr.f32.mxu0 0.0
    %v4097 = vand.u32 %v3852, 4294901760
    %v4098 = vsub.f32 %v3852, %v4097
    %4099 = vmatmul.mubr.f32.gmra.mrb[0].mxu0 %v4098
    %v4100 = vpop.f32.mrb[0].mxu0
    %v4101 = vadd.f32 %v4021, %v4100
    %v4102 = vpop.f32.mrb[0].mxu0
    %4103 = vdwg.mxu0
    %4104 = vmatprep.subr.mxu0 0.0
    %v4105 = vand.u32 %v98, 4294901760
    %4106 = vmatpush1.msra.mxu0 %v4105
    %4107 = vmatprep.subr.mxu0 0.0
    %v4108 = vand.u32 %v99, 4294901760
    %4109 = vmatpush1.msra.mxu0 %v4108
    %4110 = vmatprep.subr.mxu0 0.0
    %v4111 = vand.u32 %v100, 4294901760
    %4112 = vmatpush1.msra.mxu0 %v4111
    %4113 = vmatprep.subr.mxu0 0.0
    %v4114 = vand.u32 %v101, 4294901760
    %4115 = vmatpush1.msra.mxu0 %v4114
    %4116 = vmatprep.subr.mxu0 0.0
    %4117 = vmatpush1.msra.mxu0 0.0
    %4118 = vmatprep.subr.mxu0 0.0
    %4119 = vmatpush1.msra.mxu0 0.0
    %4120 = vmatprep.subr.mxu0 0.0
    %4121 = vmatpush1.msra.mxu0 0.0
    %4122 = vmatprep.subr.mxu0 0.0
    %4123 = vmatpush1.msra.mxu0 0.0
    %4124 = vmatprep.subr.mxu0 0.0
    %4125 = vmatpush1.msra.mxu0 0.0
    %4126 = vmatprep.subr.mxu0 0.0
    %4127 = vmatpush1.msra.mxu0 0.0
    %4128 = vmatprep.subr.mxu0 0.0
    %4129 = vmatpush1.msra.mxu0 0.0
    %4130 = vmatprep.subr.mxu0 0.0
    %4131 = vmatpush1.msra.mxu0 0.0
    %4132 = vmatprep.subr.mxu0 0.0
    %4133 = vmatpush1.msra.mxu0 0.0
    %4134 = vmatprep.subr.mxu0 0.0
    %4135 = vmatpush1.msra.mxu0 0.0
    %4136 = vmatprep.subr.mxu0 0.0
    %4137 = vmatpush1.msra.mxu0 0.0
    %4138 = vmatprep.subr.mxu0 0.0
    %4139 = vmatpush1.msra.mxu0 0.0
    %4140 = vmatprep.subr.mxu0 0.0
    %4141 = vmatpush1.msra.mxu0 0.0
    %4142 = vmatprep.subr.mxu0 0.0
    %4143 = vmatpush1.msra.mxu0 0.0
    %4144 = vmatprep.subr.mxu0 0.0
    %4145 = vmatpush1.msra.mxu0 0.0
    %4146 = vmatprep.subr.mxu0 0.0
    %4147 = vmatpush1.msra.mxu0 0.0
    %4148 = vmatprep.subr.mxu0 0.0
    %4149 = vmatpush1.msra.mxu0 0.0
    %4150 = vmatprep.subr.mxu0 0.0
    %4151 = vmatpush1.msra.mxu0 0.0
    %4152 = vmatprep.subr.mxu0 0.0
    %4153 = vmatpush1.msra.mxu0 0.0
    %4154 = vmatprep.subr.mxu0 0.0
    %4155 = vmatpush1.msra.mxu0 0.0
    %4156 = vmatprep.subr.mxu0 0.0
    %4157 = vmatpush1.msra.mxu0 0.0
    %4158 = vmatprep.subr.mxu0 0.0
    %4159 = vmatpush1.msra.mxu0 0.0
    %4160 = vmatprep.subr.mxu0 0.0
    %4161 = vmatpush1.msra.mxu0 0.0
    %4162 = vmatprep.subr.mxu0 0.0
    %4163 = vmatpush1.msra.mxu0 0.0
    %4164 = vmatprep.subr.mxu0 0.0
    %4165 = vmatpush1.msra.mxu0 0.0
    %4166 = vmatprep.subr.mxu0 0.0
    %4167 = vmatpush1.msra.mxu0 0.0
    %4168 = vmatprep.subr.mxu0 0.0
    %4169 = vmatpush1.msra.mxu0 0.0
    %4170 = vmatprep.subr.mxu0 0.0
    %4171 = vmatpush1.msra.mxu0 0.0
    %4172 = vmatprep.mubr.f32.mxu0 0.0
    %v4173 = vand.u32 %v3852, 4294901760
    %v4174 = vsub.f32 %v3852, %v4173
    %v4175 = vand.u32 %v4174, 4294901760
    %4176 = vmatmul.mubr.f32.gmra.mrb[0].mxu0 %v4175
    %v4177 = vpop.f32.mrb[0].mxu0
    %v4178 = vadd.f32 %v4101, %v4177
    %v4179 = vpop.f32.mrb[0].mxu0
    %4180 = vdwg.mxu0
    %4181 = vmatprep.subr.mxu0 0.0
    %v4182 = vand.u32 %v98, 4294901760
    %v4183 = vsub.f32 %v98, %v4182
    %v4184 = vand.u32 %v4183, 4294901760
    %4185 = vmatpush1.msra.mxu0 %v4184
    %4186 = vmatprep.subr.mxu0 0.0
    %v4187 = vand.u32 %v99, 4294901760
    %v4188 = vsub.f32 %v99, %v4187
    %v4189 = vand.u32 %v4188, 4294901760
    %4190 = vmatpush1.msra.mxu0 %v4189
    %4191 = vmatprep.subr.mxu0 0.0
    %v4192 = vand.u32 %v100, 4294901760
    %v4193 = vsub.f32 %v100, %v4192
    %v4194 = vand.u32 %v4193, 4294901760
    %4195 = vmatpush1.msra.mxu0 %v4194
    %4196 = vmatprep.subr.mxu0 0.0
    %v4197 = vand.u32 %v101, 4294901760
    %v4198 = vsub.f32 %v101, %v4197
    %v4199 = vand.u32 %v4198, 4294901760
    %4200 = vmatpush1.msra.mxu0 %v4199
    %4201 = vmatprep.subr.mxu0 0.0
    %4202 = vmatpush1.msra.mxu0 0.0
    %4203 = vmatprep.subr.mxu0 0.0
    %4204 = vmatpush1.msra.mxu0 0.0
    %4205 = vmatprep.subr.mxu0 0.0
    %4206 = vmatpush1.msra.mxu0 0.0
    %4207 = vmatprep.subr.mxu0 0.0
    %4208 = vmatpush1.msra.mxu0 0.0
    %4209 = vmatprep.subr.mxu0 0.0
    %4210 = vmatpush1.msra.mxu0 0.0
    %4211 = vmatprep.subr.mxu0 0.0
    %4212 = vmatpush1.msra.mxu0 0.0
    %4213 = vmatprep.subr.mxu0 0.0
    %4214 = vmatpush1.msra.mxu0 0.0
    %4215 = vmatprep.subr.mxu0 0.0
    %4216 = vmatpush1.msra.mxu0 0.0
    %4217 = vmatprep.subr.mxu0 0.0
    %4218 = vmatpush1.msra.mxu0 0.0
    %4219 = vmatprep.subr.mxu0 0.0
    %4220 = vmatpush1.msra.mxu0 0.0
    %4221 = vmatprep.subr.mxu0 0.0
    %4222 = vmatpush1.msra.mxu0 0.0
    %4223 = vmatprep.subr.mxu0 0.0
    %4224 = vmatpush1.msra.mxu0 0.0
    %4225 = vmatprep.subr.mxu0 0.0
    %4226 = vmatpush1.msra.mxu0 0.0
    %4227 = vmatprep.subr.mxu0 0.0
    %4228 = vmatpush1.msra.mxu0 0.0
    %4229 = vmatprep.subr.mxu0 0.0
    %4230 = vmatpush1.msra.mxu0 0.0
    %4231 = vmatprep.subr.mxu0 0.0
    %4232 = vmatpush1.msra.mxu0 0.0
    %4233 = vmatprep.subr.mxu0 0.0
    %4234 = vmatpush1.msra.mxu0 0.0
    %4235 = vmatprep.subr.mxu0 0.0
    %4236 = vmatpush1.msra.mxu0 0.0
    %4237 = vmatprep.subr.mxu0 0.0
    %4238 = vmatpush1.msra.mxu0 0.0
    %4239 = vmatprep.subr.mxu0 0.0
    %4240 = vmatpush1.msra.mxu0 0.0
    %4241 = vmatprep.subr.mxu0 0.0
    %4242 = vmatpush1.msra.mxu0 0.0
    %4243 = vmatprep.subr.mxu0 0.0
    %4244 = vmatpush1.msra.mxu0 0.0
    %4245 = vmatprep.subr.mxu0 0.0
    %4246 = vmatpush1.msra.mxu0 0.0
    %4247 = vmatprep.subr.mxu0 0.0
    %4248 = vmatpush1.msra.mxu0 0.0
    %4249 = vmatprep.subr.mxu0 0.0
    %4250 = vmatpush1.msra.mxu0 0.0
    %4251 = vmatprep.subr.mxu0 0.0
    %4252 = vmatpush1.msra.mxu0 0.0
    %4253 = vmatprep.subr.mxu0 0.0
    %4254 = vmatpush1.msra.mxu0 0.0
    %4255 = vmatprep.subr.mxu0 0.0
    %4256 = vmatpush1.msra.mxu0 0.0
    %4257 = vmatprep.mubr.f32.mxu0 0.0
    %v4258 = vand.u32 %v3852, 4294901760
    %4259 = vmatmul.mubr.f32.gmra.mrb[0].mxu0 %v4258
    %v4260 = vpop.f32.mrb[0].mxu0
    %v4261 = vadd.f32 %v4178, %v4260
    %v4262 = vpop.f32.mrb[0].mxu0
    %4263 = vdwg.mxu0
    %4264 = vmatprep.subr.mxu0 0.0
    %v4265 = vand.u32 %v98, 4294901760
    %4266 = vmatpush1.msra.mxu0 %v4265
    %4267 = vmatprep.subr.mxu0 0.0
    %v4268 = vand.u32 %v99, 4294901760
    %4269 = vmatpush1.msra.mxu0 %v4268
    %4270 = vmatprep.subr.mxu0 0.0
    %v4271 = vand.u32 %v100, 4294901760
    %4272 = vmatpush1.msra.mxu0 %v4271
    %4273 = vmatprep.subr.mxu0 0.0
    %v4274 = vand.u32 %v101, 4294901760
    %4275 = vmatpush1.msra.mxu0 %v4274
    %4276 = vmatprep.subr.mxu0 0.0
    %4277 = vmatpush1.msra.mxu0 0.0
    %4278 = vmatprep.subr.mxu0 0.0
    %4279 = vmatpush1.msra.mxu0 0.0
    %4280 = vmatprep.subr.mxu0 0.0
    %4281 = vmatpush1.msra.mxu0 0.0
    %4282 = vmatprep.subr.mxu0 0.0
    %4283 = vmatpush1.msra.mxu0 0.0
    %4284 = vmatprep.subr.mxu0 0.0
    %4285 = vmatpush1.msra.mxu0 0.0
    %4286 = vmatprep.subr.mxu0 0.0
    %4287 = vmatpush1.msra.mxu0 0.0
    %4288 = vmatprep.subr.mxu0 0.0
    %4289 = vmatpush1.msra.mxu0 0.0
    %4290 = vmatprep.subr.mxu0 0.0
    %4291 = vmatpush1.msra.mxu0 0.0
    %4292 = vmatprep.subr.mxu0 0.0
    %4293 = vmatpush1.msra.mxu0 0.0
    %4294 = vmatprep.subr.mxu0 0.0
    %4295 = vmatpush1.msra.mxu0 0.0
    %4296 = vmatprep.subr.mxu0 0.0
    %4297 = vmatpush1.msra.mxu0 0.0
    %4298 = vmatprep.subr.mxu0 0.0
    %4299 = vmatpush1.msra.mxu0 0.0
    %4300 = vmatprep.subr.mxu0 0.0
    %4301 = vmatpush1.msra.mxu0 0.0
    %4302 = vmatprep.subr.mxu0 0.0
    %4303 = vmatpush1.msra.mxu0 0.0
    %4304 = vmatprep.subr.mxu0 0.0
    %4305 = vmatpush1.msra.mxu0 0.0
    %4306 = vmatprep.subr.mxu0 0.0
    %4307 = vmatpush1.msra.mxu0 0.0
    %4308 = vmatprep.subr.mxu0 0.0
    %4309 = vmatpush1.msra.mxu0 0.0
    %4310 = vmatprep.subr.mxu0 0.0
    %4311 = vmatpush1.msra.mxu0 0.0
    %4312 = vmatprep.subr.mxu0 0.0
    %4313 = vmatpush1.msra.mxu0 0.0
    %4314 = vmatprep.subr.mxu0 0.0
    %4315 = vmatpush1.msra.mxu0 0.0
    %4316 = vmatprep.subr.mxu0 0.0
    %4317 = vmatpush1.msra.mxu0 0.0
    %4318 = vmatprep.subr.mxu0 0.0
    %4319 = vmatpush1.msra.mxu0 0.0
    %4320 = vmatprep.subr.mxu0 0.0
    %4321 = vmatpush1.msra.mxu0 0.0
    %4322 = vmatprep.subr.mxu0 0.0
    %4323 = vmatpush1.msra.mxu0 0.0
    %4324 = vmatprep.subr.mxu0 0.0
    %4325 = vmatpush1.msra.mxu0 0.0
    %4326 = vmatprep.subr.mxu0 0.0
    %4327 = vmatpush1.msra.mxu0 0.0
    %4328 = vmatprep.subr.mxu0 0.0
    %4329 = vmatpush1.msra.mxu0 0.0
    %4330 = vmatprep.subr.mxu0 0.0
    %4331 = vmatpush1.msra.mxu0 0.0
    %4332 = vmatprep.mubr.f32.mxu0 0.0
    %v4333 = vand.u32 %v3852, 4294901760
    %4334 = vmatmul.mubr.f32.gmra.mrb[0].mxu0 %v4333
    %v4335 = vpop.f32.mrb[0].mxu0
    %v4336 = vadd.f32 %v4261, %v4335
    %v4337 = vpop.f32.mrb[0].mxu0
    %4338 = vdwg.mxu0
    %v4339 = vadd.f32 %v229, %v4336
    %v4340 = vxor.u32 %v4339, 2147483648
    %v4341 = vmul.f32 %v4340, 1.442695
    %v4342 = vpow.pop %v4341
    %v4343 = vadd.f32 %v4342, 1.0
    %v4344 = vrcp.pop %v4343
    %v4345 = vmul.f32 1.0, %v4344
    %v4346 = vtanh.pop %v4339
    %v4347 = vmul.f32 %v4345, %v3840
    %4349 = vrot.lane.b32.xlu0 %v4346, 64
    %v4350 = vpop.permute.xlu0 %4349
    %v4352 = vmul.f32 %v4345, %v4350
    %4354 = vrot.lane.b32.xlu0 %v4352, 32
    %v4355 = vpop.permute.xlu0 %4354
    %v4357 = vadd.f32 %v4347, %v4355
    %v4358 = vtanh.pop %v4357
    %4360 = vrot.lane.b32.xlu0 %v4358, 64
    %v4361 = vpop.permute.xlu0 %4360
    %v4363 = vmul.f32 %v4345, %v4361
    %4365 = vrot.lane.b32.xlu0 %v4363, 32
    %v4366 = vpop.permute.xlu0 %4365
    %4368 = vst.msk [vmem:[#allocation2 + $0x7] sm:$0x1] %vm748, %v4366
    %v4369 = vld [vmem:[#allocation2] sm:$0xff]
    %v4370 = vld [vmem:[%s8] sm:$0xff]
    %v4371 = vld [vmem:[%s8 + $0x8] sm:$0xff]
    %v4372 = vld [vmem:[%s8 + $0x10] sm:$0xff]
    %v4373 = vld [vmem:[%s8 + $0x18] sm:$0xff]
    %v4374 = vld [vmem:[%s9] sm:$0x1]
    %v4376 = vlaneseq
    %v4377 = vshrl.u32 %v4376, 7
    %v4378 = vsub.s32 0, %v4377
    %v4379 = vrot.slane %v4374, %v4378
    %v4382 = vsel %vm230, %v4369, 0
    %4384 = vmatprep.subr.mxu0 0.0
    %v4385 = vand.u32 %v4370, 4294901760
    %4386 = vmatpush1.msra.mxu0 %v4385
    %4387 = vmatprep.subr.mxu0 0.0
    %v4388 = vand.u32 %v4371, 4294901760
    %4389 = vmatpush1.msra.mxu0 %v4388
    %4390 = vmatprep.subr.mxu0 0.0
    %v4391 = vand.u32 %v4372, 4294901760
    %4392 = vmatpush1.msra.mxu0 %v4391
    %4393 = vmatprep.subr.mxu0 0.0
    %v4394 = vand.u32 %v4373, 4294901760
    %4395 = vmatpush1.msra.mxu0 %v4394
    %4396 = vmatprep.subr.mxu0 0.0
    %4397 = vmatpush1.msra.mxu0 0.0
    %4398 = vmatprep.subr.mxu0 0.0
    %4399 = vmatpush1.msra.mxu0 0.0
    %4400 = vmatprep.subr.mxu0 0.0
    %4401 = vmatpush1.msra.mxu0 0.0
    %4402 = vmatprep.subr.mxu0 0.0
    %4403 = vmatpush1.msra.mxu0 0.0
    %4404 = vmatprep.subr.mxu0 0.0
    %4405 = vmatpush1.msra.mxu0 0.0
    %4406 = vmatprep.subr.mxu0 0.0
    %4407 = vmatpush1.msra.mxu0 0.0
    %4408 = vmatprep.subr.mxu0 0.0
    %4409 = vmatpush1.msra.mxu0 0.0
    %4410 = vmatprep.subr.mxu0 0.0
    %4411 = vmatpush1.msra.mxu0 0.0
    %4412 = vmatprep.subr.mxu0 0.0
    %4413 = vmatpush1.msra.mxu0 0.0
    %4414 = vmatprep.subr.mxu0 0.0
    %4415 = vmatpush1.msra.mxu0 0.0
    %4416 = vmatprep.subr.mxu0 0.0
    %4417 = vmatpush1.msra.mxu0 0.0
    %4418 = vmatprep.subr.mxu0 0.0
    %4419 = vmatpush1.msra.mxu0 0.0
    %4420 = vmatprep.subr.mxu0 0.0
    %4421 = vmatpush1.msra.mxu0 0.0
    %4422 = vmatprep.subr.mxu0 0.0
    %4423 = vmatpush1.msra.mxu0 0.0
    %4424 = vmatprep.subr.mxu0 0.0
    %4425 = vmatpush1.msra.mxu0 0.0
    %4426 = vmatprep.subr.mxu0 0.0
    %4427 = vmatpush1.msra.mxu0 0.0
    %4428 = vmatprep.subr.mxu0 0.0
    %4429 = vmatpush1.msra.mxu0 0.0
    %4430 = vmatprep.subr.mxu0 0.0
    %4431 = vmatpush1.msra.mxu0 0.0
    %4432 = vmatprep.subr.mxu0 0.0
    %4433 = vmatpush1.msra.mxu0 0.0
    %4434 = vmatprep.subr.mxu0 0.0
    %4435 = vmatpush1.msra.mxu0 0.0
    %4436 = vmatprep.subr.mxu0 0.0
    %4437 = vmatpush1.msra.mxu0 0.0
    %4438 = vmatprep.subr.mxu0 0.0
    %4439 = vmatpush1.msra.mxu0 0.0
    %4440 = vmatprep.subr.mxu0 0.0
    %4441 = vmatpush1.msra.mxu0 0.0
    %4442 = vmatprep.subr.mxu0 0.0
    %4443 = vmatpush1.msra.mxu0 0.0
    %4444 = vmatprep.subr.mxu0 0.0
    %4445 = vmatpush1.msra.mxu0 0.0
    %4446 = vmatprep.subr.mxu0 0.0
    %4447 = vmatpush1.msra.mxu0 0.0
    %4448 = vmatprep.subr.mxu0 0.0
    %4449 = vmatpush1.msra.mxu0 0.0
    %4450 = vmatprep.subr.mxu0 0.0
    %4451 = vmatpush1.msra.mxu0 0.0
    %4452 = vmatprep.mubr.f32.mxu0 0.0
    %v4453 = vand.u32 %v4382, 4294901760
    %v4454 = vsub.f32 %v4382, %v4453
    %v4455 = vand.u32 %v4454, 4294901760
    %v4456 = vsub.f32 %v4454, %v4455
    %v4457 = vand.u32 %v4456, 4294901760
    %4458 = vmatmul.mubr.f32.gmra.mrb[0].mxu0 %v4457
    %v4459 = vpop.f32.mrb[0].mxu0
    %v4460 = vadd.f32 %v4379, %v4459
    %v4461 = vpop.f32.mrb[0].mxu0
    %4462 = vdwg.mxu0
    %4463 = vmatprep.subr.mxu0 0.0
    %v4464 = vand.u32 %v4370, 4294901760
    %v4465 = vsub.f32 %v4370, %v4464
    %v4466 = vand.u32 %v4465, 4294901760
    %v4467 = vsub.f32 %v4465, %v4466
    %v4468 = vand.u32 %v4467, 4294901760
    %4469 = vmatpush1.msra.mxu0 %v4468
    %4470 = vmatprep.subr.mxu0 0.0
    %v4471 = vand.u32 %v4371, 4294901760
    %v4472 = vsub.f32 %v4371, %v4471
    %v4473 = vand.u32 %v4472, 4294901760
    %v4474 = vsub.f32 %v4472, %v4473
    %v4475 = vand.u32 %v4474, 4294901760
    %4476 = vmatpush1.msra.mxu0 %v4475
    %4477 = vmatprep.subr.mxu0 0.0
    %v4478 = vand.u32 %v4372, 4294901760
    %v4479 = vsub.f32 %v4372, %v4478
    %v4480 = vand.u32 %v4479, 4294901760
    %v4481 = vsub.f32 %v4479, %v4480
    %v4482 = vand.u32 %v4481, 4294901760
    %4483 = vmatpush1.msra.mxu0 %v4482
    %4484 = vmatprep.subr.mxu0 0.0
    %v4485 = vand.u32 %v4373, 4294901760
    %v4486 = vsub.f32 %v4373, %v4485
    %v4487 = vand.u32 %v4486, 4294901760
    %v4488 = vsub.f32 %v4486, %v4487
    %v4489 = vand.u32 %v4488, 4294901760
    %4490 = vmatpush1.msra.mxu0 %v4489
    %4491 = vmatprep.subr.mxu0 0.0
    %4492 = vmatpush1.msra.mxu0 0.0
    %4493 = vmatprep.subr.mxu0 0.0
    %4494 = vmatpush1.msra.mxu0 0.0
    %4495 = vmatprep.subr.mxu0 0.0
    %4496 = vmatpush1.msra.mxu0 0.0
    %4497 = vmatprep.subr.mxu0 0.0
    %4498 = vmatpush1.msra.mxu0 0.0
    %4499 = vmatprep.subr.mxu0 0.0
    %4500 = vmatpush1.msra.mxu0 0.0
    %4501 = vmatprep.subr.mxu0 0.0
    %4502 = vmatpush1.msra.mxu0 0.0
    %4503 = vmatprep.subr.mxu0 0.0
    %4504 = vmatpush1.msra.mxu0 0.0
    %4505 = vmatprep.subr.mxu0 0.0
    %4506 = vmatpush1.msra.mxu0 0.0
    %4507 = vmatprep.subr.mxu0 0.0
    %4508 = vmatpush1.msra.mxu0 0.0
    %4509 = vmatprep.subr.mxu0 0.0
    %4510 = vmatpush1.msra.mxu0 0.0
    %4511 = vmatprep.subr.mxu0 0.0
    %4512 = vmatpush1.msra.mxu0 0.0
    %4513 = vmatprep.subr.mxu0 0.0
    %4514 = vmatpush1.msra.mxu0 0.0
    %4515 = vmatprep.subr.mxu0 0.0
    %4516 = vmatpush1.msra.mxu0 0.0
    %4517 = vmatprep.subr.mxu0 0.0
    %4518 = vmatpush1.msra.mxu0 0.0
    %4519 = vmatprep.subr.mxu0 0.0
    %4520 = vmatpush1.msra.mxu0 0.0
    %4521 = vmatprep.subr.mxu0 0.0
    %4522 = vmatpush1.msra.mxu0 0.0
    %4523 = vmatprep.subr.mxu0 0.0
    %4524 = vmatpush1.msra.mxu0 0.0
    %4525 = vmatprep.subr.mxu0 0.0
    %4526 = vmatpush1.msra.mxu0 0.0
    %4527 = vmatprep.subr.mxu0 0.0
    %4528 = vmatpush1.msra.mxu0 0.0
    %4529 = vmatprep.subr.mxu0 0.0
    %4530 = vmatpush1.msra.mxu0 0.0
    %4531 = vmatprep.subr.mxu0 0.0
    %4532 = vmatpush1.msra.mxu0 0.0
    %4533 = vmatprep.subr.mxu0 0.0
    %4534 = vmatpush1.msra.mxu0 0.0
    %4535 = vmatprep.subr.mxu0 0.0
    %4536 = vmatpush1.msra.mxu0 0.0
    %4537 = vmatprep.subr.mxu0 0.0
    %4538 = vmatpush1.msra.mxu0 0.0
    %4539 = vmatprep.subr.mxu0 0.0
    %4540 = vmatpush1.msra.mxu0 0.0
    %4541 = vmatprep.subr.mxu0 0.0
    %4542 = vmatpush1.msra.mxu0 0.0
    %4543 = vmatprep.subr.mxu0 0.0
    %4544 = vmatpush1.msra.mxu0 0.0
    %4545 = vmatprep.subr.mxu0 0.0
    %4546 = vmatpush1.msra.mxu0 0.0
    %4547 = vmatprep.mubr.f32.mxu0 0.0
    %v4548 = vand.u32 %v4382, 4294901760
    %4549 = vmatmul.mubr.f32.gmra.mrb[0].mxu0 %v4548
    %v4550 = vpop.f32.mrb[0].mxu0
    %v4551 = vadd.f32 %v4460, %v4550
    %v4552 = vpop.f32.mrb[0].mxu0
    %4553 = vdwg.mxu0
    %4554 = vmatprep.subr.mxu0 0.0
    %v4555 = vand.u32 %v4370, 4294901760
    %v4556 = vsub.f32 %v4370, %v4555
    %4557 = vmatpush1.msra.mxu0 %v4556
    %4558 = vmatprep.subr.mxu0 0.0
    %v4559 = vand.u32 %v4371, 4294901760
    %v4560 = vsub.f32 %v4371, %v4559
    %4561 = vmatpush1.msra.mxu0 %v4560
    %4562 = vmatprep.subr.mxu0 0.0
    %v4563 = vand.u32 %v4372, 4294901760
    %v4564 = vsub.f32 %v4372, %v4563
    %4565 = vmatpush1.msra.mxu0 %v4564
    %4566 = vmatprep.subr.mxu0 0.0
    %v4567 = vand.u32 %v4373, 4294901760
    %v4568 = vsub.f32 %v4373, %v4567
    %4569 = vmatpush1.msra.mxu0 %v4568
    %4570 = vmatprep.subr.mxu0 0.0
    %4571 = vmatpush1.msra.mxu0 0.0
    %4572 = vmatprep.subr.mxu0 0.0
    %4573 = vmatpush1.msra.mxu0 0.0
    %4574 = vmatprep.subr.mxu0 0.0
    %4575 = vmatpush1.msra.mxu0 0.0
    %4576 = vmatprep.subr.mxu0 0.0
    %4577 = vmatpush1.msra.mxu0 0.0
    %4578 = vmatprep.subr.mxu0 0.0
    %4579 = vmatpush1.msra.mxu0 0.0
    %4580 = vmatprep.subr.mxu0 0.0
    %4581 = vmatpush1.msra.mxu0 0.0
    %4582 = vmatprep.subr.mxu0 0.0
    %4583 = vmatpush1.msra.mxu0 0.0
    %4584 = vmatprep.subr.mxu0 0.0
    %4585 = vmatpush1.msra.mxu0 0.0
    %4586 = vmatprep.subr.mxu0 0.0
    %4587 = vmatpush1.msra.mxu0 0.0
    %4588 = vmatprep.subr.mxu0 0.0
    %4589 = vmatpush1.msra.mxu0 0.0
    %4590 = vmatprep.subr.mxu0 0.0
    %4591 = vmatpush1.msra.mxu0 0.0
    %4592 = vmatprep.subr.mxu0 0.0
    %4593 = vmatpush1.msra.mxu0 0.0
    %4594 = vmatprep.subr.mxu0 0.0
    %4595 = vmatpush1.msra.mxu0 0.0
    %4596 = vmatprep.subr.mxu0 0.0
    %4597 = vmatpush1.msra.mxu0 0.0
    %4598 = vmatprep.subr.mxu0 0.0
    %4599 = vmatpush1.msra.mxu0 0.0
    %4600 = vmatprep.subr.mxu0 0.0
    %4601 = vmatpush1.msra.mxu0 0.0
    %4602 = vmatprep.subr.mxu0 0.0
    %4603 = vmatpush1.msra.mxu0 0.0
    %4604 = vmatprep.subr.mxu0 0.0
    %4605 = vmatpush1.msra.mxu0 0.0
    %4606 = vmatprep.subr.mxu0 0.0
    %4607 = vmatpush1.msra.mxu0 0.0
    %4608 = vmatprep.subr.mxu0 0.0
    %4609 = vmatpush1.msra.mxu0 0.0
    %4610 = vmatprep.subr.mxu0 0.0
    %4611 = vmatpush1.msra.mxu0 0.0
    %4612 = vmatprep.subr.mxu0 0.0
    %4613 = vmatpush1.msra.mxu0 0.0
    %4614 = vmatprep.subr.mxu0 0.0
    %4615 = vmatpush1.msra.mxu0 0.0
    %4616 = vmatprep.subr.mxu0 0.0
    %4617 = vmatpush1.msra.mxu0 0.0
    %4618 = vmatprep.subr.mxu0 0.0
    %4619 = vmatpush1.msra.mxu0 0.0
    %4620 = vmatprep.subr.mxu0 0.0
    %4621 = vmatpush1.msra.mxu0 0.0
    %4622 = vmatprep.subr.mxu0 0.0
    %4623 = vmatpush1.msra.mxu0 0.0
    %4624 = vmatprep.subr.mxu0 0.0
    %4625 = vmatpush1.msra.mxu0 0.0
    %4626 = vmatprep.mubr.f32.mxu0 0.0
    %v4627 = vand.u32 %v4382, 4294901760
    %v4628 = vsub.f32 %v4382, %v4627
    %4629 = vmatmul.mubr.f32.gmra.mrb[0].mxu0 %v4628
    %v4630 = vpop.f32.mrb[0].mxu0
    %v4631 = vadd.f32 %v4551, %v4630
    %v4632 = vpop.f32.mrb[0].mxu0
    %4633 = vdwg.mxu0
    %4634 = vmatprep.subr.mxu0 0.0
    %v4635 = vand.u32 %v4370, 4294901760
    %4636 = vmatpush1.msra.mxu0 %v4635
    %4637 = vmatprep.subr.mxu0 0.0
    %v4638 = vand.u32 %v4371, 4294901760
    %4639 = vmatpush1.msra.mxu0 %v4638
    %4640 = vmatprep.subr.mxu0 0.0
    %v4641 = vand.u32 %v4372, 4294901760
    %4642 = vmatpush1.msra.mxu0 %v4641
    %4643 = vmatprep.subr.mxu0 0.0
    %v4644 = vand.u32 %v4373, 4294901760
    %4645 = vmatpush1.msra.mxu0 %v4644
    %4646 = vmatprep.subr.mxu0 0.0
    %4647 = vmatpush1.msra.mxu0 0.0
    %4648 = vmatprep.subr.mxu0 0.0
    %4649 = vmatpush1.msra.mxu0 0.0
    %4650 = vmatprep.subr.mxu0 0.0
    %4651 = vmatpush1.msra.mxu0 0.0
    %4652 = vmatprep.subr.mxu0 0.0
    %4653 = vmatpush1.msra.mxu0 0.0
    %4654 = vmatprep.subr.mxu0 0.0
    %4655 = vmatpush1.msra.mxu0 0.0
    %4656 = vmatprep.subr.mxu0 0.0
    %4657 = vmatpush1.msra.mxu0 0.0
    %4658 = vmatprep.subr.mxu0 0.0
    %4659 = vmatpush1.msra.mxu0 0.0
    %4660 = vmatprep.subr.mxu0 0.0
    %4661 = vmatpush1.msra.mxu0 0.0
    %4662 = vmatprep.subr.mxu0 0.0
    %4663 = vmatpush1.msra.mxu0 0.0
    %4664 = vmatprep.subr.mxu0 0.0
    %4665 = vmatpush1.msra.mxu0 0.0
    %4666 = vmatprep.subr.mxu0 0.0
    %4667 = vmatpush1.msra.mxu0 0.0
    %4668 = vmatprep.subr.mxu0 0.0
    %4669 = vmatpush1.msra.mxu0 0.0
    %4670 = vmatprep.subr.mxu0 0.0
    %4671 = vmatpush1.msra.mxu0 0.0
    %4672 = vmatprep.subr.mxu0 0.0
    %4673 = vmatpush1.msra.mxu0 0.0
    %4674 = vmatprep.subr.mxu0 0.0
    %4675 = vmatpush1.msra.mxu0 0.0
    %4676 = vmatprep.subr.mxu0 0.0
    %4677 = vmatpush1.msra.mxu0 0.0
    %4678 = vmatprep.subr.mxu0 0.0
    %4679 = vmatpush1.msra.mxu0 0.0
    %4680 = vmatprep.subr.mxu0 0.0
    %4681 = vmatpush1.msra.mxu0 0.0
    %4682 = vmatprep.subr.mxu0 0.0
    %4683 = vmatpush1.msra.mxu0 0.0
    %4684 = vmatprep.subr.mxu0 0.0
    %4685 = vmatpush1.msra.mxu0 0.0
    %4686 = vmatprep.subr.mxu0 0.0
    %4687 = vmatpush1.msra.mxu0 0.0
    %4688 = vmatprep.subr.mxu0 0.0
    %4689 = vmatpush1.msra.mxu0 0.0
    %4690 = vmatprep.subr.mxu0 0.0
    %4691 = vmatpush1.msra.mxu0 0.0
    %4692 = vmatprep.subr.mxu0 0.0
    %4693 = vmatpush1.msra.mxu0 0.0
    %4694 = vmatprep.subr.mxu0 0.0
    %4695 = vmatpush1.msra.mxu0 0.0
    %4696 = vmatprep.subr.mxu0 0.0
    %4697 = vmatpush1.msra.mxu0 0.0
    %4698 = vmatprep.subr.mxu0 0.0
    %4699 = vmatpush1.msra.mxu0 0.0
    %4700 = vmatprep.subr.mxu0 0.0
    %4701 = vmatpush1.msra.mxu0 0.0
    %4702 = vmatprep.mubr.f32.mxu0 0.0
    %v4703 = vand.u32 %v4382, 4294901760
    %v4704 = vsub.f32 %v4382, %v4703
    %v4705 = vand.u32 %v4704, 4294901760
    %4706 = vmatmul.mubr.f32.gmra.mrb[0].mxu0 %v4705
    %v4707 = vpop.f32.mrb[0].mxu0
    %v4708 = vadd.f32 %v4631, %v4707
    %v4709 = vpop.f32.mrb[0].mxu0
    %4710 = vdwg.mxu0
    %4711 = vmatprep.subr.mxu0 0.0
    %v4712 = vand.u32 %v4370, 4294901760
    %v4713 = vsub.f32 %v4370, %v4712
    %v4714 = vand.u32 %v4713, 4294901760
    %4715 = vmatpush1.msra.mxu0 %v4714
    %4716 = vmatprep.subr.mxu0 0.0
    %v4717 = vand.u32 %v4371, 4294901760
    %v4718 = vsub.f32 %v4371, %v4717
    %v4719 = vand.u32 %v4718, 4294901760
    %4720 = vmatpush1.msra.mxu0 %v4719
    %4721 = vmatprep.subr.mxu0 0.0
    %v4722 = vand.u32 %v4372, 4294901760
    %v4723 = vsub.f32 %v4372, %v4722
    %v4724 = vand.u32 %v4723, 4294901760
    %4725 = vmatpush1.msra.mxu0 %v4724
    %4726 = vmatprep.subr.mxu0 0.0
    %v4727 = vand.u32 %v4373, 4294901760
    %v4728 = vsub.f32 %v4373, %v4727
    %v4729 = vand.u32 %v4728, 4294901760
    %4730 = vmatpush1.msra.mxu0 %v4729
    %4731 = vmatprep.subr.mxu0 0.0
    %4732 = vmatpush1.msra.mxu0 0.0
    %4733 = vmatprep.subr.mxu0 0.0
    %4734 = vmatpush1.msra.mxu0 0.0
    %4735 = vmatprep.subr.mxu0 0.0
    %4736 = vmatpush1.msra.mxu0 0.0
    %4737 = vmatprep.subr.mxu0 0.0
    %4738 = vmatpush1.msra.mxu0 0.0
    %4739 = vmatprep.subr.mxu0 0.0
    %4740 = vmatpush1.msra.mxu0 0.0
    %4741 = vmatprep.subr.mxu0 0.0
    %4742 = vmatpush1.msra.mxu0 0.0
    %4743 = vmatprep.subr.mxu0 0.0
    %4744 = vmatpush1.msra.mxu0 0.0
    %4745 = vmatprep.subr.mxu0 0.0
    %4746 = vmatpush1.msra.mxu0 0.0
    %4747 = vmatprep.subr.mxu0 0.0
    %4748 = vmatpush1.msra.mxu0 0.0
    %4749 = vmatprep.subr.mxu0 0.0
    %4750 = vmatpush1.msra.mxu0 0.0
    %4751 = vmatprep.subr.mxu0 0.0
    %4752 = vmatpush1.msra.mxu0 0.0
    %4753 = vmatprep.subr.mxu0 0.0
    %4754 = vmatpush1.msra.mxu0 0.0
    %4755 = vmatprep.subr.mxu0 0.0
    %4756 = vmatpush1.msra.mxu0 0.0
    %4757 = vmatprep.subr.mxu0 0.0
    %4758 = vmatpush1.msra.mxu0 0.0
    %4759 = vmatprep.subr.mxu0 0.0
    %4760 = vmatpush1.msra.mxu0 0.0
    %4761 = vmatprep.subr.mxu0 0.0
    %4762 = vmatpush1.msra.mxu0 0.0
    %4763 = vmatprep.subr.mxu0 0.0
    %4764 = vmatpush1.msra.mxu0 0.0
    %4765 = vmatprep.subr.mxu0 0.0
    %4766 = vmatpush1.msra.mxu0 0.0
    %4767 = vmatprep.subr.mxu0 0.0
    %4768 = vmatpush1.msra.mxu0 0.0
    %4769 = vmatprep.subr.mxu0 0.0
    %4770 = vmatpush1.msra.mxu0 0.0
    %4771 = vmatprep.subr.mxu0 0.0
    %4772 = vmatpush1.msra.mxu0 0.0
    %4773 = vmatprep.subr.mxu0 0.0
    %4774 = vmatpush1.msra.mxu0 0.0
    %4775 = vmatprep.subr.mxu0 0.0
    %4776 = vmatpush1.msra.mxu0 0.0
    %4777 = vmatprep.subr.mxu0 0.0
    %4778 = vmatpush1.msra.mxu0 0.0
    %4779 = vmatprep.subr.mxu0 0.0
    %4780 = vmatpush1.msra.mxu0 0.0
    %4781 = vmatprep.subr.mxu0 0.0
    %4782 = vmatpush1.msra.mxu0 0.0
    %4783 = vmatprep.subr.mxu0 0.0
    %4784 = vmatpush1.msra.mxu0 0.0
    %4785 = vmatprep.subr.mxu0 0.0
    %4786 = vmatpush1.msra.mxu0 0.0
    %4787 = vmatprep.mubr.f32.mxu0 0.0
    %v4788 = vand.u32 %v4382, 4294901760
    %4789 = vmatmul.mubr.f32.gmra.mrb[0].mxu0 %v4788
    %v4790 = vpop.f32.mrb[0].mxu0
    %v4791 = vadd.f32 %v4708, %v4790
    %v4792 = vpop.f32.mrb[0].mxu0
    %4793 = vdwg.mxu0
    %4794 = vmatprep.subr.mxu0 0.0
    %v4795 = vand.u32 %v4370, 4294901760
    %4796 = vmatpush1.msra.mxu0 %v4795
    %4797 = vmatprep.subr.mxu0 0.0
    %v4798 = vand.u32 %v4371, 4294901760
    %4799 = vmatpush1.msra.mxu0 %v4798
    %4800 = vmatprep.subr.mxu0 0.0
    %v4801 = vand.u32 %v4372, 4294901760
    %4802 = vmatpush1.msra.mxu0 %v4801
    %4803 = vmatprep.subr.mxu0 0.0
    %v4804 = vand.u32 %v4373, 4294901760
    %4805 = vmatpush1.msra.mxu0 %v4804
    %4806 = vmatprep.subr.mxu0 0.0
    %4807 = vmatpush1.msra.mxu0 0.0
    %4808 = vmatprep.subr.mxu0 0.0
    %4809 = vmatpush1.msra.mxu0 0.0
    %4810 = vmatprep.subr.mxu0 0.0
    %4811 = vmatpush1.msra.mxu0 0.0
    %4812 = vmatprep.subr.mxu0 0.0
    %4813 = vmatpush1.msra.mxu0 0.0
    %4814 = vmatprep.subr.mxu0 0.0
    %4815 = vmatpush1.msra.mxu0 0.0
    %4816 = vmatprep.subr.mxu0 0.0
    %4817 = vmatpush1.msra.mxu0 0.0
    %4818 = vmatprep.subr.mxu0 0.0
    %4819 = vmatpush1.msra.mxu0 0.0
    %4820 = vmatprep.subr.mxu0 0.0
    %4821 = vmatpush1.msra.mxu0 0.0
    %4822 = vmatprep.subr.mxu0 0.0
    %4823 = vmatpush1.msra.mxu0 0.0
    %4824 = vmatprep.subr.mxu0 0.0
    %4825 = vmatpush1.msra.mxu0 0.0
    %4826 = vmatprep.subr.mxu0 0.0
    %4827 = vmatpush1.msra.mxu0 0.0
    %4828 = vmatprep.subr.mxu0 0.0
    %4829 = vmatpush1.msra.mxu0 0.0
    %4830 = vmatprep.subr.mxu0 0.0
    %4831 = vmatpush1.msra.mxu0 0.0
    %4832 = vmatprep.subr.mxu0 0.0
    %4833 = vmatpush1.msra.mxu0 0.0
    %4834 = vmatprep.subr.mxu0 0.0
    %4835 = vmatpush1.msra.mxu0 0.0
    %4836 = vmatprep.subr.mxu0 0.0
    %4837 = vmatpush1.msra.mxu0 0.0
    %4838 = vmatprep.subr.mxu0 0.0
    %4839 = vmatpush1.msra.mxu0 0.0
    %4840 = vmatprep.subr.mxu0 0.0
    %4841 = vmatpush1.msra.mxu0 0.0
    %4842 = vmatprep.subr.mxu0 0.0
    %4843 = vmatpush1.msra.mxu0 0.0
    %4844 = vmatprep.subr.mxu0 0.0
    %4845 = vmatpush1.msra.mxu0 0.0
    %4846 = vmatprep.subr.mxu0 0.0
    %4847 = vmatpush1.msra.mxu0 0.0
    %4848 = vmatprep.subr.mxu0 0.0
    %4849 = vmatpush1.msra.mxu0 0.0
    %4850 = vmatprep.subr.mxu0 0.0
    %4851 = vmatpush1.msra.mxu0 0.0
    %4852 = vmatprep.subr.mxu0 0.0
    %4853 = vmatpush1.msra.mxu0 0.0
    %4854 = vmatprep.subr.mxu0 0.0
    %4855 = vmatpush1.msra.mxu0 0.0
    %4856 = vmatprep.subr.mxu0 0.0
    %4857 = vmatpush1.msra.mxu0 0.0
    %4858 = vmatprep.subr.mxu0 0.0
    %4859 = vmatpush1.msra.mxu0 0.0
    %4860 = vmatprep.subr.mxu0 0.0
    %4861 = vmatpush1.msra.mxu0 0.0
    %4862 = vmatprep.mubr.f32.mxu0 0.0
    %v4863 = vand.u32 %v4382, 4294901760
    %4864 = vmatmul.mubr.f32.gmra.mrb[0].mxu0 %v4863
    %v4865 = vpop.f32.mrb[0].mxu0
    %v4866 = vadd.f32 %v4791, %v4865
    %v4867 = vpop.f32.mrb[0].mxu0
    %4868 = vdwg.mxu0
    %vm4869 = vcmask 64512
    %v4870 = vsel %vm4869, %v4866, -inf
    %4871 = vmax.xlane.f32.xlu0 %v4870
    %v4872 = vpop.xlane.xlu0 %4871
    %v4873 = vsub.f32 %v4866, %v4872
    %v4874 = vmul.f32 %v4873, 1.442695
    %v4875 = vpow.pop %v4874
    %v4876 = vsel %vm4869, %v4875, 0.0
    %4877 = vadd.xlane.f32.xlu0 %v4876
    %v4878 = vpop.xlane.xlu0 %4877
    %v4879 = vlog2.pop %v4878
    %v4880 = vmul.f32 %v4879, 0.6931472
    %v4881 = vadd.f32 %v4872, %v4880
    %v4882 = vsub.f32 %v4866, %v4881
    %4883 = vst.msk [vmem:[#allocation14] sm:$0xff] %vm4869, %v4882
    // Predicated region
    $region50: #{tpu_custom_call.1} parent=1 // pred_check
      _
    $region51: #{tpu_custom_call.1} parent=1 // pred_check_branch
      %4885 = sbr.rel (0) target = $region53
    $region52: #{tpu_custom_call.1} parent=1 // pred_region
      %s4887 = ssub.s32 128, 128
      %4888 = vsyncadd [#allocation8], %s4887
      %s4890 = sshll.u32 [#allocation14], 4
      %s4891 = int_to_ptr.vmem [resolvable:$true] %s4890
      %4893 = dma.vmem_to_hbm [thread:$0]  %s4891, 128, %s10, [#allocation8]
    $region53: #{tpu_custom_call.1} parent=1 // pred_fallthru
      _
    // Predicated region
    $region54: #{tpu_custom_call.1} parent=1 // pred_check
      _
    $region55: #{tpu_custom_call.1} parent=1 // pred_check_branch
      %4895 = sbr.rel (0) target = $region57
    $region56: #{tpu_custom_call.1} parent=1 // pred_region
      %4896 = dma.done [#allocation8], 128
    $region57: #{tpu_custom_call.1} parent=1 // pred_fallthru
      _
    %4897 = vsyncpa [#allocation7], 1
    %4898 = vsyncpa [#allocation10], 1
    %4899 = vsyncpa [#allocation13], 1
    %4900 = vsyncpa [#allocation8], 1

</llo_original>
